<compile_context>
chip_gen: v5e
topology: v5e:2x2
jax: 0.10.0
libtpu: 0.0.40
codegen_flags: <defaults>
</compile_context>

<pallas_src>
import functools

import jax
import jax.numpy as jnp
from jax.experimental import pallas as pl
from jax.experimental.pallas import tpu as pltpu

H = 32            # MAC "dim"        (stands for 512)
E = 32            # word embedding dim
VIS_DIM = 128     # stands for 2208
AC_DIM = 32       # stands for 74
MAX_STEP = 3
CLASSES = 2

MM_DTYPE = jnp.bfloat16   # MXU operand dtype; accumulation stays f32

_VMEM = functools.partial(pl.BlockSpec, memory_space=pltpu.MemorySpace.VMEM)


def _sigmoid(x):
    # EUP exp + EUP approx reciprocal (per perf review); avoids the f32 divide.
    return pl.reciprocal(1.0 + jnp.exp(-x), approx=True)


def _elu(x):
    # exp(min(x, 0)) keeps the discarded where() branch finite.
    return jnp.where(x > 0, x, jnp.exp(jnp.minimum(x, 0.0)) - 1.0)


def _softmax_last(z):
    z = z - jnp.max(z, axis=-1, keepdims=True)
    e = jnp.exp(z)
    return e * pl.reciprocal(jnp.sum(e, axis=-1, keepdims=True), approx=True)


# --------------------- fused kernel: LSTM + KB projection + MAC + classifier
def _fused_kernel(x_ref, wl_ref, bl_ref, vis_ref, ac_ref,
                  kbwv_ref, kbbv_ref, kbwa_ref, kbba_ref,
                  wctrl_ref, wca_ref,
                  wqv_ref, wwv_ref, wqa_ref, wwa_ref,
                  w1_ref, b1_ref, w2_ref, b2_ref,
                  out_ref, cw_scr, *, n_b, max_step, classes):
    B = n_b
    T, NB, _ = x_ref.shape
    Hd = wca_ref.shape[1]
    inv_sqrt_h = 1.0 / jnp.sqrt(jnp.float32(Hd))

    # ------------------------- batched LSTM over the 4 stacked text streams
    wl = wl_ref[...]                                        # [E+H, 4H] bf16 (stacked Wih;Whh)
    bias = jnp.broadcast_to(bl_ref[...], (NB, 4 * Hd))      # hoisted broadcast (= b_ih + b_hh)

    h = jnp.zeros((NB, Hd), jnp.float32)
    c = jnp.zeros((NB, Hd), jnp.float32)
    for t in range(T):                                      # static unroll (T small & static)
        xt = x_ref[t].astype(MM_DTYPE)                      # contiguous [NB, E] tile per step
        gates = jnp.dot(jnp.concatenate([xt, h.astype(MM_DTYPE)], axis=1), wl,
                        preferred_element_type=jnp.float32) + bias      # [NB, 4H]
        # 4H = 128 -> the gate tensor is one lane-dense vreg row; apply the
        # transcendentals to the full tensor and slice afterwards.
        # TODO(synk): at real dims (H=512) apply sigmoid only to i/f/o and tanh
        # only to g, and drive the time loop with lax.fori_loop(unroll=k).
        sig = _sigmoid(gates)
        tnh = jnp.tanh(gates)
        i_g = sig[:, 0:Hd]
        f_g = sig[:, Hd:2 * Hd]
        g_g = tnh[:, 2 * Hd:3 * Hd]
        o_g = sig[:, 3 * Hd:4 * Hd]
        c = f_g * c + i_g * g_g
        h = o_g * jnp.tanh(c)
        # contextual words (question stream only): per-step bf16 store, no concat
        cw_scr[:, pl.ds(t, 1), :] = h[0:B, None, :].astype(MM_DTYPE)

    q_vec = h[0:B]                                          # final hidden per stream
    s_vec = h[B:2 * B]
    a_vecs = [h[(2 + i) * B:(3 + i) * B] for i in range(classes)]
    q_mm = q_vec.astype(MM_DTYPE)
    cw_mm = cw_scr[...]                                     # [B, Tq, H] bf16

    # --------- knowledge-base projections: one flattened 2-D MXU matmul each
    def kb_project(kb_ref, w_ref, bias_ref):
        Bk, Tk, D = kb_ref.shape
        kb = kb_ref[...].reshape(Bk * Tk, D).astype(MM_DTYPE)           # [B*Tk, D]
        y = jnp.dot(kb, w_ref[...],
                    preferred_element_type=jnp.float32) + bias_ref[...]  # [B*Tk, H]
        return _elu(y).astype(MM_DTYPE).reshape(Bk, Tk, Hd)              # [B, Tk, H]

    kbv = kb_project(vis_ref, kbwv_ref, kbbv_ref)
    kba = kb_project(ac_ref, kbwa_ref, kbba_ref)

    # ------------------------------- MAC recurrence weights (bf16, hoisted)
    wctrl = wctrl_ref[...]                                  # [2H, H]  (= [wcc; wcq])
    wca = wca_ref[...]                                      # [1, H] f32
    wqv, wwv = wqv_ref[...], wwv_ref[...]                   # [2H, H] each
    wqa, wwa = wqa_ref[...], wwa_ref[...]

    def read_write(m, kb, w_qry, w_wr, c_mm):
        # fused query projection: [B, 2H] x [2H, H]; 1/sqrt(H) folded into query
        query = jnp.dot(jnp.concatenate([m.astype(MM_DTYPE), c_mm], axis=1), w_qry,
                        preferred_element_type=jnp.float32) * inv_sqrt_h     # [B, H]
        logits = jnp.einsum('bqh,bkh->bqk',
                            query[:, None, :].astype(MM_DTYPE), kb,
                            preferred_element_type=jnp.float32)              # [B, 1, Tk]
        attn = _softmax_last(logits)
        r = jnp.einsum('bqk,bkh->bqh', attn.astype(MM_DTYPE), kb,
                       preferred_element_type=jnp.float32)[:, 0, :]          # [B, H]
        # fused write projection: [B, 2H] x [2H, H]
        return jnp.dot(jnp.concatenate([r.astype(MM_DTYPE), m.astype(MM_DTYPE)], axis=1),
                       w_wr, preferred_element_type=jnp.float32)

    ctrl = q_vec
    m_v = jnp.zeros((B, Hd), jnp.float32)
    m_a = jnp.zeros((B, Hd), jnp.float32)

    for _ in range(max_step):                               # static unroll (max_step small)
        # control unit: fused [B, 2H] x [2H, H] projection + attention over words
        cq = jnp.dot(jnp.concatenate([ctrl.astype(MM_DTYPE), q_mm], axis=1), wctrl,
                     preferred_element_type=jnp.float32)                     # [B, H]
        cqw = ((cq * wca) * inv_sqrt_h)[:, None, :].astype(MM_DTYPE)         # [B, 1, H]
        cl = jnp.einsum('bqh,bkh->bqk', cqw, cw_mm,
                        preferred_element_type=jnp.float32)                  # [B, 1, Tq]
        cp = _softmax_last(cl)
        ctrl = jnp.einsum('bqk,bkh->bqh', cp.astype(MM_DTYPE), cw_mm,
                          preferred_element_type=jnp.float32)[:, 0, :]       # [B, H]
        c_mm = ctrl.astype(MM_DTYPE)

        # late-fused read/write: separate memories per modality
        m_v = read_write(m_v, kbv, wqv, wwv, c_mm)
        m_a = read_write(m_a, kba, wqa, wwa, c_mm)

    # ------------ per-answer classifier: single [C*B, 4H] x [4H, H] matmul
    rows = [jnp.concatenate([m_v, m_a, q_vec * a_vecs[i], s_vec], axis=1)
            for i in range(classes)]                                         # C x [B, 4H]
    feat = jnp.concatenate(rows, axis=0).astype(MM_DTYPE)                    # [C*B, 4H]
    hid = _elu(jnp.dot(feat, w1_ref[...],
                       preferred_element_type=jnp.float32) + b1_ref[...])    # [C*B, H]
    logit = (jnp.dot(hid.astype(MM_DTYPE), w2_ref[...],
                     preferred_element_type=jnp.float32) + b2_ref[...])      # [C*B, 1]
    # [B, C] output: lane-width-2 masked store, harmless at this size.
    out_ref[...] = jnp.concatenate(
        [logit[i * B:(i + 1) * B] for i in range(classes)], axis=1)


# ------------------------------------------------------------------ params
def init_params(key):
    def nrm(k, shape, scale=0.08):
        return scale * jax.random.normal(k, shape, dtype=jnp.float32)

    def bf(x):
        return x.astype(MM_DTYPE)

    ks = jax.random.split(key, 20)
    wih, whh = nrm(ks[0], (E, 4 * H)), nrm(ks[1], (H, 4 * H))
    wcc, wcq = nrm(ks[4], (H, H)), nrm(ks[5], (H, H))
    wmv, wcv = nrm(ks[7], (H, H)), nrm(ks[8], (H, H))
    wwrv, wwmv = nrm(ks[9], (H, H)), nrm(ks[10], (H, H))
    wma, wcaa = nrm(ks[11], (H, H)), nrm(ks[12], (H, H))
    wwra, wwma = nrm(ks[13], (H, H)), nrm(ks[14], (H, H))

    # MXU-facing weights are pre-stacked (so paired dots fuse into one matmul)
    # and pre-cast to bf16; biases stay f32 and are added to f32 accumulators.
    return {
        "lstm_w": bf(jnp.concatenate([wih, whh], axis=0)),       # [E+H, 4H]
        "lstm_b": jnp.zeros((1, 4 * H), jnp.float32),            # = b_ih + b_hh
        "kb_wv": bf(nrm(ks[2], (VIS_DIM, H))),
        "kb_bv": jnp.zeros((1, H), jnp.float32),
        "kb_wa": bf(nrm(ks[3], (AC_DIM, H))),
        "kb_ba": jnp.zeros((1, H), jnp.float32),
        "w_ctrl": bf(jnp.concatenate([wcc, wcq], axis=0)),       # [2H, H]
        "wca": nrm(ks[6], (1, H)),
        "w_qry_v": bf(jnp.concatenate([wmv, wcv], axis=0)),      # [2H, H]
        "w_wr_v": bf(jnp.concatenate([wwrv, wwmv], axis=0)),     # [2H, H]
        "w_qry_a": bf(jnp.concatenate([wma, wcaa], axis=0)),     # [2H, H]
        "w_wr_a": bf(jnp.concatenate([wwra, wwma], axis=0)),     # [2H, H]
        "clf_w1": bf(nrm(ks[15], (4 * H, H))),
        "clf_b1": jnp.zeros((1, H), jnp.float32),
        "clf_w2": bf(nrm(ks[16], (H, 1))),
        "clf_b2": jnp.zeros((1, 1), jnp.float32),
    }


# ------------------------------------------------------------------ forward
def mac_late_fuse(params, subs, vis, ac, q, answers):
    B, Tq, _ = q.shape
    # TODO(synk): variable-length / padded sequences are not masked (the
    # original MACNetwork_LateFuse source is unavailable); all text streams
    # must share the same T here.
    assert subs.shape[1] == Tq and answers.shape[2] == Tq

    # Stack the four weight-sharing text streams on the batch axis and go
    # time-major so each LSTM step reads one contiguous [NB, E] tile.
    x_all = jnp.concatenate([q, subs] + [answers[:, i] for i in range(CLASSES)],
                            axis=0)                                  # [(2+C)*B, T, E]
    x_all = jnp.transpose(x_all, (1, 0, 2))                          # [T, (2+C)*B, E]

    # Single fused pallas_call: LSTM -> KB projection -> MAC -> classifier.
    # TODO(synk): at real dims (dim=512, visual_dim=2208, long Tv/Ta) add a grid
    # tiled over batch ("parallel", shards v7x's 2 TensorCores) and over Tv/Ta
    # for the KB projection, with pltpu.CompilerParams(vmem_limit_bytes=...)
    # sized for 64 MiB (v7x) / 128 MiB (v6e) VMEM; at these demo dims a
    # gridless full-block call wins.
    logits = pl.pallas_call(
        functools.partial(_fused_kernel, n_b=B, max_step=MAX_STEP,
                          classes=CLASSES),
        out_shape=jax.ShapeDtypeStruct((B, CLASSES), jnp.float32),
        in_specs=[_VMEM()] * 19,
        out_specs=_VMEM(),
        scratch_shapes=[pltpu.VMEM((B, Tq, H), MM_DTYPE)],   # contextual words (bf16)
    )(x_all, params["lstm_w"], params["lstm_b"], vis, ac,
      params["kb_wv"], params["kb_bv"], params["kb_wa"], params["kb_ba"],
      params["w_ctrl"], params["wca"],
      params["w_qry_v"], params["w_wr_v"], params["w_qry_a"], params["w_wr_a"],
      params["clf_w1"], params["clf_b1"], params["clf_w2"], params["clf_b2"])
    return logits


@jax.jit
def lstm_qavtac_mac_late_forward(params, q, answers, subs, vis, ac):
    # eval path: logits = mac_running(subs, vis, ac, q, answers)
    logits = mac_late_fuse(params, subs, vis, ac, q, answers)
    # matches: [logits[:, i].unsqueeze(-1) for i in range(logits.shape[1])]
    return tuple(logits[:, i:i + 1] for i in range(logits.shape[1]))


if __name__ == "__main__":
    key = jax.random.PRNGKey(0)
    kp, kq, ka, ks, kv, kac = jax.random.split(key, 6)

    B, Tq, Ts, Tv, Tac, Ta = 2, 8, 8, 6, 6, 8
    params = init_params(kp)
    q = jax.random.normal(kq, (B, Tq, E), jnp.float32)
    answers = jax.random.normal(ka, (B, CLASSES, Ta, E), jnp.float32)
    subs = jax.random.normal(ks, (B, Ts, E), jnp.float32)
    vis = jax.random.normal(kv, (B, Tv, VIS_DIM), jnp.float32)
    ac = jax.random.normal(kac, (B, Tac, AC_DIM), jnp.float32)

    outs = lstm_qavtac_mac_late_forward(params, q, answers, subs, vis, ac)
    outs = jax.block_until_ready(outs)
    assert len(outs) == CLASSES and all(o.shape == (B, 1) for o in outs)
    assert all(bool(jnp.all(jnp.isfinite(o))) for o in outs)
    print("KERNEL_OK")
</pallas_src>

<mosaic_0001>
module attributes {stable_mosaic.version = 11 : i64} {
  func.func @_fused_kernel(%arg0: memref<8x8x32xf32, #tpu.memory_space<vmem>>, %arg1: memref<64x128xbf16, #tpu.memory_space<vmem>>, %arg2: memref<1x128xf32, #tpu.memory_space<vmem>>, %arg3: memref<2x6x128xf32, #tpu.memory_space<vmem>>, %arg4: memref<2x6x32xf32, #tpu.memory_space<vmem>>, %arg5: memref<128x32xbf16, #tpu.memory_space<vmem>>, %arg6: memref<1x32xf32, #tpu.memory_space<vmem>>, %arg7: memref<32x32xbf16, #tpu.memory_space<vmem>>, %arg8: memref<1x32xf32, #tpu.memory_space<vmem>>, %arg9: memref<64x32xbf16, #tpu.memory_space<vmem>>, %arg10: memref<1x32xf32, #tpu.memory_space<vmem>>, %arg11: memref<64x32xbf16, #tpu.memory_space<vmem>>, %arg12: memref<64x32xbf16, #tpu.memory_space<vmem>>, %arg13: memref<64x32xbf16, #tpu.memory_space<vmem>>, %arg14: memref<64x32xbf16, #tpu.memory_space<vmem>>, %arg15: memref<128x32xbf16, #tpu.memory_space<vmem>>, %arg16: memref<1x32xf32, #tpu.memory_space<vmem>>, %arg17: memref<32x1xbf16, #tpu.memory_space<vmem>>, %arg18: memref<1x1xf32, #tpu.memory_space<vmem>>, %arg19: memref<2x2xf32, #tpu.memory_space<vmem>>, %arg20: memref<2x8x32xbf16, #tpu.memory_space<vmem>>) attributes {dimension_semantics = [], scalar_prefetch = 0 : i64, scratch_operands = 1 : i64, tpu.core_type = #tpu.core_type<tc>} {
    %cst = arith.constant 3.200000e+01 : f32
    %0 = math.sqrt %cst : f32
    %cst_0 = arith.constant 1.000000e+00 : f32
    %1 = arith.divf %cst_0, %0 : f32
    %c0 = arith.constant 0 : index
    %c0_1 = arith.constant 0 : index
    %2 = vector.load %arg1[%c0, %c0_1] : memref<64x128xbf16, #tpu.memory_space<vmem>>, vector<64x128xbf16>
    %c0_2 = arith.constant 0 : index
    %c0_3 = arith.constant 0 : index
    %3 = vector.load %arg2[%c0_2, %c0_3] : memref<1x128xf32, #tpu.memory_space<vmem>>, vector<1x128xf32>
    %4 = vector.shape_cast %3 : vector<1x128xf32> to vector<1x128xf32>
    %5 = vector.broadcast %4 : vector<1x128xf32> to vector<8x128xf32>
    %cst_4 = arith.constant 0.000000e+00 : f32
    %6 = vector.broadcast %cst_4 : f32 to vector<8x32xf32>
    %cst_5 = arith.constant 0.000000e+00 : f32
    %7 = vector.broadcast %cst_5 : f32 to vector<8x32xf32>
    %c0_6 = arith.constant 0 : index
    %c0_7 = arith.constant 0 : index
    %c0_8 = arith.constant 0 : index
    %8 = vector.load %arg0[%c0_6, %c0_7, %c0_8] : memref<8x8x32xf32, #tpu.memory_space<vmem>>, vector<1x8x32xf32>
    %9 = vector.shape_cast %8 : vector<1x8x32xf32> to vector<8x32xf32>
    %10 = arith.truncf %9 : vector<8x32xf32> to vector<8x32xbf16>
    %11 = arith.truncf %6 : vector<8x32xf32> to vector<8x32xbf16>
    %12 = tpu.concatenate %10, %11 in 1 : vector<8x32xbf16>, vector<8x32xbf16> -> vector<8x64xbf16>
    %cst_9 = arith.constant dense<0.000000e+00> : vector<8x128xf32>
    %13 = tpu.matmul %12, %2, %cst_9 {dimension_numbers = #tpu.dot_dimension_numbers<[1], [0], [0], [1], [0, 0, 1, 1], [], []>} : vector<8x64xbf16>, vector<64x128xbf16>, vector<8x128xf32> -> vector<8x128xf32>
    %14 = arith.addf %13, %5 : vector<8x128xf32>
    %cst_10 = arith.constant 0.000000e+00 : f32
    %15 = vector.broadcast %cst_10 : f32 to vector<8x128xf32>
    %16 = arith.subf %15, %14 : vector<8x128xf32>
    %17 = math.exp %16 : vector<8x128xf32>
    %cst_11 = arith.constant 1.000000e+00 : f32
    %18 = vector.broadcast %cst_11 : f32 to vector<8x128xf32>
    %19 = arith.addf %18, %17 : vector<8x128xf32>
    %20 = tpu.reciprocal %19 {approx = true} : vector<8x128xf32> -> vector<8x128xf32>
    %21 = math.tanh %14 : vector<8x128xf32>
    %22 = vector.extract_strided_slice %20 {offsets = [0, 0], sizes = [8, 32], strides = [1, 1]} : vector<8x128xf32> to vector<8x32xf32>
    %23 = vector.extract_strided_slice %20 {offsets = [0, 32], sizes = [8, 32], strides = [1, 1]} : vector<8x128xf32> to vector<8x32xf32>
    %24 = vector.extract_strided_slice %21 {offsets = [0, 64], sizes = [8, 32], strides = [1, 1]} : vector<8x128xf32> to vector<8x32xf32>
    %25 = vector.extract_strided_slice %20 {offsets = [0, 96], sizes = [8, 32], strides = [1, 1]} : vector<8x128xf32> to vector<8x32xf32>
    %26 = arith.mulf %23, %7 : vector<8x32xf32>
    %27 = arith.mulf %22, %24 : vector<8x32xf32>
    %28 = arith.addf %26, %27 : vector<8x32xf32>
    %29 = math.tanh %28 : vector<8x32xf32>
    %30 = arith.mulf %25, %29 : vector<8x32xf32>
    %31 = vector.extract_strided_slice %30 {offsets = [0, 0], sizes = [2, 32], strides = [1, 1]} : vector<8x32xf32> to vector<2x32xf32>
    %32 = vector.shape_cast %31 : vector<2x32xf32> to vector<2x1x32xf32>
    %33 = arith.truncf %32 : vector<2x1x32xf32> to vector<2x1x32xbf16>
    %c0_12 = arith.constant 0 : index
    %c0_13 = arith.constant 0 : index
    %c0_14 = arith.constant 0 : index
    %34 = vector.load %arg20[%c0_12, %c0_13, %c0_14] : memref<2x8x32xbf16, #tpu.memory_space<vmem>>, vector<2x1x32xbf16>
    tpu.vector_store %arg20[%c0_12, %c0_13, %c0_14], %33 {strides = array<i32>} : memref<2x8x32xbf16, #tpu.memory_space<vmem>>, vector<2x1x32xbf16>,
    %c1 = arith.constant 1 : index
    %c0_15 = arith.constant 0 : index
    %c0_16 = arith.constant 0 : index
    %35 = vector.load %arg0[%c1, %c0_15, %c0_16] : memref<8x8x32xf32, #tpu.memory_space<vmem>>, vector<1x8x32xf32>
    %36 = vector.shape_cast %35 : vector<1x8x32xf32> to vector<8x32xf32>
    %37 = arith.truncf %36 : vector<8x32xf32> to vector<8x32xbf16>
    %38 = arith.truncf %30 : vector<8x32xf32> to vector<8x32xbf16>
    %39 = tpu.concatenate %37, %38 in 1 : vector<8x32xbf16>, vector<8x32xbf16> -> vector<8x64xbf16>
    %cst_17 = arith.constant dense<0.000000e+00> : vector<8x128xf32>
    %40 = tpu.matmul %39, %2, %cst_17 {dimension_numbers = #tpu.dot_dimension_numbers<[1], [0], [0], [1], [0, 0, 1, 1], [], []>} : vector<8x64xbf16>, vector<64x128xbf16>, vector<8x128xf32> -> vector<8x128xf32>
    %41 = arith.addf %40, %5 : vector<8x128xf32>
    %cst_18 = arith.constant 0.000000e+00 : f32
    %42 = vector.broadcast %cst_18 : f32 to vector<8x128xf32>
    %43 = arith.subf %42, %41 : vector<8x128xf32>
    %44 = math.exp %43 : vector<8x128xf32>
    %cst_19 = arith.constant 1.000000e+00 : f32
    %45 = vector.broadcast %cst_19 : f32 to vector<8x128xf32>
    %46 = arith.addf %45, %44 : vector<8x128xf32>
    %47 = tpu.reciprocal %46 {approx = true} : vector<8x128xf32> -> vector<8x128xf32>
    %48 = math.tanh %41 : vector<8x128xf32>
    %49 = vector.extract_strided_slice %47 {offsets = [0, 0], sizes = [8, 32], strides = [1, 1]} : vector<8x128xf32> to vector<8x32xf32>
    %50 = vector.extract_strided_slice %47 {offsets = [0, 32], sizes = [8, 32], strides = [1, 1]} : vector<8x128xf32> to vector<8x32xf32>
    %51 = vector.extract_strided_slice %48 {offsets = [0, 64], sizes = [8, 32], strides = [1, 1]} : vector<8x128xf32> to vector<8x32xf32>
    %52 = vector.extract_strided_slice %47 {offsets = [0, 96], sizes = [8, 32], strides = [1, 1]} : vector<8x128xf32> to vector<8x32xf32>
    %53 = arith.mulf %50, %28 : vector<8x32xf32>
    %54 = arith.mulf %49, %51 : vector<8x32xf32>
    %55 = arith.addf %53, %54 : vector<8x32xf32>
    %56 = math.tanh %55 : vector<8x32xf32>
    %57 = arith.mulf %52, %56 : vector<8x32xf32>
    %58 = vector.extract_strided_slice %57 {offsets = [0, 0], sizes = [2, 32], strides = [1, 1]} : vector<8x32xf32> to vector<2x32xf32>
    %59 = vector.shape_cast %58 : vector<2x32xf32> to vector<2x1x32xf32>
    %60 = arith.truncf %59 : vector<2x1x32xf32> to vector<2x1x32xbf16>
    %c0_20 = arith.constant 0 : index
    %c1_21 = arith.constant 1 : index
    %c0_22 = arith.constant 0 : index
    %61 = vector.load %arg20[%c0_20, %c1_21, %c0_22] : memref<2x8x32xbf16, #tpu.memory_space<vmem>>, vector<2x1x32xbf16>
    tpu.vector_store %arg20[%c0_20, %c1_21, %c0_22], %60 {strides = array<i32>} : memref<2x8x32xbf16, #tpu.memory_space<vmem>>, vector<2x1x32xbf16>,
    %c2 = arith.constant 2 : index
    %c0_23 = arith.constant 0 : index
    %c0_24 = arith.constant 0 : index
    %62 = vector.load %arg0[%c2, %c0_23, %c0_24] : memref<8x8x32xf32, #tpu.memory_space<vmem>>, vector<1x8x32xf32>
    %63 = vector.shape_cast %62 : vector<1x8x32xf32> to vector<8x32xf32>
    %64 = arith.truncf %63 : vector<8x32xf32> to vector<8x32xbf16>
    %65 = arith.truncf %57 : vector<8x32xf32> to vector<8x32xbf16>
    %66 = tpu.concatenate %64, %65 in 1 : vector<8x32xbf16>, vector<8x32xbf16> -> vector<8x64xbf16>
    %cst_25 = arith.constant dense<0.000000e+00> : vector<8x128xf32>
    %67 = tpu.matmul %66, %2, %cst_25 {dimension_numbers = #tpu.dot_dimension_numbers<[1], [0], [0], [1], [0, 0, 1, 1], [], []>} : vector<8x64xbf16>, vector<64x128xbf16>, vector<8x128xf32> -> vector<8x128xf32>
    %68 = arith.addf %67, %5 : vector<8x128xf32>
    %cst_26 = arith.constant 0.000000e+00 : f32
    %69 = vector.broadcast %cst_26 : f32 to vector<8x128xf32>
    %70 = arith.subf %69, %68 : vector<8x128xf32>
    %71 = math.exp %70 : vector<8x128xf32>
    %cst_27 = arith.constant 1.000000e+00 : f32
    %72 = vector.broadcast %cst_27 : f32 to vector<8x128xf32>
    %73 = arith.addf %72, %71 : vector<8x128xf32>
    %74 = tpu.reciprocal %73 {approx = true} : vector<8x128xf32> -> vector<8x128xf32>
    %75 = math.tanh %68 : vector<8x128xf32>
    %76 = vector.extract_strided_slice %74 {offsets = [0, 0], sizes = [8, 32], strides = [1, 1]} : vector<8x128xf32> to vector<8x32xf32>
    %77 = vector.extract_strided_slice %74 {offsets = [0, 32], sizes = [8, 32], strides = [1, 1]} : vector<8x128xf32> to vector<8x32xf32>
    %78 = vector.extract_strided_slice %75 {offsets = [0, 64], sizes = [8, 32], strides = [1, 1]} : vector<8x128xf32> to vector<8x32xf32>
    %79 = vector.extract_strided_slice %74 {offsets = [0, 96], sizes = [8, 32], strides = [1, 1]} : vector<8x128xf32> to vector<8x32xf32>
    %80 = arith.mulf %77, %55 : vector<8x32xf32>
    %81 = arith.mulf %76, %78 : vector<8x32xf32>
    %82 = arith.addf %80, %81 : vector<8x32xf32>
    %83 = math.tanh %82 : vector<8x32xf32>
    %84 = arith.mulf %79, %83 : vector<8x32xf32>
    %85 = vector.extract_strided_slice %84 {offsets = [0, 0], sizes = [2, 32], strides = [1, 1]} : vector<8x32xf32> to vector<2x32xf32>
    %86 = vector.shape_cast %85 : vector<2x32xf32> to vector<2x1x32xf32>
    %87 = arith.truncf %86 : vector<2x1x32xf32> to vector<2x1x32xbf16>
    %c0_28 = arith.constant 0 : index
    %c2_29 = arith.constant 2 : index
    %c0_30 = arith.constant 0 : index
    %88 = vector.load %arg20[%c0_28, %c2_29, %c0_30] : memref<2x8x32xbf16, #tpu.memory_space<vmem>>, vector<2x1x32xbf16>
    tpu.vector_store %arg20[%c0_28, %c2_29, %c0_30], %87 {strides = array<i32>} : memref<2x8x32xbf16, #tpu.memory_space<vmem>>, vector<2x1x32xbf16>,
    %c3 = arith.constant 3 : index
    %c0_31 = arith.constant 0 : index
    %c0_32 = arith.constant 0 : index
    %89 = vector.load %arg0[%c3, %c0_31, %c0_32] : memref<8x8x32xf32, #tpu.memory_space<vmem>>, vector<1x8x32xf32>
    %90 = vector.shape_cast %89 : vector<1x8x32xf32> to vector<8x32xf32>
    %91 = arith.truncf %90 : vector<8x32xf32> to vector<8x32xbf16>
    %92 = arith.truncf %84 : vector<8x32xf32> to vector<8x32xbf16>
    %93 = tpu.concatenate %91, %92 in 1 : vector<8x32xbf16>, vector<8x32xbf16> -> vector<8x64xbf16>
    %cst_33 = arith.constant dense<0.000000e+00> : vector<8x128xf32>
    %94 = tpu.matmul %93, %2, %cst_33 {dimension_numbers = #tpu.dot_dimension_numbers<[1], [0], [0], [1], [0, 0, 1, 1], [], []>} : vector<8x64xbf16>, vector<64x128xbf16>, vector<8x128xf32> -> vector<8x128xf32>
    %95 = arith.addf %94, %5 : vector<8x128xf32>
    %cst_34 = arith.constant 0.000000e+00 : f32
    %96 = vector.broadcast %cst_34 : f32 to vector<8x128xf32>
    %97 = arith.subf %96, %95 : vector<8x128xf32>
    %98 = math.exp %97 : vector<8x128xf32>
    %cst_35 = arith.constant 1.000000e+00 : f32
    %99 = vector.broadcast %cst_35 : f32 to vector<8x128xf32>
    %100 = arith.addf %99, %98 : vector<8x128xf32>
    %101 = tpu.reciprocal %100 {approx = true} : vector<8x128xf32> -> vector<8x128xf32>
    %102 = math.tanh %95 : vector<8x128xf32>
    %103 = vector.extract_strided_slice %101 {offsets = [0, 0], sizes = [8, 32], strides = [1, 1]} : vector<8x128xf32> to vector<8x32xf32>
    %104 = vector.extract_strided_slice %101 {offsets = [0, 32], sizes = [8, 32], strides = [1, 1]} : vector<8x128xf32> to vector<8x32xf32>
    %105 = vector.extract_strided_slice %102 {offsets = [0, 64], sizes = [8, 32], strides = [1, 1]} : vector<8x128xf32> to vector<8x32xf32>
    %106 = vector.extract_strided_slice %101 {offsets = [0, 96], sizes = [8, 32], strides = [1, 1]} : vector<8x128xf32> to vector<8x32xf32>
    %107 = arith.mulf %104, %82 : vector<8x32xf32>
    %108 = arith.mulf %103, %105 : vector<8x32xf32>
    %109 = arith.addf %107, %108 : vector<8x32xf32>
    %110 = math.tanh %109 : vector<8x32xf32>
    %111 = arith.mulf %106, %110 : vector<8x32xf32>
    %112 = vector.extract_strided_slice %111 {offsets = [0, 0], sizes = [2, 32], strides = [1, 1]} : vector<8x32xf32> to vector<2x32xf32>
    %113 = vector.shape_cast %112 : vector<2x32xf32> to vector<2x1x32xf32>
    %114 = arith.truncf %113 : vector<2x1x32xf32> to vector<2x1x32xbf16>
    %c0_36 = arith.constant 0 : index
    %c3_37 = arith.constant 3 : index
    %c0_38 = arith.constant 0 : index
    %115 = vector.load %arg20[%c0_36, %c3_37, %c0_38] : memref<2x8x32xbf16, #tpu.memory_space<vmem>>, vector<2x1x32xbf16>
    tpu.vector_store %arg20[%c0_36, %c3_37, %c0_38], %114 {strides = array<i32>} : memref<2x8x32xbf16, #tpu.memory_space<vmem>>, vector<2x1x32xbf16>,
    %c4 = arith.constant 4 : index
    %c0_39 = arith.constant 0 : index
    %c0_40 = arith.constant 0 : index
    %116 = vector.load %arg0[%c4, %c0_39, %c0_40] : memref<8x8x32xf32, #tpu.memory_space<vmem>>, vector<1x8x32xf32>
    %117 = vector.shape_cast %116 : vector<1x8x32xf32> to vector<8x32xf32>
    %118 = arith.truncf %117 : vector<8x32xf32> to vector<8x32xbf16>
    %119 = arith.truncf %111 : vector<8x32xf32> to vector<8x32xbf16>
    %120 = tpu.concatenate %118, %119 in 1 : vector<8x32xbf16>, vector<8x32xbf16> -> vector<8x64xbf16>
    %cst_41 = arith.constant dense<0.000000e+00> : vector<8x128xf32>
    %121 = tpu.matmul %120, %2, %cst_41 {dimension_numbers = #tpu.dot_dimension_numbers<[1], [0], [0], [1], [0, 0, 1, 1], [], []>} : vector<8x64xbf16>, vector<64x128xbf16>, vector<8x128xf32> -> vector<8x128xf32>
    %122 = arith.addf %121, %5 : vector<8x128xf32>
    %cst_42 = arith.constant 0.000000e+00 : f32
    %123 = vector.broadcast %cst_42 : f32 to vector<8x128xf32>
    %124 = arith.subf %123, %122 : vector<8x128xf32>
    %125 = math.exp %124 : vector<8x128xf32>
    %cst_43 = arith.constant 1.000000e+00 : f32
    %126 = vector.broadcast %cst_43 : f32 to vector<8x128xf32>
    %127 = arith.addf %126, %125 : vector<8x128xf32>
    %128 = tpu.reciprocal %127 {approx = true} : vector<8x128xf32> -> vector<8x128xf32>
    %129 = math.tanh %122 : vector<8x128xf32>
    %130 = vector.extract_strided_slice %128 {offsets = [0, 0], sizes = [8, 32], strides = [1, 1]} : vector<8x128xf32> to vector<8x32xf32>
    %131 = vector.extract_strided_slice %128 {offsets = [0, 32], sizes = [8, 32], strides = [1, 1]} : vector<8x128xf32> to vector<8x32xf32>
    %132 = vector.extract_strided_slice %129 {offsets = [0, 64], sizes = [8, 32], strides = [1, 1]} : vector<8x128xf32> to vector<8x32xf32>
    %133 = vector.extract_strided_slice %128 {offsets = [0, 96], sizes = [8, 32], strides = [1, 1]} : vector<8x128xf32> to vector<8x32xf32>
    %134 = arith.mulf %131, %109 : vector<8x32xf32>
    %135 = arith.mulf %130, %132 : vector<8x32xf32>
    %136 = arith.addf %134, %135 : vector<8x32xf32>
    %137 = math.tanh %136 : vector<8x32xf32>
    %138 = arith.mulf %133, %137 : vector<8x32xf32>
    %139 = vector.extract_strided_slice %138 {offsets = [0, 0], sizes = [2, 32], strides = [1, 1]} : vector<8x32xf32> to vector<2x32xf32>
    %140 = vector.shape_cast %139 : vector<2x32xf32> to vector<2x1x32xf32>
    %141 = arith.truncf %140 : vector<2x1x32xf32> to vector<2x1x32xbf16>
    %c0_44 = arith.constant 0 : index
    %c4_45 = arith.constant 4 : index
    %c0_46 = arith.constant 0 : index
    %142 = vector.load %arg20[%c0_44, %c4_45, %c0_46] : memref<2x8x32xbf16, #tpu.memory_space<vmem>>, vector<2x1x32xbf16>
    tpu.vector_store %arg20[%c0_44, %c4_45, %c0_46], %141 {strides = array<i32>} : memref<2x8x32xbf16, #tpu.memory_space<vmem>>, vector<2x1x32xbf16>,
    %c5 = arith.constant 5 : index
    %c0_47 = arith.constant 0 : index
    %c0_48 = arith.constant 0 : index
    %143 = vector.load %arg0[%c5, %c0_47, %c0_48] : memref<8x8x32xf32, #tpu.memory_space<vmem>>, vector<1x8x32xf32>
    %144 = vector.shape_cast %143 : vector<1x8x32xf32> to vector<8x32xf32>
    %145 = arith.truncf %144 : vector<8x32xf32> to vector<8x32xbf16>
    %146 = arith.truncf %138 : vector<8x32xf32> to vector<8x32xbf16>
    %147 = tpu.concatenate %145, %146 in 1 : vector<8x32xbf16>, vector<8x32xbf16> -> vector<8x64xbf16>
    %cst_49 = arith.constant dense<0.000000e+00> : vector<8x128xf32>
    %148 = tpu.matmul %147, %2, %cst_49 {dimension_numbers = #tpu.dot_dimension_numbers<[1], [0], [0], [1], [0, 0, 1, 1], [], []>} : vector<8x64xbf16>, vector<64x128xbf16>, vector<8x128xf32> -> vector<8x128xf32>
    %149 = arith.addf %148, %5 : vector<8x128xf32>
    %cst_50 = arith.constant 0.000000e+00 : f32
    %150 = vector.broadcast %cst_50 : f32 to vector<8x128xf32>
    %151 = arith.subf %150, %149 : vector<8x128xf32>
    %152 = math.exp %151 : vector<8x128xf32>
    %cst_51 = arith.constant 1.000000e+00 : f32
    %153 = vector.broadcast %cst_51 : f32 to vector<8x128xf32>
    %154 = arith.addf %153, %152 : vector<8x128xf32>
    %155 = tpu.reciprocal %154 {approx = true} : vector<8x128xf32> -> vector<8x128xf32>
    %156 = math.tanh %149 : vector<8x128xf32>
    %157 = vector.extract_strided_slice %155 {offsets = [0, 0], sizes = [8, 32], strides = [1, 1]} : vector<8x128xf32> to vector<8x32xf32>
    %158 = vector.extract_strided_slice %155 {offsets = [0, 32], sizes = [8, 32], strides = [1, 1]} : vector<8x128xf32> to vector<8x32xf32>
    %159 = vector.extract_strided_slice %156 {offsets = [0, 64], sizes = [8, 32], strides = [1, 1]} : vector<8x128xf32> to vector<8x32xf32>
    %160 = vector.extract_strided_slice %155 {offsets = [0, 96], sizes = [8, 32], strides = [1, 1]} : vector<8x128xf32> to vector<8x32xf32>
    %161 = arith.mulf %158, %136 : vector<8x32xf32>
    %162 = arith.mulf %157, %159 : vector<8x32xf32>
    %163 = arith.addf %161, %162 : vector<8x32xf32>
    %164 = math.tanh %163 : vector<8x32xf32>
    %165 = arith.mulf %160, %164 : vector<8x32xf32>
    %166 = vector.extract_strided_slice %165 {offsets = [0, 0], sizes = [2, 32], strides = [1, 1]} : vector<8x32xf32> to vector<2x32xf32>
    %167 = vector.shape_cast %166 : vector<2x32xf32> to vector<2x1x32xf32>
    %168 = arith.truncf %167 : vector<2x1x32xf32> to vector<2x1x32xbf16>
    %c0_52 = arith.constant 0 : index
    %c5_53 = arith.constant 5 : index
    %c0_54 = arith.constant 0 : index
    %169 = vector.load %arg20[%c0_52, %c5_53, %c0_54] : memref<2x8x32xbf16, #tpu.memory_space<vmem>>, vector<2x1x32xbf16>
    tpu.vector_store %arg20[%c0_52, %c5_53, %c0_54], %168 {strides = array<i32>} : memref<2x8x32xbf16, #tpu.memory_space<vmem>>, vector<2x1x32xbf16>,
    %c6 = arith.constant 6 : index
    %c0_55 = arith.constant 0 : index
    %c0_56 = arith.constant 0 : index
    %170 = vector.load %arg0[%c6, %c0_55, %c0_56] : memref<8x8x32xf32, #tpu.memory_space<vmem>>, vector<1x8x32xf32>
    %171 = vector.shape_cast %170 : vector<1x8x32xf32> to vector<8x32xf32>
    %172 = arith.truncf %171 : vector<8x32xf32> to vector<8x32xbf16>
    %173 = arith.truncf %165 : vector<8x32xf32> to vector<8x32xbf16>
    %174 = tpu.concatenate %172, %173 in 1 : vector<8x32xbf16>, vector<8x32xbf16> -> vector<8x64xbf16>
    %cst_57 = arith.constant dense<0.000000e+00> : vector<8x128xf32>
    %175 = tpu.matmul %174, %2, %cst_57 {dimension_numbers = #tpu.dot_dimension_numbers<[1], [0], [0], [1], [0, 0, 1, 1], [], []>} : vector<8x64xbf16>, vector<64x128xbf16>, vector<8x128xf32> -> vector<8x128xf32>
    %176 = arith.addf %175, %5 : vector<8x128xf32>
    %cst_58 = arith.constant 0.000000e+00 : f32
    %177 = vector.broadcast %cst_58 : f32 to vector<8x128xf32>
    %178 = arith.subf %177, %176 : vector<8x128xf32>
    %179 = math.exp %178 : vector<8x128xf32>
    %cst_59 = arith.constant 1.000000e+00 : f32
    %180 = vector.broadcast %cst_59 : f32 to vector<8x128xf32>
    %181 = arith.addf %180, %179 : vector<8x128xf32>
    %182 = tpu.reciprocal %181 {approx = true} : vector<8x128xf32> -> vector<8x128xf32>
    %183 = math.tanh %176 : vector<8x128xf32>
    %184 = vector.extract_strided_slice %182 {offsets = [0, 0], sizes = [8, 32], strides = [1, 1]} : vector<8x128xf32> to vector<8x32xf32>
    %185 = vector.extract_strided_slice %182 {offsets = [0, 32], sizes = [8, 32], strides = [1, 1]} : vector<8x128xf32> to vector<8x32xf32>
    %186 = vector.extract_strided_slice %183 {offsets = [0, 64], sizes = [8, 32], strides = [1, 1]} : vector<8x128xf32> to vector<8x32xf32>
    %187 = vector.extract_strided_slice %182 {offsets = [0, 96], sizes = [8, 32], strides = [1, 1]} : vector<8x128xf32> to vector<8x32xf32>
    %188 = arith.mulf %185, %163 : vector<8x32xf32>
    %189 = arith.mulf %184, %186 : vector<8x32xf32>
    %190 = arith.addf %188, %189 : vector<8x32xf32>
    %191 = math.tanh %190 : vector<8x32xf32>
    %192 = arith.mulf %187, %191 : vector<8x32xf32>
    %193 = vector.extract_strided_slice %192 {offsets = [0, 0], sizes = [2, 32], strides = [1, 1]} : vector<8x32xf32> to vector<2x32xf32>
    %194 = vector.shape_cast %193 : vector<2x32xf32> to vector<2x1x32xf32>
    %195 = arith.truncf %194 : vector<2x1x32xf32> to vector<2x1x32xbf16>
    %c0_60 = arith.constant 0 : index
    %c6_61 = arith.constant 6 : index
    %c0_62 = arith.constant 0 : index
    %196 = vector.load %arg20[%c0_60, %c6_61, %c0_62] : memref<2x8x32xbf16, #tpu.memory_space<vmem>>, vector<2x1x32xbf16>
    tpu.vector_store %arg20[%c0_60, %c6_61, %c0_62], %195 {strides = array<i32>} : memref<2x8x32xbf16, #tpu.memory_space<vmem>>, vector<2x1x32xbf16>,
    %c7 = arith.constant 7 : index
    %c0_63 = arith.constant 0 : index
    %c0_64 = arith.constant 0 : index
    %197 = vector.load %arg0[%c7, %c0_63, %c0_64] : memref<8x8x32xf32, #tpu.memory_space<vmem>>, vector<1x8x32xf32>
    %198 = vector.shape_cast %197 : vector<1x8x32xf32> to vector<8x32xf32>
    %199 = arith.truncf %198 : vector<8x32xf32> to vector<8x32xbf16>
    %200 = arith.truncf %192 : vector<8x32xf32> to vector<8x32xbf16>
    %201 = tpu.concatenate %199, %200 in 1 : vector<8x32xbf16>, vector<8x32xbf16> -> vector<8x64xbf16>
    %cst_65 = arith.constant dense<0.000000e+00> : vector<8x128xf32>
    %202 = tpu.matmul %201, %2, %cst_65 {dimension_numbers = #tpu.dot_dimension_numbers<[1], [0], [0], [1], [0, 0, 1, 1], [], []>} : vector<8x64xbf16>, vector<64x128xbf16>, vector<8x128xf32> -> vector<8x128xf32>
    %203 = arith.addf %202, %5 : vector<8x128xf32>
    %cst_66 = arith.constant 0.000000e+00 : f32
    %204 = vector.broadcast %cst_66 : f32 to vector<8x128xf32>
    %205 = arith.subf %204, %203 : vector<8x128xf32>
    %206 = math.exp %205 : vector<8x128xf32>
    %cst_67 = arith.constant 1.000000e+00 : f32
    %207 = vector.broadcast %cst_67 : f32 to vector<8x128xf32>
    %208 = arith.addf %207, %206 : vector<8x128xf32>
    %209 = tpu.reciprocal %208 {approx = true} : vector<8x128xf32> -> vector<8x128xf32>
    %210 = math.tanh %203 : vector<8x128xf32>
    %211 = vector.extract_strided_slice %209 {offsets = [0, 0], sizes = [8, 32], strides = [1, 1]} : vector<8x128xf32> to vector<8x32xf32>
    %212 = vector.extract_strided_slice %209 {offsets = [0, 32], sizes = [8, 32], strides = [1, 1]} : vector<8x128xf32> to vector<8x32xf32>
    %213 = vector.extract_strided_slice %210 {offsets = [0, 64], sizes = [8, 32], strides = [1, 1]} : vector<8x128xf32> to vector<8x32xf32>
    %214 = vector.extract_strided_slice %209 {offsets = [0, 96], sizes = [8, 32], strides = [1, 1]} : vector<8x128xf32> to vector<8x32xf32>
    %215 = arith.mulf %212, %190 : vector<8x32xf32>
    %216 = arith.mulf %211, %213 : vector<8x32xf32>
    %217 = arith.addf %215, %216 : vector<8x32xf32>
    %218 = math.tanh %217 : vector<8x32xf32>
    %219 = arith.mulf %214, %218 : vector<8x32xf32>
    %220 = vector.extract_strided_slice %219 {offsets = [0, 0], sizes = [2, 32], strides = [1, 1]} : vector<8x32xf32> to vector<2x32xf32>
    %221 = vector.shape_cast %220 : vector<2x32xf32> to vector<2x1x32xf32>
    %222 = arith.truncf %221 : vector<2x1x32xf32> to vector<2x1x32xbf16>
    %c0_68 = arith.constant 0 : index
    %c7_69 = arith.constant 7 : index
    %c0_70 = arith.constant 0 : index
    %223 = vector.load %arg20[%c0_68, %c7_69, %c0_70] : memref<2x8x32xbf16, #tpu.memory_space<vmem>>, vector<2x1x32xbf16>
    tpu.vector_store %arg20[%c0_68, %c7_69, %c0_70], %222 {strides = array<i32>} : memref<2x8x32xbf16, #tpu.memory_space<vmem>>, vector<2x1x32xbf16>,
    %224 = vector.extract_strided_slice %219 {offsets = [0, 0], sizes = [2, 32], strides = [1, 1]} : vector<8x32xf32> to vector<2x32xf32>
    %225 = vector.extract_strided_slice %219 {offsets = [2, 0], sizes = [2, 32], strides = [1, 1]} : vector<8x32xf32> to vector<2x32xf32>
    %226 = vector.extract_strided_slice %219 {offsets = [4, 0], sizes = [2, 32], strides = [1, 1]} : vector<8x32xf32> to vector<2x32xf32>
    %227 = vector.extract_strided_slice %219 {offsets = [6, 0], sizes = [2, 32], strides = [1, 1]} : vector<8x32xf32> to vector<2x32xf32>
    %228 = arith.truncf %224 : vector<2x32xf32> to vector<2x32xbf16>
    %c0_71 = arith.constant 0 : index
    %c0_72 = arith.constant 0 : index
    %c0_73 = arith.constant 0 : index
    %229 = vector.load %arg20[%c0_71, %c0_72, %c0_73] : memref<2x8x32xbf16, #tpu.memory_space<vmem>>, vector<2x8x32xbf16>
    %c0_74 = arith.constant 0 : index
    %c0_75 = arith.constant 0 : index
    %c0_76 = arith.constant 0 : index
    %230 = vector.load %arg3[%c0_74, %c0_75, %c0_76] : memref<2x6x128xf32, #tpu.memory_space<vmem>>, vector<2x6x128xf32>
    %231 = vector.shape_cast %230 : vector<2x6x128xf32> to vector<12x128xf32>
    %232 = arith.truncf %231 : vector<12x128xf32> to vector<12x128xbf16>
    %c0_77 = arith.constant 0 : index
    %c0_78 = arith.constant 0 : index
    %233 = vector.load %arg5[%c0_77, %c0_78] : memref<128x32xbf16, #tpu.memory_space<vmem>>, vector<128x32xbf16>
    %cst_79 = arith.constant dense<0.000000e+00> : vector<12x32xf32>
    %234 = tpu.matmul %232, %233, %cst_79 {dimension_numbers = #tpu.dot_dimension_numbers<[1], [0], [0], [1], [0, 0, 1, 1], [], []>} : vector<12x128xbf16>, vector<128x32xbf16>, vector<12x32xf32> -> vector<12x32xf32>
    %c0_80 = arith.constant 0 : index
    %c0_81 = arith.constant 0 : index
    %235 = vector.load %arg6[%c0_80, %c0_81] : memref<1x32xf32, #tpu.memory_space<vmem>>, vector<1x32xf32>
    %236 = vector.broadcast %235 : vector<1x32xf32> to vector<12x32xf32>
    %237 = arith.addf %234, %236 : vector<12x32xf32>
    %cst_82 = arith.constant 0.000000e+00 : f32
    %238 = vector.broadcast %cst_82 : f32 to vector<12x32xf32>
    %239 = arith.cmpf ogt, %237, %238 : vector<12x32xf32>
    %cst_83 = arith.constant 0.000000e+00 : f32
    %240 = vector.broadcast %cst_83 : f32 to vector<12x32xf32>
    %241 = arith.minimumf %237, %240 : vector<12x32xf32>
    %242 = math.exp %241 : vector<12x32xf32>
    %cst_84 = arith.constant 1.000000e+00 : f32
    %243 = vector.broadcast %cst_84 : f32 to vector<12x32xf32>
    %244 = arith.subf %242, %243 : vector<12x32xf32>
    %245 = arith.select %239, %237, %244 : vector<12x32xi1>, vector<12x32xf32>
    %246 = arith.truncf %245 : vector<12x32xf32> to vector<12x32xbf16>
    %247 = vector.shape_cast %246 : vector<12x32xbf16> to vector<2x6x32xbf16>
    %c0_85 = arith.constant 0 : index
    %c0_86 = arith.constant 0 : index
    %c0_87 = arith.constant 0 : index
    %248 = vector.load %arg4[%c0_85, %c0_86, %c0_87] : memref<2x6x32xf32, #tpu.memory_space<vmem>>, vector<2x6x32xf32>
    %249 = vector.shape_cast %248 : vector<2x6x32xf32> to vector<12x32xf32>
    %250 = arith.truncf %249 : vector<12x32xf32> to vector<12x32xbf16>
    %c0_88 = arith.constant 0 : index
    %c0_89 = arith.constant 0 : index
    %251 = vector.load %arg7[%c0_88, %c0_89] : memref<32x32xbf16, #tpu.memory_space<vmem>>, vector<32x32xbf16>
    %cst_90 = arith.constant dense<0.000000e+00> : vector<12x32xf32>
    %252 = tpu.matmul %250, %251, %cst_90 {dimension_numbers = #tpu.dot_dimension_numbers<[1], [0], [0], [1], [0, 0, 1, 1], [], []>} : vector<12x32xbf16>, vector<32x32xbf16>, vector<12x32xf32> -> vector<12x32xf32>
    %c0_91 = arith.constant 0 : index
    %c0_92 = arith.constant 0 : index
    %253 = vector.load %arg8[%c0_91, %c0_92] : memref<1x32xf32, #tpu.memory_space<vmem>>, vector<1x32xf32>
    %254 = vector.broadcast %253 : vector<1x32xf32> to vector<12x32xf32>
    %255 = arith.addf %252, %254 : vector<12x32xf32>
    %cst_93 = arith.constant 0.000000e+00 : f32
    %256 = vector.broadcast %cst_93 : f32 to vector<12x32xf32>
    %257 = arith.cmpf ogt, %255, %256 : vector<12x32xf32>
    %cst_94 = arith.constant 0.000000e+00 : f32
    %258 = vector.broadcast %cst_94 : f32 to vector<12x32xf32>
    %259 = arith.minimumf %255, %258 : vector<12x32xf32>
    %260 = math.exp %259 : vector<12x32xf32>
    %cst_95 = arith.constant 1.000000e+00 : f32
    %261 = vector.broadcast %cst_95 : f32 to vector<12x32xf32>
    %262 = arith.subf %260, %261 : vector<12x32xf32>
    %263 = arith.select %257, %255, %262 : vector<12x32xi1>, vector<12x32xf32>
    %264 = arith.truncf %263 : vector<12x32xf32> to vector<12x32xbf16>
    %265 = vector.shape_cast %264 : vector<12x32xbf16> to vector<2x6x32xbf16>
    %c0_96 = arith.constant 0 : index
    %c0_97 = arith.constant 0 : index
    %266 = vector.load %arg9[%c0_96, %c0_97] : memref<64x32xbf16, #tpu.memory_space<vmem>>, vector<64x32xbf16>
    %c0_98 = arith.constant 0 : index
    %c0_99 = arith.constant 0 : index
    %267 = vector.load %arg10[%c0_98, %c0_99] : memref<1x32xf32, #tpu.memory_space<vmem>>, vector<1x32xf32>
    %c0_100 = arith.constant 0 : index
    %c0_101 = arith.constant 0 : index
    %268 = vector.load %arg11[%c0_100, %c0_101] : memref<64x32xbf16, #tpu.memory_space<vmem>>, vector<64x32xbf16>
    %c0_102 = arith.constant 0 : index
    %c0_103 = arith.constant 0 : index
    %269 = vector.load %arg12[%c0_102, %c0_103] : memref<64x32xbf16, #tpu.memory_space<vmem>>, vector<64x32xbf16>
    %c0_104 = arith.constant 0 : index
    %c0_105 = arith.constant 0 : index
    %270 = vector.load %arg13[%c0_104, %c0_105] : memref<64x32xbf16, #tpu.memory_space<vmem>>, vector<64x32xbf16>
    %c0_106 = arith.constant 0 : index
    %c0_107 = arith.constant 0 : index
    %271 = vector.load %arg14[%c0_106, %c0_107] : memref<64x32xbf16, #tpu.memory_space<vmem>>, vector<64x32xbf16>
    %cst_108 = arith.constant 0.000000e+00 : f32
    %272 = vector.broadcast %cst_108 : f32 to vector<2x32xf32>
    %cst_109 = arith.constant 0.000000e+00 : f32
    %273 = vector.broadcast %cst_109 : f32 to vector<2x32xf32>
    %274 = arith.truncf %224 : vector<2x32xf32> to vector<2x32xbf16>
    %275 = tpu.concatenate %274, %228 in 1 : vector<2x32xbf16>, vector<2x32xbf16> -> vector<2x64xbf16>
    %cst_110 = arith.constant dense<0.000000e+00> : vector<2x32xf32>
    %276 = tpu.matmul %275, %266, %cst_110 {dimension_numbers = #tpu.dot_dimension_numbers<[1], [0], [0], [1], [0, 0, 1, 1], [], []>} : vector<2x64xbf16>, vector<64x32xbf16>, vector<2x32xf32> -> vector<2x32xf32>
    %277 = vector.broadcast %267 : vector<1x32xf32> to vector<2x32xf32>
    %278 = arith.mulf %276, %277 : vector<2x32xf32>
    %279 = vector.broadcast %1 : f32 to vector<2x32xf32>
    %280 = arith.mulf %278, %279 : vector<2x32xf32>
    %281 = vector.shape_cast %280 : vector<2x32xf32> to vector<2x1x32xf32>
    %282 = arith.truncf %281 : vector<2x1x32xf32> to vector<2x1x32xbf16>
    "tpu.trace_start"() <{level = 10 : i32, message = "bqh,bkh->bqk"}> : () -> ()
    %cst_111 = arith.constant dense<0.000000e+00> : vector<2x1x8xf32>
    %283 = tpu.matmul %282, %229, %cst_111 {dimension_numbers = #tpu.dot_dimension_numbers<[2], [2], [1], [1], [0, 0, 0, 1, 1, 1], [0], [0]>} : vector<2x1x32xbf16>, vector<2x8x32xbf16>, vector<2x1x8xf32> -> vector<2x1x8xf32>
    "tpu.trace_stop"() : () -> ()
    %cst_112 = arith.constant dense<0xFF800000> : vector<2x1xf32>
    %284 = vector.multi_reduction <maximumf>, %283, %cst_112 [2] : vector<2x1x8xf32> to vector<2x1xf32>
    %285 = vector.shape_cast %284 : vector<2x1xf32> to vector<2x1x1xf32>
    %286 = vector.broadcast %285 : vector<2x1x1xf32> to vector<2x1x8xf32>
    %287 = arith.subf %283, %286 : vector<2x1x8xf32>
    %288 = math.exp %287 : vector<2x1x8xf32>
    %cst_113 = arith.constant dense<0.000000e+00> : vector<2x1xf32>
    %289 = vector.multi_reduction <add>, %288, %cst_113 [2] : vector<2x1x8xf32> to vector<2x1xf32>
    %290 = vector.shape_cast %289 : vector<2x1xf32> to vector<2x1x1xf32>
    %291 = tpu.reciprocal %290 {approx = true} : vector<2x1x1xf32> -> vector<2x1x1xf32>
    %292 = vector.broadcast %291 : vector<2x1x1xf32> to vector<2x1x8xf32>
    %293 = arith.mulf %288, %292 : vector<2x1x8xf32>
    %294 = arith.truncf %293 : vector<2x1x8xf32> to vector<2x1x8xbf16>
    "tpu.trace_start"() <{level = 10 : i32, message = "bqk,bkh->bqh"}> : () -> ()
    %cst_114 = arith.constant dense<0.000000e+00> : vector<2x1x32xf32>
    %295 = tpu.matmul %294, %229, %cst_114 {dimension_numbers = #tpu.dot_dimension_numbers<[2], [1], [1], [2], [0, 0, 0, 1, 1, 2], [0], [0]>} : vector<2x1x8xbf16>, vector<2x8x32xbf16>, vector<2x1x32xf32> -> vector<2x1x32xf32>
    "tpu.trace_stop"() : () -> ()
    %296 = vector.shape_cast %295 : vector<2x1x32xf32> to vector<2x32xf32>
    %297 = arith.truncf %296 : vector<2x32xf32> to vector<2x32xbf16>
    %298 = arith.truncf %272 : vector<2x32xf32> to vector<2x32xbf16>
    %299 = tpu.concatenate %298, %297 in 1 : vector<2x32xbf16>, vector<2x32xbf16> -> vector<2x64xbf16>
    %cst_115 = arith.constant dense<0.000000e+00> : vector<2x32xf32>
    %300 = tpu.matmul %299, %268, %cst_115 {dimension_numbers = #tpu.dot_dimension_numbers<[1], [0], [0], [1], [0, 0, 1, 1], [], []>} : vector<2x64xbf16>, vector<64x32xbf16>, vector<2x32xf32> -> vector<2x32xf32>
    %301 = vector.broadcast %1 : f32 to vector<2x32xf32>
    %302 = arith.mulf %300, %301 : vector<2x32xf32>
    %303 = vector.shape_cast %302 : vector<2x32xf32> to vector<2x1x32xf32>
    %304 = arith.truncf %303 : vector<2x1x32xf32> to vector<2x1x32xbf16>
    "tpu.trace_start"() <{level = 10 : i32, message = "bqh,bkh->bqk"}> : () -> ()
    %cst_116 = arith.constant dense<0.000000e+00> : vector<2x1x6xf32>
    %305 = tpu.matmul %304, %247, %cst_116 {dimension_numbers = #tpu.dot_dimension_numbers<[2], [2], [1], [1], [0, 0, 0, 1, 1, 1], [0], [0]>} : vector<2x1x32xbf16>, vector<2x6x32xbf16>, vector<2x1x6xf32> -> vector<2x1x6xf32>
    "tpu.trace_stop"() : () -> ()
    %cst_117 = arith.constant dense<0xFF800000> : vector<2x1xf32>
    %306 = vector.multi_reduction <maximumf>, %305, %cst_117 [2] : vector<2x1x6xf32> to vector<2x1xf32>
    %307 = vector.shape_cast %306 : vector<2x1xf32> to vector<2x1x1xf32>
    %308 = vector.broadcast %307 : vector<2x1x1xf32> to vector<2x1x6xf32>
    %309 = arith.subf %305, %308 : vector<2x1x6xf32>
    %310 = math.exp %309 : vector<2x1x6xf32>
    %cst_118 = arith.constant dense<0.000000e+00> : vector<2x1xf32>
    %311 = vector.multi_reduction <add>, %310, %cst_118 [2] : vector<2x1x6xf32> to vector<2x1xf32>
    %312 = vector.shape_cast %311 : vector<2x1xf32> to vector<2x1x1xf32>
    %313 = tpu.reciprocal %312 {approx = true} : vector<2x1x1xf32> -> vector<2x1x1xf32>
    %314 = vector.broadcast %313 : vector<2x1x1xf32> to vector<2x1x6xf32>
    %315 = arith.mulf %310, %314 : vector<2x1x6xf32>
    %316 = arith.truncf %315 : vector<2x1x6xf32> to vector<2x1x6xbf16>
    "tpu.trace_start"() <{level = 10 : i32, message = "bqk,bkh->bqh"}> : () -> ()
    %cst_119 = arith.constant dense<0.000000e+00> : vector<2x1x32xf32>
    %317 = tpu.matmul %316, %247, %cst_119 {dimension_numbers = #tpu.dot_dimension_numbers<[2], [1], [1], [2], [0, 0, 0, 1, 1, 2], [0], [0]>} : vector<2x1x6xbf16>, vector<2x6x32xbf16>, vector<2x1x32xf32> -> vector<2x1x32xf32>
    "tpu.trace_stop"() : () -> ()
    %318 = vector.shape_cast %317 : vector<2x1x32xf32> to vector<2x32xf32>
    %319 = arith.truncf %318 : vector<2x32xf32> to vector<2x32xbf16>
    %320 = arith.truncf %272 : vector<2x32xf32> to vector<2x32xbf16>
    %321 = tpu.concatenate %319, %320 in 1 : vector<2x32xbf16>, vector<2x32xbf16> -> vector<2x64xbf16>
    %cst_120 = arith.constant dense<0.000000e+00> : vector<2x32xf32>
    %322 = tpu.matmul %321, %269, %cst_120 {dimension_numbers = #tpu.dot_dimension_numbers<[1], [0], [0], [1], [0, 0, 1, 1], [], []>} : vector<2x64xbf16>, vector<64x32xbf16>, vector<2x32xf32> -> vector<2x32xf32>
    %323 = arith.truncf %273 : vector<2x32xf32> to vector<2x32xbf16>
    %324 = tpu.concatenate %323, %297 in 1 : vector<2x32xbf16>, vector<2x32xbf16> -> vector<2x64xbf16>
    %cst_121 = arith.constant dense<0.000000e+00> : vector<2x32xf32>
    %325 = tpu.matmul %324, %270, %cst_121 {dimension_numbers = #tpu.dot_dimension_numbers<[1], [0], [0], [1], [0, 0, 1, 1], [], []>} : vector<2x64xbf16>, vector<64x32xbf16>, vector<2x32xf32> -> vector<2x32xf32>
    %326 = vector.broadcast %1 : f32 to vector<2x32xf32>
    %327 = arith.mulf %325, %326 : vector<2x32xf32>
    %328 = vector.shape_cast %327 : vector<2x32xf32> to vector<2x1x32xf32>
    %329 = arith.truncf %328 : vector<2x1x32xf32> to vector<2x1x32xbf16>
    "tpu.trace_start"() <{level = 10 : i32, message = "bqh,bkh->bqk"}> : () -> ()
    %cst_122 = arith.constant dense<0.000000e+00> : vector<2x1x6xf32>
    %330 = tpu.matmul %329, %265, %cst_122 {dimension_numbers = #tpu.dot_dimension_numbers<[2], [2], [1], [1], [0, 0, 0, 1, 1, 1], [0], [0]>} : vector<2x1x32xbf16>, vector<2x6x32xbf16>, vector<2x1x6xf32> -> vector<2x1x6xf32>
    "tpu.trace_stop"() : () -> ()
    %cst_123 = arith.constant dense<0xFF800000> : vector<2x1xf32>
    %331 = vector.multi_reduction <maximumf>, %330, %cst_123 [2] : vector<2x1x6xf32> to vector<2x1xf32>
    %332 = vector.shape_cast %331 : vector<2x1xf32> to vector<2x1x1xf32>
    %333 = vector.broadcast %332 : vector<2x1x1xf32> to vector<2x1x6xf32>
    %334 = arith.subf %330, %333 : vector<2x1x6xf32>
    %335 = math.exp %334 : vector<2x1x6xf32>
    %cst_124 = arith.constant dense<0.000000e+00> : vector<2x1xf32>
    %336 = vector.multi_reduction <add>, %335, %cst_124 [2] : vector<2x1x6xf32> to vector<2x1xf32>
    %337 = vector.shape_cast %336 : vector<2x1xf32> to vector<2x1x1xf32>
    %338 = tpu.reciprocal %337 {approx = true} : vector<2x1x1xf32> -> vector<2x1x1xf32>
    %339 = vector.broadcast %338 : vector<2x1x1xf32> to vector<2x1x6xf32>
    %340 = arith.mulf %335, %339 : vector<2x1x6xf32>
    %341 = arith.truncf %340 : vector<2x1x6xf32> to vector<2x1x6xbf16>
    "tpu.trace_start"() <{level = 10 : i32, message = "bqk,bkh->bqh"}> : () -> ()
    %cst_125 = arith.constant dense<0.000000e+00> : vector<2x1x32xf32>
    %342 = tpu.matmul %341, %265, %cst_125 {dimension_numbers = #tpu.dot_dimension_numbers<[2], [1], [1], [2], [0, 0, 0, 1, 1, 2], [0], [0]>} : vector<2x1x6xbf16>, vector<2x6x32xbf16>, vector<2x1x32xf32> -> vector<2x1x32xf32>
    "tpu.trace_stop"() : () -> ()
    %343 = vector.shape_cast %342 : vector<2x1x32xf32> to vector<2x32xf32>
    %344 = arith.truncf %343 : vector<2x32xf32> to vector<2x32xbf16>
    %345 = arith.truncf %273 : vector<2x32xf32> to vector<2x32xbf16>
    %346 = tpu.concatenate %344, %345 in 1 : vector<2x32xbf16>, vector<2x32xbf16> -> vector<2x64xbf16>
    %cst_126 = arith.constant dense<0.000000e+00> : vector<2x32xf32>
    %347 = tpu.matmul %346, %271, %cst_126 {dimension_numbers = #tpu.dot_dimension_numbers<[1], [0], [0], [1], [0, 0, 1, 1], [], []>} : vector<2x64xbf16>, vector<64x32xbf16>, vector<2x32xf32> -> vector<2x32xf32>
    %348 = arith.truncf %296 : vector<2x32xf32> to vector<2x32xbf16>
    %349 = tpu.concatenate %348, %228 in 1 : vector<2x32xbf16>, vector<2x32xbf16> -> vector<2x64xbf16>
    %cst_127 = arith.constant dense<0.000000e+00> : vector<2x32xf32>
    %350 = tpu.matmul %349, %266, %cst_127 {dimension_numbers = #tpu.dot_dimension_numbers<[1], [0], [0], [1], [0, 0, 1, 1], [], []>} : vector<2x64xbf16>, vector<64x32xbf16>, vector<2x32xf32> -> vector<2x32xf32>
    %351 = vector.broadcast %267 : vector<1x32xf32> to vector<2x32xf32>
    %352 = arith.mulf %350, %351 : vector<2x32xf32>
    %353 = vector.broadcast %1 : f32 to vector<2x32xf32>
    %354 = arith.mulf %352, %353 : vector<2x32xf32>
    %355 = vector.shape_cast %354 : vector<2x32xf32> to vector<2x1x32xf32>
    %356 = arith.truncf %355 : vector<2x1x32xf32> to vector<2x1x32xbf16>
    "tpu.trace_start"() <{level = 10 : i32, message = "bqh,bkh->bqk"}> : () -> ()
    %cst_128 = arith.constant dense<0.000000e+00> : vector<2x1x8xf32>
    %357 = tpu.matmul %356, %229, %cst_128 {dimension_numbers = #tpu.dot_dimension_numbers<[2], [2], [1], [1], [0, 0, 0, 1, 1, 1], [0], [0]>} : vector<2x1x32xbf16>, vector<2x8x32xbf16>, vector<2x1x8xf32> -> vector<2x1x8xf32>
    "tpu.trace_stop"() : () -> ()
    %cst_129 = arith.constant dense<0xFF800000> : vector<2x1xf32>
    %358 = vector.multi_reduction <maximumf>, %357, %cst_129 [2] : vector<2x1x8xf32> to vector<2x1xf32>
    %359 = vector.shape_cast %358 : vector<2x1xf32> to vector<2x1x1xf32>
    %360 = vector.broadcast %359 : vector<2x1x1xf32> to vector<2x1x8xf32>
    %361 = arith.subf %357, %360 : vector<2x1x8xf32>
    %362 = math.exp %361 : vector<2x1x8xf32>
    %cst_130 = arith.constant dense<0.000000e+00> : vector<2x1xf32>
    %363 = vector.multi_reduction <add>, %362, %cst_130 [2] : vector<2x1x8xf32> to vector<2x1xf32>
    %364 = vector.shape_cast %363 : vector<2x1xf32> to vector<2x1x1xf32>
    %365 = tpu.reciprocal %364 {approx = true} : vector<2x1x1xf32> -> vector<2x1x1xf32>
    %366 = vector.broadcast %365 : vector<2x1x1xf32> to vector<2x1x8xf32>
    %367 = arith.mulf %362, %366 : vector<2x1x8xf32>
    %368 = arith.truncf %367 : vector<2x1x8xf32> to vector<2x1x8xbf16>
    "tpu.trace_start"() <{level = 10 : i32, message = "bqk,bkh->bqh"}> : () -> ()
    %cst_131 = arith.constant dense<0.000000e+00> : vector<2x1x32xf32>
    %369 = tpu.matmul %368, %229, %cst_131 {dimension_numbers = #tpu.dot_dimension_numbers<[2], [1], [1], [2], [0, 0, 0, 1, 1, 2], [0], [0]>} : vector<2x1x8xbf16>, vector<2x8x32xbf16>, vector<2x1x32xf32> -> vector<2x1x32xf32>
    "tpu.trace_stop"() : () -> ()
    %370 = vector.shape_cast %369 : vector<2x1x32xf32> to vector<2x32xf32>
    %371 = arith.truncf %370 : vector<2x32xf32> to vector<2x32xbf16>
    %372 = arith.truncf %322 : vector<2x32xf32> to vector<2x32xbf16>
    %373 = tpu.concatenate %372, %371 in 1 : vector<2x32xbf16>, vector<2x32xbf16> -> vector<2x64xbf16>
    %cst_132 = arith.constant dense<0.000000e+00> : vector<2x32xf32>
    %374 = tpu.matmul %373, %268, %cst_132 {dimension_numbers = #tpu.dot_dimension_numbers<[1], [0], [0], [1], [0, 0, 1, 1], [], []>} : vector<2x64xbf16>, vector<64x32xbf16>, vector<2x32xf32> -> vector<2x32xf32>
    %375 = vector.broadcast %1 : f32 to vector<2x32xf32>
    %376 = arith.mulf %374, %375 : vector<2x32xf32>
    %377 = vector.shape_cast %376 : vector<2x32xf32> to vector<2x1x32xf32>
    %378 = arith.truncf %377 : vector<2x1x32xf32> to vector<2x1x32xbf16>
    "tpu.trace_start"() <{level = 10 : i32, message = "bqh,bkh->bqk"}> : () -> ()
    %cst_133 = arith.constant dense<0.000000e+00> : vector<2x1x6xf32>
    %379 = tpu.matmul %378, %247, %cst_133 {dimension_numbers = #tpu.dot_dimension_numbers<[2], [2], [1], [1], [0, 0, 0, 1, 1, 1], [0], [0]>} : vector<2x1x32xbf16>, vector<2x6x32xbf16>, vector<2x1x6xf32> -> vector<2x1x6xf32>
    "tpu.trace_stop"() : () -> ()
    %cst_134 = arith.constant dense<0xFF800000> : vector<2x1xf32>
    %380 = vector.multi_reduction <maximumf>, %379, %cst_134 [2] : vector<2x1x6xf32> to vector<2x1xf32>
    %381 = vector.shape_cast %380 : vector<2x1xf32> to vector<2x1x1xf32>
    %382 = vector.broadcast %381 : vector<2x1x1xf32> to vector<2x1x6xf32>
    %383 = arith.subf %379, %382 : vector<2x1x6xf32>
    %384 = math.exp %383 : vector<2x1x6xf32>
    %cst_135 = arith.constant dense<0.000000e+00> : vector<2x1xf32>
    %385 = vector.multi_reduction <add>, %384, %cst_135 [2] : vector<2x1x6xf32> to vector<2x1xf32>
    %386 = vector.shape_cast %385 : vector<2x1xf32> to vector<2x1x1xf32>
    %387 = tpu.reciprocal %386 {approx = true} : vector<2x1x1xf32> -> vector<2x1x1xf32>
    %388 = vector.broadcast %387 : vector<2x1x1xf32> to vector<2x1x6xf32>
    %389 = arith.mulf %384, %388 : vector<2x1x6xf32>
    %390 = arith.truncf %389 : vector<2x1x6xf32> to vector<2x1x6xbf16>
    "tpu.trace_start"() <{level = 10 : i32, message = "bqk,bkh->bqh"}> : () -> ()
    %cst_136 = arith.constant dense<0.000000e+00> : vector<2x1x32xf32>
    %391 = tpu.matmul %390, %247, %cst_136 {dimension_numbers = #tpu.dot_dimension_numbers<[2], [1], [1], [2], [0, 0, 0, 1, 1, 2], [0], [0]>} : vector<2x1x6xbf16>, vector<2x6x32xbf16>, vector<2x1x32xf32> -> vector<2x1x32xf32>
    "tpu.trace_stop"() : () -> ()
    %392 = vector.shape_cast %391 : vector<2x1x32xf32> to vector<2x32xf32>
    %393 = arith.truncf %392 : vector<2x32xf32> to vector<2x32xbf16>
    %394 = arith.truncf %322 : vector<2x32xf32> to vector<2x32xbf16>
    %395 = tpu.concatenate %393, %394 in 1 : vector<2x32xbf16>, vector<2x32xbf16> -> vector<2x64xbf16>
    %cst_137 = arith.constant dense<0.000000e+00> : vector<2x32xf32>
    %396 = tpu.matmul %395, %269, %cst_137 {dimension_numbers = #tpu.dot_dimension_numbers<[1], [0], [0], [1], [0, 0, 1, 1], [], []>} : vector<2x64xbf16>, vector<64x32xbf16>, vector<2x32xf32> -> vector<2x32xf32>
    %397 = arith.truncf %347 : vector<2x32xf32> to vector<2x32xbf16>
    %398 = tpu.concatenate %397, %371 in 1 : vector<2x32xbf16>, vector<2x32xbf16> -> vector<2x64xbf16>
    %cst_138 = arith.constant dense<0.000000e+00> : vector<2x32xf32>
    %399 = tpu.matmul %398, %270, %cst_138 {dimension_numbers = #tpu.dot_dimension_numbers<[1], [0], [0], [1], [0, 0, 1, 1], [], []>} : vector<2x64xbf16>, vector<64x32xbf16>, vector<2x32xf32> -> vector<2x32xf32>
    %400 = vector.broadcast %1 : f32 to vector<2x32xf32>
    %401 = arith.mulf %399, %400 : vector<2x32xf32>
    %402 = vector.shape_cast %401 : vector<2x32xf32> to vector<2x1x32xf32>
    %403 = arith.truncf %402 : vector<2x1x32xf32> to vector<2x1x32xbf16>
    "tpu.trace_start"() <{level = 10 : i32, message = "bqh,bkh->bqk"}> : () -> ()
    %cst_139 = arith.constant dense<0.000000e+00> : vector<2x1x6xf32>
    %404 = tpu.matmul %403, %265, %cst_139 {dimension_numbers = #tpu.dot_dimension_numbers<[2], [2], [1], [1], [0, 0, 0, 1, 1, 1], [0], [0]>} : vector<2x1x32xbf16>, vector<2x6x32xbf16>, vector<2x1x6xf32> -> vector<2x1x6xf32>
    "tpu.trace_stop"() : () -> ()
    %cst_140 = arith.constant dense<0xFF800000> : vector<2x1xf32>
    %405 = vector.multi_reduction <maximumf>, %404, %cst_140 [2] : vector<2x1x6xf32> to vector<2x1xf32>
    %406 = vector.shape_cast %405 : vector<2x1xf32> to vector<2x1x1xf32>
    %407 = vector.broadcast %406 : vector<2x1x1xf32> to vector<2x1x6xf32>
    %408 = arith.subf %404, %407 : vector<2x1x6xf32>
    %409 = math.exp %408 : vector<2x1x6xf32>
    %cst_141 = arith.constant dense<0.000000e+00> : vector<2x1xf32>
    %410 = vector.multi_reduction <add>, %409, %cst_141 [2] : vector<2x1x6xf32> to vector<2x1xf32>
    %411 = vector.shape_cast %410 : vector<2x1xf32> to vector<2x1x1xf32>
    %412 = tpu.reciprocal %411 {approx = true} : vector<2x1x1xf32> -> vector<2x1x1xf32>
    %413 = vector.broadcast %412 : vector<2x1x1xf32> to vector<2x1x6xf32>
    %414 = arith.mulf %409, %413 : vector<2x1x6xf32>
    %415 = arith.truncf %414 : vector<2x1x6xf32> to vector<2x1x6xbf16>
    "tpu.trace_start"() <{level = 10 : i32, message = "bqk,bkh->bqh"}> : () -> ()
    %cst_142 = arith.constant dense<0.000000e+00> : vector<2x1x32xf32>
    %416 = tpu.matmul %415, %265, %cst_142 {dimension_numbers = #tpu.dot_dimension_numbers<[2], [1], [1], [2], [0, 0, 0, 1, 1, 2], [0], [0]>} : vector<2x1x6xbf16>, vector<2x6x32xbf16>, vector<2x1x32xf32> -> vector<2x1x32xf32>
    "tpu.trace_stop"() : () -> ()
    %417 = vector.shape_cast %416 : vector<2x1x32xf32> to vector<2x32xf32>
    %418 = arith.truncf %417 : vector<2x32xf32> to vector<2x32xbf16>
    %419 = arith.truncf %347 : vector<2x32xf32> to vector<2x32xbf16>
    %420 = tpu.concatenate %418, %419 in 1 : vector<2x32xbf16>, vector<2x32xbf16> -> vector<2x64xbf16>
    %cst_143 = arith.constant dense<0.000000e+00> : vector<2x32xf32>
    %421 = tpu.matmul %420, %271, %cst_143 {dimension_numbers = #tpu.dot_dimension_numbers<[1], [0], [0], [1], [0, 0, 1, 1], [], []>} : vector<2x64xbf16>, vector<64x32xbf16>, vector<2x32xf32> -> vector<2x32xf32>
    %422 = arith.truncf %370 : vector<2x32xf32> to vector<2x32xbf16>
    %423 = tpu.concatenate %422, %228 in 1 : vector<2x32xbf16>, vector<2x32xbf16> -> vector<2x64xbf16>
    %cst_144 = arith.constant dense<0.000000e+00> : vector<2x32xf32>
    %424 = tpu.matmul %423, %266, %cst_144 {dimension_numbers = #tpu.dot_dimension_numbers<[1], [0], [0], [1], [0, 0, 1, 1], [], []>} : vector<2x64xbf16>, vector<64x32xbf16>, vector<2x32xf32> -> vector<2x32xf32>
    %425 = vector.broadcast %267 : vector<1x32xf32> to vector<2x32xf32>
    %426 = arith.mulf %424, %425 : vector<2x32xf32>
    %427 = vector.broadcast %1 : f32 to vector<2x32xf32>
    %428 = arith.mulf %426, %427 : vector<2x32xf32>
    %429 = vector.shape_cast %428 : vector<2x32xf32> to vector<2x1x32xf32>
    %430 = arith.truncf %429 : vector<2x1x32xf32> to vector<2x1x32xbf16>
    "tpu.trace_start"() <{level = 10 : i32, message = "bqh,bkh->bqk"}> : () -> ()
    %cst_145 = arith.constant dense<0.000000e+00> : vector<2x1x8xf32>
    %431 = tpu.matmul %430, %229, %cst_145 {dimension_numbers = #tpu.dot_dimension_numbers<[2], [2], [1], [1], [0, 0, 0, 1, 1, 1], [0], [0]>} : vector<2x1x32xbf16>, vector<2x8x32xbf16>, vector<2x1x8xf32> -> vector<2x1x8xf32>
    "tpu.trace_stop"() : () -> ()
    %cst_146 = arith.constant dense<0xFF800000> : vector<2x1xf32>
    %432 = vector.multi_reduction <maximumf>, %431, %cst_146 [2] : vector<2x1x8xf32> to vector<2x1xf32>
    %433 = vector.shape_cast %432 : vector<2x1xf32> to vector<2x1x1xf32>
    %434 = vector.broadcast %433 : vector<2x1x1xf32> to vector<2x1x8xf32>
    %435 = arith.subf %431, %434 : vector<2x1x8xf32>
    %436 = math.exp %435 : vector<2x1x8xf32>
    %cst_147 = arith.constant dense<0.000000e+00> : vector<2x1xf32>
    %437 = vector.multi_reduction <add>, %436, %cst_147 [2] : vector<2x1x8xf32> to vector<2x1xf32>
    %438 = vector.shape_cast %437 : vector<2x1xf32> to vector<2x1x1xf32>
    %439 = tpu.reciprocal %438 {approx = true} : vector<2x1x1xf32> -> vector<2x1x1xf32>
    %440 = vector.broadcast %439 : vector<2x1x1xf32> to vector<2x1x8xf32>
    %441 = arith.mulf %436, %440 : vector<2x1x8xf32>
    %442 = arith.truncf %441 : vector<2x1x8xf32> to vector<2x1x8xbf16>
    "tpu.trace_start"() <{level = 10 : i32, message = "bqk,bkh->bqh"}> : () -> ()
    %cst_148 = arith.constant dense<0.000000e+00> : vector<2x1x32xf32>
    %443 = tpu.matmul %442, %229, %cst_148 {dimension_numbers = #tpu.dot_dimension_numbers<[2], [1], [1], [2], [0, 0, 0, 1, 1, 2], [0], [0]>} : vector<2x1x8xbf16>, vector<2x8x32xbf16>, vector<2x1x32xf32> -> vector<2x1x32xf32>
    "tpu.trace_stop"() : () -> ()
    %444 = vector.shape_cast %443 : vector<2x1x32xf32> to vector<2x32xf32>
    %445 = arith.truncf %444 : vector<2x32xf32> to vector<2x32xbf16>
    %446 = arith.truncf %396 : vector<2x32xf32> to vector<2x32xbf16>
    %447 = tpu.concatenate %446, %445 in 1 : vector<2x32xbf16>, vector<2x32xbf16> -> vector<2x64xbf16>
    %cst_149 = arith.constant dense<0.000000e+00> : vector<2x32xf32>
    %448 = tpu.matmul %447, %268, %cst_149 {dimension_numbers = #tpu.dot_dimension_numbers<[1], [0], [0], [1], [0, 0, 1, 1], [], []>} : vector<2x64xbf16>, vector<64x32xbf16>, vector<2x32xf32> -> vector<2x32xf32>
    %449 = vector.broadcast %1 : f32 to vector<2x32xf32>
    %450 = arith.mulf %448, %449 : vector<2x32xf32>
    %451 = vector.shape_cast %450 : vector<2x32xf32> to vector<2x1x32xf32>
    %452 = arith.truncf %451 : vector<2x1x32xf32> to vector<2x1x32xbf16>
    "tpu.trace_start"() <{level = 10 : i32, message = "bqh,bkh->bqk"}> : () -> ()
    %cst_150 = arith.constant dense<0.000000e+00> : vector<2x1x6xf32>
    %453 = tpu.matmul %452, %247, %cst_150 {dimension_numbers = #tpu.dot_dimension_numbers<[2], [2], [1], [1], [0, 0, 0, 1, 1, 1], [0], [0]>} : vector<2x1x32xbf16>, vector<2x6x32xbf16>, vector<2x1x6xf32> -> vector<2x1x6xf32>
    "tpu.trace_stop"() : () -> ()
    %cst_151 = arith.constant dense<0xFF800000> : vector<2x1xf32>
    %454 = vector.multi_reduction <maximumf>, %453, %cst_151 [2] : vector<2x1x6xf32> to vector<2x1xf32>
    %455 = vector.shape_cast %454 : vector<2x1xf32> to vector<2x1x1xf32>
    %456 = vector.broadcast %455 : vector<2x1x1xf32> to vector<2x1x6xf32>
    %457 = arith.subf %453, %456 : vector<2x1x6xf32>
    %458 = math.exp %457 : vector<2x1x6xf32>
    %cst_152 = arith.constant dense<0.000000e+00> : vector<2x1xf32>
    %459 = vector.multi_reduction <add>, %458, %cst_152 [2] : vector<2x1x6xf32> to vector<2x1xf32>
    %460 = vector.shape_cast %459 : vector<2x1xf32> to vector<2x1x1xf32>
    %461 = tpu.reciprocal %460 {approx = true} : vector<2x1x1xf32> -> vector<2x1x1xf32>
    %462 = vector.broadcast %461 : vector<2x1x1xf32> to vector<2x1x6xf32>
    %463 = arith.mulf %458, %462 : vector<2x1x6xf32>
    %464 = arith.truncf %463 : vector<2x1x6xf32> to vector<2x1x6xbf16>
    "tpu.trace_start"() <{level = 10 : i32, message = "bqk,bkh->bqh"}> : () -> ()
    %cst_153 = arith.constant dense<0.000000e+00> : vector<2x1x32xf32>
    %465 = tpu.matmul %464, %247, %cst_153 {dimension_numbers = #tpu.dot_dimension_numbers<[2], [1], [1], [2], [0, 0, 0, 1, 1, 2], [0], [0]>} : vector<2x1x6xbf16>, vector<2x6x32xbf16>, vector<2x1x32xf32> -> vector<2x1x32xf32>
    "tpu.trace_stop"() : () -> ()
    %466 = vector.shape_cast %465 : vector<2x1x32xf32> to vector<2x32xf32>
    %467 = arith.truncf %466 : vector<2x32xf32> to vector<2x32xbf16>
    %468 = arith.truncf %396 : vector<2x32xf32> to vector<2x32xbf16>
    %469 = tpu.concatenate %467, %468 in 1 : vector<2x32xbf16>, vector<2x32xbf16> -> vector<2x64xbf16>
    %cst_154 = arith.constant dense<0.000000e+00> : vector<2x32xf32>
    %470 = tpu.matmul %469, %269, %cst_154 {dimension_numbers = #tpu.dot_dimension_numbers<[1], [0], [0], [1], [0, 0, 1, 1], [], []>} : vector<2x64xbf16>, vector<64x32xbf16>, vector<2x32xf32> -> vector<2x32xf32>
    %471 = arith.truncf %421 : vector<2x32xf32> to vector<2x32xbf16>
    %472 = tpu.concatenate %471, %445 in 1 : vector<2x32xbf16>, vector<2x32xbf16> -> vector<2x64xbf16>
    %cst_155 = arith.constant dense<0.000000e+00> : vector<2x32xf32>
    %473 = tpu.matmul %472, %270, %cst_155 {dimension_numbers = #tpu.dot_dimension_numbers<[1], [0], [0], [1], [0, 0, 1, 1], [], []>} : vector<2x64xbf16>, vector<64x32xbf16>, vector<2x32xf32> -> vector<2x32xf32>
    %474 = vector.broadcast %1 : f32 to vector<2x32xf32>
    %475 = arith.mulf %473, %474 : vector<2x32xf32>
    %476 = vector.shape_cast %475 : vector<2x32xf32> to vector<2x1x32xf32>
    %477 = arith.truncf %476 : vector<2x1x32xf32> to vector<2x1x32xbf16>
    "tpu.trace_start"() <{level = 10 : i32, message = "bqh,bkh->bqk"}> : () -> ()
    %cst_156 = arith.constant dense<0.000000e+00> : vector<2x1x6xf32>
    %478 = tpu.matmul %477, %265, %cst_156 {dimension_numbers = #tpu.dot_dimension_numbers<[2], [2], [1], [1], [0, 0, 0, 1, 1, 1], [0], [0]>} : vector<2x1x32xbf16>, vector<2x6x32xbf16>, vector<2x1x6xf32> -> vector<2x1x6xf32>
    "tpu.trace_stop"() : () -> ()
    %cst_157 = arith.constant dense<0xFF800000> : vector<2x1xf32>
    %479 = vector.multi_reduction <maximumf>, %478, %cst_157 [2] : vector<2x1x6xf32> to vector<2x1xf32>
    %480 = vector.shape_cast %479 : vector<2x1xf32> to vector<2x1x1xf32>
    %481 = vector.broadcast %480 : vector<2x1x1xf32> to vector<2x1x6xf32>
    %482 = arith.subf %478, %481 : vector<2x1x6xf32>
    %483 = math.exp %482 : vector<2x1x6xf32>
    %cst_158 = arith.constant dense<0.000000e+00> : vector<2x1xf32>
    %484 = vector.multi_reduction <add>, %483, %cst_158 [2] : vector<2x1x6xf32> to vector<2x1xf32>
    %485 = vector.shape_cast %484 : vector<2x1xf32> to vector<2x1x1xf32>
    %486 = tpu.reciprocal %485 {approx = true} : vector<2x1x1xf32> -> vector<2x1x1xf32>
    %487 = vector.broadcast %486 : vector<2x1x1xf32> to vector<2x1x6xf32>
    %488 = arith.mulf %483, %487 : vector<2x1x6xf32>
    %489 = arith.truncf %488 : vector<2x1x6xf32> to vector<2x1x6xbf16>
    "tpu.trace_start"() <{level = 10 : i32, message = "bqk,bkh->bqh"}> : () -> ()
    %cst_159 = arith.constant dense<0.000000e+00> : vector<2x1x32xf32>
    %490 = tpu.matmul %489, %265, %cst_159 {dimension_numbers = #tpu.dot_dimension_numbers<[2], [1], [1], [2], [0, 0, 0, 1, 1, 2], [0], [0]>} : vector<2x1x6xbf16>, vector<2x6x32xbf16>, vector<2x1x32xf32> -> vector<2x1x32xf32>
    "tpu.trace_stop"() : () -> ()
    %491 = vector.shape_cast %490 : vector<2x1x32xf32> to vector<2x32xf32>
    %492 = arith.truncf %491 : vector<2x32xf32> to vector<2x32xbf16>
    %493 = arith.truncf %421 : vector<2x32xf32> to vector<2x32xbf16>
    %494 = tpu.concatenate %492, %493 in 1 : vector<2x32xbf16>, vector<2x32xbf16> -> vector<2x64xbf16>
    %cst_160 = arith.constant dense<0.000000e+00> : vector<2x32xf32>
    %495 = tpu.matmul %494, %271, %cst_160 {dimension_numbers = #tpu.dot_dimension_numbers<[1], [0], [0], [1], [0, 0, 1, 1], [], []>} : vector<2x64xbf16>, vector<64x32xbf16>, vector<2x32xf32> -> vector<2x32xf32>
    %496 = arith.mulf %224, %226 : vector<2x32xf32>
    %497 = tpu.concatenate %470, %495, %496, %225 in 1 : vector<2x32xf32>, vector<2x32xf32>, vector<2x32xf32>, vector<2x32xf32> -> vector<2x128xf32>
    %498 = arith.mulf %224, %227 : vector<2x32xf32>
    %499 = tpu.concatenate %470, %495, %498, %225 in 1 : vector<2x32xf32>, vector<2x32xf32>, vector<2x32xf32>, vector<2x32xf32> -> vector<2x128xf32>
    %500 = tpu.concatenate %497, %499 in 0 : vector<2x128xf32>, vector<2x128xf32> -> vector<4x128xf32>
    %501 = arith.truncf %500 : vector<4x128xf32> to vector<4x128xbf16>
    %c0_161 = arith.constant 0 : index
    %c0_162 = arith.constant 0 : index
    %502 = vector.load %arg15[%c0_161, %c0_162] : memref<128x32xbf16, #tpu.memory_space<vmem>>, vector<128x32xbf16>
    %cst_163 = arith.constant dense<0.000000e+00> : vector<4x32xf32>
    %503 = tpu.matmul %501, %502, %cst_163 {dimension_numbers = #tpu.dot_dimension_numbers<[1], [0], [0], [1], [0, 0, 1, 1], [], []>} : vector<4x128xbf16>, vector<128x32xbf16>, vector<4x32xf32> -> vector<4x32xf32>
    %c0_164 = arith.constant 0 : index
    %c0_165 = arith.constant 0 : index
    %504 = vector.load %arg16[%c0_164, %c0_165] : memref<1x32xf32, #tpu.memory_space<vmem>>, vector<1x32xf32>
    %505 = vector.broadcast %504 : vector<1x32xf32> to vector<4x32xf32>
    %506 = arith.addf %503, %505 : vector<4x32xf32>
    %cst_166 = arith.constant 0.000000e+00 : f32
    %507 = vector.broadcast %cst_166 : f32 to vector<4x32xf32>
    %508 = arith.cmpf ogt, %506, %507 : vector<4x32xf32>
    %cst_167 = arith.constant 0.000000e+00 : f32
    %509 = vector.broadcast %cst_167 : f32 to vector<4x32xf32>
    %510 = arith.minimumf %506, %509 : vector<4x32xf32>
    %511 = math.exp %510 : vector<4x32xf32>
    %cst_168 = arith.constant 1.000000e+00 : f32
    %512 = vector.broadcast %cst_168 : f32 to vector<4x32xf32>
    %513 = arith.subf %511, %512 : vector<4x32xf32>
    %514 = arith.select %508, %506, %513 : vector<4x32xi1>, vector<4x32xf32>
    %515 = arith.truncf %514 : vector<4x32xf32> to vector<4x32xbf16>
    %c0_169 = arith.constant 0 : index
    %c0_170 = arith.constant 0 : index
    %516 = vector.load %arg17[%c0_169, %c0_170] : memref<32x1xbf16, #tpu.memory_space<vmem>>, vector<32x1xbf16>
    %cst_171 = arith.constant dense<0.000000e+00> : vector<4x1xf32>
    %517 = tpu.matmul %515, %516, %cst_171 {dimension_numbers = #tpu.dot_dimension_numbers<[1], [0], [0], [1], [0, 0, 1, 1], [], []>} : vector<4x32xbf16>, vector<32x1xbf16>, vector<4x1xf32> -> vector<4x1xf32>
    %c0_172 = arith.constant 0 : index
    %c0_173 = arith.constant 0 : index
    %518 = vector.load %arg18[%c0_172, %c0_173] : memref<1x1xf32, #tpu.memory_space<vmem>>, vector<1x1xf32>
    %519 = vector.broadcast %518 : vector<1x1xf32> to vector<4x1xf32>
    %520 = arith.addf %517, %519 : vector<4x1xf32>
    %521 = vector.extract_strided_slice %520 {offsets = [0, 0], sizes = [2, 1], strides = [1, 1]} : vector<4x1xf32> to vector<2x1xf32>
    %522 = vector.extract_strided_slice %520 {offsets = [2, 0], sizes = [2, 1], strides = [1, 1]} : vector<4x1xf32> to vector<2x1xf32>
    %523 = tpu.concatenate %521, %522 in 1 : vector<2x1xf32>, vector<2x1xf32> -> vector<2x2xf32>
    %c0_174 = arith.constant 0 : index
    %c0_175 = arith.constant 0 : index
    %524 = vector.load %arg19[%c0_174, %c0_175] : memref<2x2xf32, #tpu.memory_space<vmem>>, vector<2x2xf32>
    tpu.vector_store %arg19[%c0_174, %c0_175], %523 {strides = array<i32>} : memref<2x2xf32, #tpu.memory_space<vmem>>, vector<2x2xf32>,
    return
  }
}

</mosaic_0001>

<llo_original>
// kernel: lstm_qavtac_mac_late_forward.1
$region0: #{lstm_qavtac_mac_late_forward.1}
  #allocation0 [shape = 'u32[]', space=smem, size = 0x4, offset = 0x4, fixed_abs, tag = 'smem constant byte address 0x4 - core index']
  #allocation1 [shape = 'u32[72,128]{1,0:T(1,128)}', space=vmem, size = 0x9000, scoped, tag = 'internal scratch']
  #allocation2 [shape = 'bf16[2,8,32]{2,1,0:T(8,128)(2,1)}', space=vmem, size = 0x1000, scoped, tag = 'scratch operand']
  #allocation3 [shape = 'f32[1,1]{1,0:T(1,128)S(1)}', space=vmem, size = 0x200, scoped, tag = 'scoped memory for lstm_qavtac_mac_late_forward.1']
  %s0 = inlined_call_operand.vmem [shape: f32[8,8,32], index: 0, kind: input, shape index: {}]
  %s1 = inlined_call_operand.vmem [shape: bf16[64,128], index: 1, kind: input, shape index: {}]
  %s2 = inlined_call_operand.vmem [shape: f32[1,128], index: 2, kind: input, shape index: {}]
  %s3 = inlined_call_operand.vmem [shape: f32[2,6,128], index: 3, kind: input, shape index: {}]
  %s4 = inlined_call_operand.vmem [shape: f32[2,6,32], index: 4, kind: input, shape index: {}]
  %s5 = inlined_call_operand.vmem [shape: bf16[128,32], index: 5, kind: input, shape index: {}]
  %s6 = inlined_call_operand.vmem [shape: f32[1,32], index: 6, kind: input, shape index: {}]
  %s7 = inlined_call_operand.vmem [shape: bf16[32,32], index: 7, kind: input, shape index: {}]
  %s8 = inlined_call_operand.vmem [shape: f32[1,32], index: 8, kind: input, shape index: {}]
  %s9 = inlined_call_operand.vmem [shape: bf16[64,32], index: 9, kind: input, shape index: {}]
  %s10 = inlined_call_operand.vmem [shape: f32[1,32], index: 10, kind: input, shape index: {}]
  %s11 = inlined_call_operand.vmem [shape: bf16[64,32], index: 11, kind: input, shape index: {}]
  %s12 = inlined_call_operand.vmem [shape: bf16[64,32], index: 12, kind: input, shape index: {}]
  %s13 = inlined_call_operand.vmem [shape: bf16[64,32], index: 13, kind: input, shape index: {}]
  %s14 = inlined_call_operand.vmem [shape: bf16[64,32], index: 14, kind: input, shape index: {}]
  %s15 = inlined_call_operand.vmem [shape: bf16[128,32], index: 15, kind: input, shape index: {}]
  %s16 = inlined_call_operand.vmem [shape: f32[1,32], index: 16, kind: input, shape index: {}]
  %s17 = inlined_call_operand.vmem [shape: bf16[32,1], index: 17, kind: input, shape index: {}]
  %s18 = inlined_call_operand.<no memory space> [shape: f32[1,1], index: 18, kind: input, shape index: {}]
  %s19 = inlined_call_operand.vmem [shape: f32[2,2], index: 19, kind: output, shape index: {}]
  %s20 = sld [smem:[#allocation0]]
  $region86: #{lstm_qavtac_mac_late_forward.1} parent=0
    _
  %s22 = ssub.s32 1, %s20
  %s23 = scalar_select 0, %s22, %s20
  %v24 = vstv %s18
  %25 = vst [vmem:[#allocation3] sm:$0x1] %v24
  // Predicated region
  $region2: #{lstm_qavtac_mac_late_forward.1} parent=0 // pred_check
    _
  $region3: #{lstm_qavtac_mac_late_forward.1} parent=0 // pred_check_branch
    %27 = sbr.rel (0) target = $region5
  $region4: #{lstm_qavtac_mac_late_forward.1} parent=0 // pred_region
    _
  $region5: #{lstm_qavtac_mac_late_forward.1} parent=0 // pred_fallthru
    _
  // Predicated region
  $region6: #{lstm_qavtac_mac_late_forward.1} parent=0 // pred_check
    _
  $region7: #{lstm_qavtac_mac_late_forward.1} parent=0 // pred_check_branch
    %29 = sbr.rel (0) target = $region9
  $region8: #{lstm_qavtac_mac_late_forward.1} parent=0 // pred_region
    _
  $region9: #{lstm_qavtac_mac_late_forward.1} parent=0 // pred_fallthru
    _
  // Predicated region
  $region10: #{lstm_qavtac_mac_late_forward.1} parent=0 // pred_check
    _
  $region11: #{lstm_qavtac_mac_late_forward.1} parent=0 // pred_check_branch
    %31 = sbr.rel (0) target = $region13
  $region12: #{lstm_qavtac_mac_late_forward.1} parent=0 // pred_region
    _
  $region13: #{lstm_qavtac_mac_late_forward.1} parent=0 // pred_fallthru
    _
  // Predicated region
  $region14: #{lstm_qavtac_mac_late_forward.1} parent=0 // pred_check
    _
  $region15: #{lstm_qavtac_mac_late_forward.1} parent=0 // pred_check_branch
    %33 = sbr.rel (0) target = $region17
  $region16: #{lstm_qavtac_mac_late_forward.1} parent=0 // pred_region
    _
  $region17: #{lstm_qavtac_mac_late_forward.1} parent=0 // pred_fallthru
    _
  // Predicated region
  $region18: #{lstm_qavtac_mac_late_forward.1} parent=0 // pred_check
    _
  $region19: #{lstm_qavtac_mac_late_forward.1} parent=0 // pred_check_branch
    %35 = sbr.rel (0) target = $region21
  $region20: #{lstm_qavtac_mac_late_forward.1} parent=0 // pred_region
    _
  $region21: #{lstm_qavtac_mac_late_forward.1} parent=0 // pred_fallthru
    _
  // Predicated region
  $region22: #{lstm_qavtac_mac_late_forward.1} parent=0 // pred_check
    _
  $region23: #{lstm_qavtac_mac_late_forward.1} parent=0 // pred_check_branch
    %37 = sbr.rel (0) target = $region25
  $region24: #{lstm_qavtac_mac_late_forward.1} parent=0 // pred_region
    _
  $region25: #{lstm_qavtac_mac_late_forward.1} parent=0 // pred_fallthru
    _
  // Predicated region
  $region26: #{lstm_qavtac_mac_late_forward.1} parent=0 // pred_check
    _
  $region27: #{lstm_qavtac_mac_late_forward.1} parent=0 // pred_check_branch
    %39 = sbr.rel (0) target = $region29
  $region28: #{lstm_qavtac_mac_late_forward.1} parent=0 // pred_region
    _
  $region29: #{lstm_qavtac_mac_late_forward.1} parent=0 // pred_fallthru
    _
  // Predicated region
  $region30: #{lstm_qavtac_mac_late_forward.1} parent=0 // pred_check
    _
  $region31: #{lstm_qavtac_mac_late_forward.1} parent=0 // pred_check_branch
    %41 = sbr.rel (0) target = $region33
  $region32: #{lstm_qavtac_mac_late_forward.1} parent=0 // pred_region
    _
  $region33: #{lstm_qavtac_mac_late_forward.1} parent=0 // pred_fallthru
    _
  // Predicated region
  $region34: #{lstm_qavtac_mac_late_forward.1} parent=0 // pred_check
    _
  $region35: #{lstm_qavtac_mac_late_forward.1} parent=0 // pred_check_branch
    %43 = sbr.rel (0) target = $region37
  $region36: #{lstm_qavtac_mac_late_forward.1} parent=0 // pred_region
    _
  $region37: #{lstm_qavtac_mac_late_forward.1} parent=0 // pred_fallthru
    _
  // Predicated region
  $region38: #{lstm_qavtac_mac_late_forward.1} parent=0 // pred_check
    _
  $region39: #{lstm_qavtac_mac_late_forward.1} parent=0 // pred_check_branch
    %45 = sbr.rel (0) target = $region41
  $region40: #{lstm_qavtac_mac_late_forward.1} parent=0 // pred_region
    _
  $region41: #{lstm_qavtac_mac_late_forward.1} parent=0 // pred_fallthru
    _
  // Predicated region
  $region42: #{lstm_qavtac_mac_late_forward.1} parent=0 // pred_check
    _
  $region43: #{lstm_qavtac_mac_late_forward.1} parent=0 // pred_check_branch
    %47 = sbr.rel (0) target = $region45
  $region44: #{lstm_qavtac_mac_late_forward.1} parent=0 // pred_region
    _
  $region45: #{lstm_qavtac_mac_late_forward.1} parent=0 // pred_fallthru
    _
  // Predicated region
  $region46: #{lstm_qavtac_mac_late_forward.1} parent=0 // pred_check
    _
  $region47: #{lstm_qavtac_mac_late_forward.1} parent=0 // pred_check_branch
    %49 = sbr.rel (0) target = $region49
  $region48: #{lstm_qavtac_mac_late_forward.1} parent=0 // pred_region
    _
  $region49: #{lstm_qavtac_mac_late_forward.1} parent=0 // pred_fallthru
    _
  // Predicated region
  $region50: #{lstm_qavtac_mac_late_forward.1} parent=0 // pred_check
    _
  $region51: #{lstm_qavtac_mac_late_forward.1} parent=0 // pred_check_branch
    %51 = sbr.rel (0) target = $region53
  $region52: #{lstm_qavtac_mac_late_forward.1} parent=0 // pred_region
    _
  $region53: #{lstm_qavtac_mac_late_forward.1} parent=0 // pred_fallthru
    _
  // Predicated region
  $region54: #{lstm_qavtac_mac_late_forward.1} parent=0 // pred_check
    _
  $region55: #{lstm_qavtac_mac_late_forward.1} parent=0 // pred_check_branch
    %53 = sbr.rel (0) target = $region57
  $region56: #{lstm_qavtac_mac_late_forward.1} parent=0 // pred_region
    _
  $region57: #{lstm_qavtac_mac_late_forward.1} parent=0 // pred_fallthru
    _
  // Predicated region
  $region58: #{lstm_qavtac_mac_late_forward.1} parent=0 // pred_check
    _
  $region59: #{lstm_qavtac_mac_late_forward.1} parent=0 // pred_check_branch
    %55 = sbr.rel (0) target = $region61
  $region60: #{lstm_qavtac_mac_late_forward.1} parent=0 // pred_region
    _
  $region61: #{lstm_qavtac_mac_late_forward.1} parent=0 // pred_fallthru
    _
  // Predicated region
  $region62: #{lstm_qavtac_mac_late_forward.1} parent=0 // pred_check
    _
  $region63: #{lstm_qavtac_mac_late_forward.1} parent=0 // pred_check_branch
    %57 = sbr.rel (0) target = $region65
  $region64: #{lstm_qavtac_mac_late_forward.1} parent=0 // pred_region
    _
  $region65: #{lstm_qavtac_mac_late_forward.1} parent=0 // pred_fallthru
    _
  // Predicated region
  $region66: #{lstm_qavtac_mac_late_forward.1} parent=0 // pred_check
    _
  $region67: #{lstm_qavtac_mac_late_forward.1} parent=0 // pred_check_branch
    %59 = sbr.rel (0) target = $region69
  $region68: #{lstm_qavtac_mac_late_forward.1} parent=0 // pred_region
    _
  $region69: #{lstm_qavtac_mac_late_forward.1} parent=0 // pred_fallthru
    _
  // Predicated region
  $region70: #{lstm_qavtac_mac_late_forward.1} parent=0 // pred_check
    _
  $region71: #{lstm_qavtac_mac_late_forward.1} parent=0 // pred_check_branch
    %61 = sbr.rel (0) target = $region73
  $region72: #{lstm_qavtac_mac_late_forward.1} parent=0 // pred_region
    _
  $region73: #{lstm_qavtac_mac_late_forward.1} parent=0 // pred_fallthru
    _
  // Predicated region
  $region74: #{lstm_qavtac_mac_late_forward.1} parent=0 // pred_check
    _
  $region75: #{lstm_qavtac_mac_late_forward.1} parent=0 // pred_check_branch
    %63 = sbr.rel (0) target = $region77
  $region76: #{lstm_qavtac_mac_late_forward.1} parent=0 // pred_region
    _
  $region77: #{lstm_qavtac_mac_late_forward.1} parent=0 // pred_fallthru
    _
  %v65 = vld [vmem:[%s1] sm:$0xf]
  %v66 = vld [vmem:[%s1 + $0x4] sm:$0xf]
  %v67 = vld [vmem:[%s1 + $0x8] sm:$0xf]
  %v68 = vld [vmem:[%s1 + $0xc] sm:$0xf]
  %v69 = vld [vmem:[%s1 + $0x10] sm:$0xf]
  %v70 = vld [vmem:[%s1 + $0x14] sm:$0xf]
  %v71 = vld [vmem:[%s1 + $0x18] sm:$0xf]
  %v72 = vld [vmem:[%s1 + $0x1c] sm:$0xf]
  %v73 = vld [vmem:[%s2] sm:$0x1]
  %v75 = vperm.slane %v73, 0
  %v77 = vld [vmem:[%s0] sm:$0xff]
  %v78 = vpack.c.bf16 %v77, %v77
  %vm79 = vcmask 261120
  %v82 = vsel %vm79, %v78, 0
  %v91 = vunpack.c.l.b16 %v65
  %v92 = vunpack.c.l.b16 %v66
  %v93 = vunpack.c.l.b16 %v67
  %v94 = vunpack.c.l.b16 %v68
  %v95 = vunpack.c.l.b16 %v69
  %v96 = vunpack.c.l.b16 %v70
  %v97 = vunpack.c.l.b16 %v71
  %v98 = vunpack.c.l.b16 %v72
  %v99 = vpack.c.b16 %v92, %v91
  %v100 = vpack.c.b16 %v94, %v93
  %v101 = vpack.c.b16 %v96, %v95
  %v102 = vpack.c.b16 %v98, %v97
  %vm107 = vcmask 523264
  %v108 = vsel %vm107, %v82, 0
  %110 = vmatpush.bf16.msra.mxu0 0
  %111 = vmatpush.bf16.msra.mxu0 0
  %112 = vmatpush.bf16.msra.mxu0 0
  %113 = vmatpush.bf16.msra.mxu0 0
  %114 = vmatpush.bf16.msra.mxu0 %v102
  %115 = vmatpush.bf16.msra.mxu0 %v101
  %116 = vmatpush.bf16.msra.mxu0 %v100
  %117 = vmatpush.bf16.msra.mxu0 %v99
  %118 = vmatmul.bf16.gmra.mxu0 %v108
  %v119 = vpop.f32.mrf.mxu0
  %v120 = vadd.f32 %v75, %v119
  %v121 = vpop.f32.mrf.mxu0
  %122 = vdwg.mxu0
  %v123 = vsub.f32 0.0, %v120
  %v124 = vmul.f32 %v123, 1.442695
  %v125 = vpow.pop %v124
  %v126 = vadd.f32 %v125, 1.0
  %v127 = vrcp.pop %v126
  %v128 = vtanh.pop %v120
  %v129 = vmul.f32 %v127, 0.0
  %131 = vrot.lane.b32.xlu0 %v128, 64
  %v132 = vpop.permute.xlu0 %131
  %v134 = vmul.f32 %v127, %v132
  %136 = vrot.lane.b32.xlu0 %v134, 32
  %v137 = vpop.permute.xlu0 %136
  %v139 = vadd.f32 %v129, %v137
  %v140 = vtanh.pop %v139
  %142 = vrot.lane.b32.xlu0 %v140, 64
  %v143 = vpop.permute.xlu0 %142
  %v145 = vmul.f32 %v127, %v143
  %v147 = vrot.slane %v145, 1
  %v149 = vpack.c.bf16 %v145, %v145
  %v150 = vpack.c.bf16 %v147, %v147
  %153 = vrot.lane.b32.xlu0 %v149, 32
  %v154 = vpop.permute.xlu0 %153
  %155 = vrot.lane.b32.xlu0 %v150, 32
  %v156 = vpop.permute.xlu0 %155
  %vm159 = vcmask 253952
  %vm160 = vsmask.f32 256
  %vm161 = vmand %vm159, %vm160
  %v162 = vld [vmem:[#allocation2] sm:$0x1]
  %v163 = vsel %vm161, %v154, %v162
  %164 = vst [vmem:[#allocation2] sm:$0x1] %v163
  %v165 = vld [vmem:[#allocation2 + $0x4] sm:$0x1]
  %v166 = vsel %vm161, %v156, %v165
  %167 = vst [vmem:[#allocation2 + $0x4] sm:$0x1] %v166
  %s168 = scalar_lea.vmem %s0, 8
  %v169 = vld [vmem:[%s168] sm:$0xff]
  %v170 = vpack.c.bf16 %v169, %v169
  %v171 = vunpack.c.l.b16 %v149
  %v172 = vpack.c.b16 %v171, %v171
  %173 = vrot.lane.b32.xlu0 %v172, 64
  %v174 = vpop.permute.xlu0 %173
  %v177 = vsel %vm79, %v170, %v174
  %v178 = vsel %vm107, %v177, 0
  %180 = vmatpush.bf16.msra.mxu0 0
  %181 = vmatpush.bf16.msra.mxu0 0
  %182 = vmatpush.bf16.msra.mxu0 0
  %183 = vmatpush.bf16.msra.mxu0 0
  %184 = vmatpush.bf16.msra.mxu0 %v102
  %185 = vmatpush.bf16.msra.mxu0 %v101
  %186 = vmatpush.bf16.msra.mxu0 %v100
  %187 = vmatpush.bf16.msra.mxu0 %v99
  %188 = vmatmul.bf16.gmra.mxu0 %v178
  %v189 = vpop.f32.mrf.mxu0
  %v190 = vadd.f32 %v75, %v189
  %v191 = vpop.f32.mrf.mxu0
  %192 = vdwg.mxu0
  %v193 = vsub.f32 0.0, %v190
  %v194 = vmul.f32 %v193, 1.442695
  %v195 = vpow.pop %v194
  %v196 = vadd.f32 %v195, 1.0
  %v197 = vrcp.pop %v196
  %v198 = vtanh.pop %v190
  %v199 = vmul.f32 %v197, %v139
  %201 = vrot.lane.b32.xlu0 %v198, 64
  %v202 = vpop.permute.xlu0 %201
  %v204 = vmul.f32 %v197, %v202
  %206 = vrot.lane.b32.xlu0 %v204, 32
  %v207 = vpop.permute.xlu0 %206
  %v209 = vadd.f32 %v199, %v207
  %v210 = vtanh.pop %v209
  %212 = vrot.lane.b32.xlu0 %v210, 64
  %v213 = vpop.permute.xlu0 %212
  %v215 = vmul.f32 %v197, %v213
  %v217 = vrot.slane %v215, 1
  %v219 = vpack.c.bf16 %v215, %v215
  %v220 = vpack.c.bf16 %v217, %v217
  %v222 = vshll.u32 %v219, 16
  %v225 = vshll.u32 %v220, 16
  %227 = vrot.lane.b32.xlu0 %v222, 32
  %v228 = vpop.permute.xlu0 %227
  %229 = vrot.lane.b32.xlu0 %v225, 32
  %v230 = vpop.permute.xlu0 %229
  %vm233 = vsmask.f32 7938
  %vm234 = vmand %vm159, %vm233
  %v235 = vld [vmem:[#allocation2] sm:$0x1]
  %v236 = vsel %vm234, %v228, %v235
  %237 = vst [vmem:[#allocation2] sm:$0x1] %v236
  %v238 = vld [vmem:[#allocation2 + $0x4] sm:$0x1]
  %v239 = vsel %vm234, %v230, %v238
  %240 = vst [vmem:[#allocation2 + $0x4] sm:$0x1] %v239
  %s241 = scalar_lea.vmem %s0, 16
  %v242 = vld [vmem:[%s241] sm:$0xff]
  %v243 = vpack.c.bf16 %v242, %v242
  %v245 = vunpack.c.l.b16 %v219
  %v246 = vpack.c.b16 %v245, %v245
  %247 = vrot.lane.b32.xlu0 %v246, 64
  %v248 = vpop.permute.xlu0 %247
  %v251 = vsel %vm79, %v243, %v248
  %v252 = vsel %vm107, %v251, 0
  %254 = vmatpush.bf16.msra.mxu0 0
  %255 = vmatpush.bf16.msra.mxu0 0
  %256 = vmatpush.bf16.msra.mxu0 0
  %257 = vmatpush.bf16.msra.mxu0 0
  %258 = vmatpush.bf16.msra.mxu0 %v102
  %259 = vmatpush.bf16.msra.mxu0 %v101
  %260 = vmatpush.bf16.msra.mxu0 %v100
  %261 = vmatpush.bf16.msra.mxu0 %v99
  %262 = vmatmul.bf16.gmra.mxu0 %v252
  %v263 = vpop.f32.mrf.mxu0
  %v264 = vadd.f32 %v75, %v263
  %v265 = vpop.f32.mrf.mxu0
  %266 = vdwg.mxu0
  %v267 = vsub.f32 0.0, %v264
  %v268 = vmul.f32 %v267, 1.442695
  %v269 = vpow.pop %v268
  %v270 = vadd.f32 %v269, 1.0
  %v271 = vrcp.pop %v270
  %v272 = vtanh.pop %v264
  %v273 = vmul.f32 %v271, %v209
  %275 = vrot.lane.b32.xlu0 %v272, 64
  %v276 = vpop.permute.xlu0 %275
  %v278 = vmul.f32 %v271, %v276
  %280 = vrot.lane.b32.xlu0 %v278, 32
  %v281 = vpop.permute.xlu0 %280
  %v283 = vadd.f32 %v273, %v281
  %v284 = vtanh.pop %v283
  %286 = vrot.lane.b32.xlu0 %v284, 64
  %v287 = vpop.permute.xlu0 %286
  %v289 = vmul.f32 %v271, %v287
  %v291 = vrot.slane %v289, 1
  %v293 = vpack.c.bf16 %v289, %v289
  %v294 = vpack.c.bf16 %v291, %v291
  %v297 = vrot.slane %v293, 7
  %v298 = vrot.slane %v294, 7
  %299 = vrot.lane.b32.xlu0 %v297, 32
  %v300 = vpop.permute.xlu0 %299
  %301 = vrot.lane.b32.xlu0 %v298, 32
  %v302 = vpop.permute.xlu0 %301
  %vm305 = vcmask 254977
  %vm306 = vsmask.f32 1280
  %vm307 = vmand %vm305, %vm306
  %v308 = vld [vmem:[#allocation2] sm:$0x2]
  %v309 = vsel %vm307, %v300, %v308
  %310 = vst [vmem:[#allocation2] sm:$0x2] %v309
  %v311 = vld [vmem:[#allocation2 + $0x4] sm:$0x2]
  %v312 = vsel %vm307, %v302, %v311
  %313 = vst [vmem:[#allocation2 + $0x4] sm:$0x2] %v312
  %s314 = scalar_lea.vmem %s0, 24
  %v315 = vld [vmem:[%s314] sm:$0xff]
  %v316 = vpack.c.bf16 %v315, %v315
  %v317 = vunpack.c.l.b16 %v293
  %v318 = vpack.c.b16 %v317, %v317
  %319 = vrot.lane.b32.xlu0 %v318, 64
  %v320 = vpop.permute.xlu0 %319
  %v323 = vsel %vm79, %v316, %v320
  %v324 = vsel %vm107, %v323, 0
  %326 = vmatpush.bf16.msra.mxu0 0
  %327 = vmatpush.bf16.msra.mxu0 0
  %328 = vmatpush.bf16.msra.mxu0 0
  %329 = vmatpush.bf16.msra.mxu0 0
  %330 = vmatpush.bf16.msra.mxu0 %v102
  %331 = vmatpush.bf16.msra.mxu0 %v101
  %332 = vmatpush.bf16.msra.mxu0 %v100
  %333 = vmatpush.bf16.msra.mxu0 %v99
  %334 = vmatmul.bf16.gmra.mxu0 %v324
  %v335 = vpop.f32.mrf.mxu0
  %v336 = vadd.f32 %v75, %v335
  %v337 = vpop.f32.mrf.mxu0
  %338 = vdwg.mxu0
  %v339 = vsub.f32 0.0, %v336
  %v340 = vmul.f32 %v339, 1.442695
  %v341 = vpow.pop %v340
  %v342 = vadd.f32 %v341, 1.0
  %v343 = vrcp.pop %v342
  %v344 = vtanh.pop %v336
  %v345 = vmul.f32 %v343, %v283
  %347 = vrot.lane.b32.xlu0 %v344, 64
  %v348 = vpop.permute.xlu0 %347
  %v350 = vmul.f32 %v343, %v348
  %352 = vrot.lane.b32.xlu0 %v350, 32
  %v353 = vpop.permute.xlu0 %352
  %v355 = vadd.f32 %v345, %v353
  %v356 = vtanh.pop %v355
  %358 = vrot.lane.b32.xlu0 %v356, 64
  %v359 = vpop.permute.xlu0 %358
  %v361 = vmul.f32 %v343, %v359
  %v363 = vrot.slane %v361, 1
  %v365 = vpack.c.bf16 %v361, %v361
  %v366 = vpack.c.bf16 %v363, %v363
  %v368 = vshll.u32 %v365, 16
  %v370 = vrot.slane %v368, 7
  %v372 = vshll.u32 %v366, 16
  %v374 = vrot.slane %v372, 7
  %375 = vrot.lane.b32.xlu0 %v370, 32
  %v376 = vpop.permute.xlu0 %375
  %377 = vrot.lane.b32.xlu0 %v374, 32
  %v378 = vpop.permute.xlu0 %377
  %vm381 = vsmask.f32 7942
  %vm382 = vmand %vm305, %vm381
  %v383 = vld [vmem:[#allocation2] sm:$0x2]
  %v384 = vsel %vm382, %v376, %v383
  %385 = vst [vmem:[#allocation2] sm:$0x2] %v384
  %v386 = vld [vmem:[#allocation2 + $0x4] sm:$0x2]
  %v387 = vsel %vm382, %v378, %v386
  %388 = vst [vmem:[#allocation2 + $0x4] sm:$0x2] %v387
  %s389 = scalar_lea.vmem %s0, 32
  %v390 = vld [vmem:[%s389] sm:$0xff]
  %v391 = vpack.c.bf16 %v390, %v390
  %v393 = vunpack.c.l.b16 %v365
  %v394 = vpack.c.b16 %v393, %v393
  %395 = vrot.lane.b32.xlu0 %v394, 64
  %v396 = vpop.permute.xlu0 %395
  %v399 = vsel %vm79, %v391, %v396
  %v400 = vsel %vm107, %v399, 0
  %402 = vmatpush.bf16.msra.mxu0 0
  %403 = vmatpush.bf16.msra.mxu0 0
  %404 = vmatpush.bf16.msra.mxu0 0
  %405 = vmatpush.bf16.msra.mxu0 0
  %406 = vmatpush.bf16.msra.mxu0 %v102
  %407 = vmatpush.bf16.msra.mxu0 %v101
  %408 = vmatpush.bf16.msra.mxu0 %v100
  %409 = vmatpush.bf16.msra.mxu0 %v99
  %410 = vmatmul.bf16.gmra.mxu0 %v400
  %v411 = vpop.f32.mrf.mxu0
  %v412 = vadd.f32 %v75, %v411
  %v413 = vpop.f32.mrf.mxu0
  %414 = vdwg.mxu0
  %v415 = vsub.f32 0.0, %v412
  %v416 = vmul.f32 %v415, 1.442695
  %v417 = vpow.pop %v416
  %v418 = vadd.f32 %v417, 1.0
  %v419 = vrcp.pop %v418
  %v420 = vtanh.pop %v412
  %v421 = vmul.f32 %v419, %v355
  %423 = vrot.lane.b32.xlu0 %v420, 64
  %v424 = vpop.permute.xlu0 %423
  %v426 = vmul.f32 %v419, %v424
  %428 = vrot.lane.b32.xlu0 %v426, 32
  %v429 = vpop.permute.xlu0 %428
  %v431 = vadd.f32 %v421, %v429
  %v432 = vtanh.pop %v431
  %434 = vrot.lane.b32.xlu0 %v432, 64
  %v435 = vpop.permute.xlu0 %434
  %v437 = vmul.f32 %v419, %v435
  %v439 = vrot.slane %v437, 1
  %v441 = vpack.c.bf16 %v437, %v437
  %v442 = vpack.c.bf16 %v439, %v439
  %v445 = vrot.slane %v441, 6
  %v446 = vrot.slane %v442, 6
  %447 = vrot.lane.b32.xlu0 %v445, 32
  %v448 = vpop.permute.xlu0 %447
  %449 = vrot.lane.b32.xlu0 %v446, 32
  %v450 = vpop.permute.xlu0 %449
  %vm453 = vcmask 256002
  %vm454 = vsmask.f32 2304
  %vm455 = vmand %vm453, %vm454
  %v456 = vld [vmem:[#allocation2] sm:$0x4]
  %v457 = vsel %vm455, %v448, %v456
  %458 = vst [vmem:[#allocation2] sm:$0x4] %v457
  %v459 = vld [vmem:[#allocation2 + $0x4] sm:$0x4]
  %v460 = vsel %vm455, %v450, %v459
  %461 = vst [vmem:[#allocation2 + $0x4] sm:$0x4] %v460
  %s462 = scalar_lea.vmem %s0, 40
  %v463 = vld [vmem:[%s462] sm:$0xff]
  %v464 = vpack.c.bf16 %v463, %v463
  %v465 = vunpack.c.l.b16 %v441
  %v466 = vpack.c.b16 %v465, %v465
  %467 = vrot.lane.b32.xlu0 %v466, 64
  %v468 = vpop.permute.xlu0 %467
  %v471 = vsel %vm79, %v464, %v468
  %v472 = vsel %vm107, %v471, 0
  %474 = vmatpush.bf16.msra.mxu0 0
  %475 = vmatpush.bf16.msra.mxu0 0
  %476 = vmatpush.bf16.msra.mxu0 0
  %477 = vmatpush.bf16.msra.mxu0 0
  %478 = vmatpush.bf16.msra.mxu0 %v102
  %479 = vmatpush.bf16.msra.mxu0 %v101
  %480 = vmatpush.bf16.msra.mxu0 %v100
  %481 = vmatpush.bf16.msra.mxu0 %v99
  %482 = vmatmul.bf16.gmra.mxu0 %v472
  %v483 = vpop.f32.mrf.mxu0
  %v484 = vadd.f32 %v75, %v483
  %v485 = vpop.f32.mrf.mxu0
  %486 = vdwg.mxu0
  %v487 = vsub.f32 0.0, %v484
  %v488 = vmul.f32 %v487, 1.442695
  %v489 = vpow.pop %v488
  %v490 = vadd.f32 %v489, 1.0
  %v491 = vrcp.pop %v490
  %v492 = vtanh.pop %v484
  %v493 = vmul.f32 %v491, %v431
  %495 = vrot.lane.b32.xlu0 %v492, 64
  %v496 = vpop.permute.xlu0 %495
  %v498 = vmul.f32 %v491, %v496
  %500 = vrot.lane.b32.xlu0 %v498, 32
  %v501 = vpop.permute.xlu0 %500
  %v503 = vadd.f32 %v493, %v501
  %v504 = vtanh.pop %v503
  %506 = vrot.lane.b32.xlu0 %v504, 64
  %v507 = vpop.permute.xlu0 %506
  %v509 = vmul.f32 %v491, %v507
  %v511 = vrot.slane %v509, 1
  %v513 = vpack.c.bf16 %v509, %v509
  %v514 = vpack.c.bf16 %v511, %v511
  %v516 = vshll.u32 %v513, 16
  %v518 = vrot.slane %v516, 6
  %v520 = vshll.u32 %v514, 16
  %v522 = vrot.slane %v520, 6
  %523 = vrot.lane.b32.xlu0 %v518, 32
  %v524 = vpop.permute.xlu0 %523
  %525 = vrot.lane.b32.xlu0 %v522, 32
  %v526 = vpop.permute.xlu0 %525
  %vm529 = vsmask.f32 7946
  %vm530 = vmand %vm453, %vm529
  %v531 = vld [vmem:[#allocation2] sm:$0x4]
  %v532 = vsel %vm530, %v524, %v531
  %533 = vst [vmem:[#allocation2] sm:$0x4] %v532
  %v534 = vld [vmem:[#allocation2 + $0x4] sm:$0x4]
  %v535 = vsel %vm530, %v526, %v534
  %536 = vst [vmem:[#allocation2 + $0x4] sm:$0x4] %v535
  %s537 = scalar_lea.vmem %s0, 48
  %v538 = vld [vmem:[%s537] sm:$0xff]
  %v539 = vpack.c.bf16 %v538, %v538
  %v541 = vunpack.c.l.b16 %v513
  %v542 = vpack.c.b16 %v541, %v541
  %543 = vrot.lane.b32.xlu0 %v542, 64
  %v544 = vpop.permute.xlu0 %543
  %v547 = vsel %vm79, %v539, %v544
  %v548 = vsel %vm107, %v547, 0
  %550 = vmatpush.bf16.msra.mxu0 0
  %551 = vmatpush.bf16.msra.mxu0 0
  %552 = vmatpush.bf16.msra.mxu0 0
  %553 = vmatpush.bf16.msra.mxu0 0
  %554 = vmatpush.bf16.msra.mxu0 %v102
  %555 = vmatpush.bf16.msra.mxu0 %v101
  %556 = vmatpush.bf16.msra.mxu0 %v100
  %557 = vmatpush.bf16.msra.mxu0 %v99
  %558 = vmatmul.bf16.gmra.mxu0 %v548
  %v559 = vpop.f32.mrf.mxu0
  %v560 = vadd.f32 %v75, %v559
  %v561 = vpop.f32.mrf.mxu0
  %562 = vdwg.mxu0
  %v563 = vsub.f32 0.0, %v560
  %v564 = vmul.f32 %v563, 1.442695
  %v565 = vpow.pop %v564
  %v566 = vadd.f32 %v565, 1.0
  %v567 = vrcp.pop %v566
  %v568 = vtanh.pop %v560
  %v569 = vmul.f32 %v567, %v503
  %571 = vrot.lane.b32.xlu0 %v568, 64
  %v572 = vpop.permute.xlu0 %571
  %v574 = vmul.f32 %v567, %v572
  %576 = vrot.lane.b32.xlu0 %v574, 32
  %v577 = vpop.permute.xlu0 %576
  %v579 = vadd.f32 %v569, %v577
  %v580 = vtanh.pop %v579
  %582 = vrot.lane.b32.xlu0 %v580, 64
  %v583 = vpop.permute.xlu0 %582
  %v585 = vmul.f32 %v567, %v583
  %v587 = vrot.slane %v585, 1
  %v589 = vpack.c.bf16 %v585, %v585
  %v590 = vpack.c.bf16 %v587, %v587
  %v593 = vrot.slane %v589, 5
  %v594 = vrot.slane %v590, 5
  %595 = vrot.lane.b32.xlu0 %v593, 32
  %v596 = vpop.permute.xlu0 %595
  %597 = vrot.lane.b32.xlu0 %v594, 32
  %v598 = vpop.permute.xlu0 %597
  %vm601 = vcmask 257027
  %vm602 = vsmask.f32 3328
  %vm603 = vmand %vm601, %vm602
  %v604 = vld [vmem:[#allocation2] sm:$0x8]
  %v605 = vsel %vm603, %v596, %v604
  %606 = vst [vmem:[#allocation2] sm:$0x8] %v605
  %v607 = vld [vmem:[#allocation2 + $0x4] sm:$0x8]
  %v608 = vsel %vm603, %v598, %v607
  %609 = vst [vmem:[#allocation2 + $0x4] sm:$0x8] %v608
  %s610 = scalar_lea.vmem %s0, 56
  %v611 = vld [vmem:[%s610] sm:$0xff]
  %v612 = vpack.c.bf16 %v611, %v611
  %v613 = vunpack.c.l.b16 %v589
  %v614 = vpack.c.b16 %v613, %v613
  %615 = vrot.lane.b32.xlu0 %v614, 64
  %v616 = vpop.permute.xlu0 %615
  %v619 = vsel %vm79, %v612, %v616
  %v620 = vsel %vm107, %v619, 0
  %622 = vmatpush.bf16.msra.mxu0 0
  %623 = vmatpush.bf16.msra.mxu0 0
  %624 = vmatpush.bf16.msra.mxu0 0
  %625 = vmatpush.bf16.msra.mxu0 0
  %626 = vmatpush.bf16.msra.mxu0 %v102
  %627 = vmatpush.bf16.msra.mxu0 %v101
  %628 = vmatpush.bf16.msra.mxu0 %v100
  %629 = vmatpush.bf16.msra.mxu0 %v99
  %630 = vmatmul.bf16.gmra.mxu0 %v620
  %v631 = vpop.f32.mrf.mxu0
  %v632 = vadd.f32 %v75, %v631
  %v633 = vpop.f32.mrf.mxu0
  %634 = vdwg.mxu0
  %v635 = vsub.f32 0.0, %v632
  %v636 = vmul.f32 %v635, 1.442695
  %v637 = vpow.pop %v636
  %v638 = vadd.f32 %v637, 1.0
  %v639 = vrcp.pop %v638
  %v640 = vtanh.pop %v632
  %v641 = vmul.f32 %v639, %v579
  %643 = vrot.lane.b32.xlu0 %v640, 64
  %v644 = vpop.permute.xlu0 %643
  %v646 = vmul.f32 %v639, %v644
  %648 = vrot.lane.b32.xlu0 %v646, 32
  %v649 = vpop.permute.xlu0 %648
  %v651 = vadd.f32 %v641, %v649
  %v652 = vtanh.pop %v651
  %654 = vrot.lane.b32.xlu0 %v652, 64
  %v655 = vpop.permute.xlu0 %654
  %v657 = vmul.f32 %v639, %v655
  %v659 = vrot.slane %v657, 1
  %v661 = vpack.c.bf16 %v657, %v657
  %v662 = vpack.c.bf16 %v659, %v659
  %v664 = vshll.u32 %v661, 16
  %v666 = vrot.slane %v664, 5
  %v668 = vshll.u32 %v662, 16
  %v670 = vrot.slane %v668, 5
  %671 = vrot.lane.b32.xlu0 %v666, 32
  %v672 = vpop.permute.xlu0 %671
  %673 = vrot.lane.b32.xlu0 %v670, 32
  %v674 = vpop.permute.xlu0 %673
  %vm677 = vsmask.f32 7950
  %vm678 = vmand %vm601, %vm677
  %v679 = vld [vmem:[#allocation2] sm:$0x8]
  %v680 = vsel %vm678, %v672, %v679
  %681 = vst [vmem:[#allocation2] sm:$0x8] %v680
  %v682 = vld [vmem:[#allocation2 + $0x4] sm:$0x8]
  %v683 = vsel %vm678, %v674, %v682
  %684 = vst [vmem:[#allocation2 + $0x4] sm:$0x8] %v683
  %v685 = vld [vmem:[#allocation2] sm:$0xf]
  %v686 = vld [vmem:[#allocation2 + $0x4] sm:$0xf]
  %v687 = vld [vmem:[%s3] sm:$0x3f]
  %v688 = vld [vmem:[%s3 + $0x8] sm:$0x3f]
  %v691 = vrot.slane %v687, 2
  %v692 = vrot.slane %v687, 4
  %v693 = vrot.slane %v688, 2
  %v694 = vrot.slane %v688, 4
  %695 = vst [vmem:[#allocation1] ss:$4 sm:$0xff] %v687
  %s696 = scalar_lea.vmem [#allocation1], 1
  %697 = vst [vmem:[%s696] ss:$4 sm:$0xff] %v691
  %s698 = scalar_lea.vmem [#allocation1], 2
  %699 = vst [vmem:[%s698] ss:$4 sm:$0xff] %v692
  %s700 = scalar_lea.vmem [#allocation1], 3
  %701 = vst [vmem:[%s700] ss:$4 sm:$0xff] %v688
  %s702 = scalar_lea.vmem [#allocation1], 32
  %703 = vst [vmem:[%s702] ss:$4 sm:$0xff] %v693
  %s704 = scalar_lea.vmem [#allocation1], 33
  %705 = vst [vmem:[%s704] ss:$4 sm:$0xff] %v694
  %v706 = vld.sshfl [vmem:[#allocation1] sm:$0xff pattern:$0x73625140]
  %v707 = vld.sshfl [vmem:[#allocation1 + $0x20] sm:$0xff pattern:$0x73625140]
  %v710 = vpack.c.bf16 %v707, %v706
  %v711 = vld [vmem:[%s5] sm:$0xf]
  %v712 = vld [vmem:[%s5 + $0x4] sm:$0xf]
  %v713 = vld [vmem:[%s5 + $0x8] sm:$0xf]
  %v714 = vld [vmem:[%s5 + $0xc] sm:$0xf]
  %v715 = vld [vmem:[%s5 + $0x10] sm:$0xf]
  %v716 = vld [vmem:[%s5 + $0x14] sm:$0xf]
  %v717 = vld [vmem:[%s5 + $0x18] sm:$0xf]
  %v718 = vld [vmem:[%s5 + $0x1c] sm:$0xf]
  %v719 = vld [vmem:[%s5 + $0x20] sm:$0xf]
  %v720 = vld [vmem:[%s5 + $0x24] sm:$0xf]
  %v721 = vld [vmem:[%s5 + $0x28] sm:$0xf]
  %v722 = vld [vmem:[%s5 + $0x2c] sm:$0xf]
  %v723 = vld [vmem:[%s5 + $0x30] sm:$0xf]
  %v724 = vld [vmem:[%s5 + $0x34] sm:$0xf]
  %v725 = vld [vmem:[%s5 + $0x38] sm:$0xf]
  %v726 = vld [vmem:[%s5 + $0x3c] sm:$0xf]
  %v727 = vld [vmem:[%s6] sm:$0x1]
  %v729 = vperm.slane %v727, 0
  %v747 = vunpack.c.l.b16 %v711
  %v748 = vunpack.c.l.b16 %v712
  %v749 = vunpack.c.l.b16 %v713
  %v750 = vunpack.c.l.b16 %v714
  %v751 = vunpack.c.l.b16 %v715
  %v752 = vunpack.c.l.b16 %v716
  %v753 = vunpack.c.l.b16 %v717
  %v754 = vunpack.c.l.b16 %v718
  %v755 = vunpack.c.l.b16 %v719
  %v756 = vunpack.c.l.b16 %v720
  %v757 = vunpack.c.l.b16 %v721
  %v758 = vunpack.c.l.b16 %v722
  %v759 = vunpack.c.l.b16 %v723
  %v760 = vunpack.c.l.b16 %v724
  %v761 = vunpack.c.l.b16 %v725
  %v762 = vunpack.c.l.b16 %v726
  %v763 = vpack.c.b16 %v748, %v747
  %v764 = vpack.c.b16 %v750, %v749
  %v765 = vpack.c.b16 %v752, %v751
  %v766 = vpack.c.b16 %v754, %v753
  %v767 = vpack.c.b16 %v756, %v755
  %v768 = vpack.c.b16 %v758, %v757
  %v769 = vpack.c.b16 %v760, %v759
  %v770 = vpack.c.b16 %v762, %v761
  %779 = vmatpush.bf16.msra.mxu0 %v770
  %780 = vmatpush.bf16.msra.mxu0 %v769
  %781 = vmatpush.bf16.msra.mxu0 %v768
  %782 = vmatpush.bf16.msra.mxu0 %v767
  %783 = vmatpush.bf16.msra.mxu0 %v766
  %784 = vmatpush.bf16.msra.mxu0 %v765
  %785 = vmatpush.bf16.msra.mxu0 %v764
  %786 = vmatpush.bf16.msra.mxu0 %v763
  %787 = vmatmul.bf16.gmra.mxu0 %v710
  %v788 = vpop.f32.mrf.mxu0
  %v789 = vadd.f32 %v729, %v788
  %v790 = vpop.f32.mrf.mxu0
  %v791 = vadd.f32 %v729, %v790
  %792 = vdwg.mxu0
  %vm793 = vcmp.gt.f32.partialorder %v789, 0.0
  %vm794 = vcmp.gt.f32.partialorder %v791, 0.0
  %v795 = vmin.f32 %v789, 0.0
  %v796 = vmin.f32 %v791, 0.0
  %v797 = vmul.f32 %v795, 1.442695
  %v798 = vpow.pop %v797
  %v799 = vmul.f32 %v796, 1.442695
  %v800 = vpow.pop %v799
  %v801 = vsub.f32 %v798, 1.0
  %v802 = vsub.f32 %v800, 1.0
  %v803 = vsel %vm793, %v789, %v801
  %v804 = vsel %vm794, %v791, %v802
  %v805 = vpack.c.bf16 %v803, %v803
  %v806 = vpack.c.bf16 %v804, %v804
  %v809 = vrot.slane %v805, 3
  %v810 = vrot.slane %v806, 3
  %vm811 = vcmask 1040384
  %v814 = vsel %vm811, %v805, %v809
  %vm815 = vcmask 1041409
  %v816 = vsel %vm815, %v805, %v809
  %v818 = vrot.slane %v816, 1
  %vm819 = vcmask 1042434
  %v820 = vsel %vm819, %v805, %v809
  %v822 = vrot.slane %v820, 2
  %vm823 = vcmask 1043459
  %v824 = vsel %vm823, %v805, %v809
  %v826 = vrot.slane %v824, 3
  %v829 = vsel %vm811, %v806, %v810
  %v830 = vsel %vm815, %v806, %v810
  %v832 = vrot.slane %v830, 1
  %v833 = vld [vmem:[%s4] sm:$0x3f]
  %v834 = vld [vmem:[%s4 + $0x8] sm:$0x3f]
  %v837 = vrot.slane %v833, 2
  %v838 = vrot.slane %v833, 4
  %v839 = vrot.slane %v834, 2
  %v840 = vrot.slane %v834, 4
  %841 = vst [vmem:[#allocation1] ss:$4 sm:$0xff] %v833
  %s842 = scalar_lea.vmem [#allocation1], 1
  %843 = vst [vmem:[%s842] ss:$4 sm:$0xff] %v837
  %s844 = scalar_lea.vmem [#allocation1], 2
  %845 = vst [vmem:[%s844] ss:$4 sm:$0xff] %v838
  %s846 = scalar_lea.vmem [#allocation1], 3
  %847 = vst [vmem:[%s846] ss:$4 sm:$0xff] %v834
  %s848 = scalar_lea.vmem [#allocation1], 32
  %849 = vst [vmem:[%s848] ss:$4 sm:$0xff] %v839
  %s850 = scalar_lea.vmem [#allocation1], 33
  %851 = vst [vmem:[%s850] ss:$4 sm:$0xff] %v840
  %v852 = vld.sshfl [vmem:[#allocation1] sm:$0xff pattern:$0x73625140]
  %v853 = vld.sshfl [vmem:[#allocation1 + $0x20] sm:$0xff pattern:$0x73625140]
  %v856 = vpack.c.bf16 %v853, %v852
  %v857 = vld [vmem:[%s7] sm:$0xf]
  %v858 = vld [vmem:[%s7 + $0x4] sm:$0xf]
  %v859 = vld [vmem:[%s7 + $0x8] sm:$0xf]
  %v860 = vld [vmem:[%s7 + $0xc] sm:$0xf]
  %v861 = vld [vmem:[%s8] sm:$0x1]
  %v863 = vperm.slane %v861, 0
  %v869 = vunpack.c.l.b16 %v857
  %v870 = vunpack.c.l.b16 %v858
  %v871 = vunpack.c.l.b16 %v859
  %v872 = vunpack.c.l.b16 %v860
  %v873 = vpack.c.b16 %v870, %v869
  %v874 = vpack.c.b16 %v872, %v871
  %v878 = vsel %vm79, %v856, 0
  %880 = vmatpush.bf16.msra.mxu0 0
  %881 = vmatpush.bf16.msra.mxu0 0
  %882 = vmatpush.bf16.msra.mxu0 0
  %883 = vmatpush.bf16.msra.mxu0 0
  %884 = vmatpush.bf16.msra.mxu0 0
  %885 = vmatpush.bf16.msra.mxu0 0
  %886 = vmatpush.bf16.msra.mxu0 %v874
  %887 = vmatpush.bf16.msra.mxu0 %v873
  %888 = vmatmul.bf16.gmra.mxu0 %v878
  %v889 = vpop.f32.mrf.mxu0
  %v890 = vadd.f32 %v863, %v889
  %v891 = vpop.f32.mrf.mxu0
  %v892 = vadd.f32 %v863, %v891
  %893 = vdwg.mxu0
  %vm894 = vcmp.gt.f32.partialorder %v890, 0.0
  %vm895 = vcmp.gt.f32.partialorder %v892, 0.0
  %v896 = vmin.f32 %v890, 0.0
  %v897 = vmin.f32 %v892, 0.0
  %v898 = vmul.f32 %v896, 1.442695
  %v899 = vpow.pop %v898
  %v900 = vmul.f32 %v897, 1.442695
  %v901 = vpow.pop %v900
  %v902 = vsub.f32 %v899, 1.0
  %v903 = vsub.f32 %v901, 1.0
  %v904 = vsel %vm894, %v890, %v902
  %v905 = vsel %vm895, %v892, %v903
  %v906 = vpack.c.bf16 %v904, %v904
  %v907 = vpack.c.bf16 %v905, %v905
  %v910 = vrot.slane %v906, 3
  %v911 = vrot.slane %v907, 3
  %v914 = vsel %vm811, %v906, %v910
  %v915 = vsel %vm815, %v906, %v910
  %v917 = vrot.slane %v915, 1
  %v918 = vsel %vm819, %v906, %v910
  %v920 = vrot.slane %v918, 2
  %v921 = vsel %vm823, %v906, %v910
  %v923 = vrot.slane %v921, 3
  %v926 = vsel %vm811, %v907, %v911
  %v927 = vsel %vm815, %v907, %v911
  %v929 = vrot.slane %v927, 1
  %v930 = vld [vmem:[%s9] sm:$0xf]
  %v931 = vld [vmem:[%s9 + $0x4] sm:$0xf]
  %v932 = vld [vmem:[%s9 + $0x8] sm:$0xf]
  %v933 = vld [vmem:[%s9 + $0xc] sm:$0xf]
  %v934 = vld [vmem:[%s9 + $0x10] sm:$0xf]
  %v935 = vld [vmem:[%s9 + $0x14] sm:$0xf]
  %v936 = vld [vmem:[%s9 + $0x18] sm:$0xf]
  %v937 = vld [vmem:[%s9 + $0x1c] sm:$0xf]
  %v938 = vld [vmem:[%s10] sm:$0x1]
  %v939 = vld [vmem:[%s11] sm:$0xf]
  %v940 = vld [vmem:[%s11 + $0x4] sm:$0xf]
  %v941 = vld [vmem:[%s11 + $0x8] sm:$0xf]
  %v942 = vld [vmem:[%s11 + $0xc] sm:$0xf]
  %v943 = vld [vmem:[%s11 + $0x10] sm:$0xf]
  %v944 = vld [vmem:[%s11 + $0x14] sm:$0xf]
  %v945 = vld [vmem:[%s11 + $0x18] sm:$0xf]
  %v946 = vld [vmem:[%s11 + $0x1c] sm:$0xf]
  %v947 = vld [vmem:[%s12] sm:$0xf]
  %v948 = vld [vmem:[%s12 + $0x4] sm:$0xf]
  %v949 = vld [vmem:[%s12 + $0x8] sm:$0xf]
  %v950 = vld [vmem:[%s12 + $0xc] sm:$0xf]
  %v951 = vld [vmem:[%s12 + $0x10] sm:$0xf]
  %v952 = vld [vmem:[%s12 + $0x14] sm:$0xf]
  %v953 = vld [vmem:[%s12 + $0x18] sm:$0xf]
  %v954 = vld [vmem:[%s12 + $0x1c] sm:$0xf]
  %v955 = vld [vmem:[%s13] sm:$0xf]
  %v956 = vld [vmem:[%s13 + $0x4] sm:$0xf]
  %v957 = vld [vmem:[%s13 + $0x8] sm:$0xf]
  %v958 = vld [vmem:[%s13 + $0xc] sm:$0xf]
  %v959 = vld [vmem:[%s13 + $0x10] sm:$0xf]
  %v960 = vld [vmem:[%s13 + $0x14] sm:$0xf]
  %v961 = vld [vmem:[%s13 + $0x18] sm:$0xf]
  %v962 = vld [vmem:[%s13 + $0x1c] sm:$0xf]
  %v963 = vld [vmem:[%s14] sm:$0xf]
  %v964 = vld [vmem:[%s14 + $0x4] sm:$0xf]
  %v965 = vld [vmem:[%s14 + $0x8] sm:$0xf]
  %v966 = vld [vmem:[%s14 + $0xc] sm:$0xf]
  %v967 = vld [vmem:[%s14 + $0x10] sm:$0xf]
  %v968 = vld [vmem:[%s14 + $0x14] sm:$0xf]
  %v969 = vld [vmem:[%s14 + $0x18] sm:$0xf]
  %v970 = vld [vmem:[%s14 + $0x1c] sm:$0xf]
  %v972 = vunpack.c.l.b16 %v661
  %v973 = vpack.c.b16 %v972, %v972
  %974 = vrot.lane.b32.xlu0 %v973, 32
  %v975 = vpop.permute.xlu0 %974
  %976 = vrot.lane.b32.xlu0 %v973, 64
  %v977 = vpop.permute.xlu0 %976
  %v980 = vsel %vm79, %v975, %v977
  %v989 = vunpack.c.l.b16 %v930
  %v990 = vunpack.c.l.b16 %v931
  %v991 = vunpack.c.l.b16 %v932
  %v992 = vunpack.c.l.b16 %v933
  %v993 = vunpack.c.l.b16 %v934
  %v994 = vunpack.c.l.b16 %v935
  %v995 = vunpack.c.l.b16 %v936
  %v996 = vunpack.c.l.b16 %v937
  %v997 = vpack.c.b16 %v990, %v989
  %v998 = vpack.c.b16 %v992, %v991
  %v999 = vpack.c.b16 %v994, %v993
  %v1000 = vpack.c.b16 %v996, %v995
  %v1005 = vsel %vm107, %v980, 0
  %1007 = vmatpush.bf16.msra.mxu0 0
  %1008 = vmatpush.bf16.msra.mxu0 0
  %1009 = vmatpush.bf16.msra.mxu0 0
  %1010 = vmatpush.bf16.msra.mxu0 0
  %1011 = vmatpush.bf16.msra.mxu0 %v1000
  %1012 = vmatpush.bf16.msra.mxu0 %v999
  %1013 = vmatpush.bf16.msra.mxu0 %v998
  %1014 = vmatpush.bf16.msra.mxu0 %v997
  %1015 = vmatmul.bf16.gmra.mxu0 %v1005
  %v1016 = vpop.f32.mrf.mxu0
  %v1017 = vadd.f32 0.0, %v1016
  %v1018 = vpop.f32.mrf.mxu0
  %1019 = vdwg.mxu0
  %v1021 = vperm.slane %v938, 0
  %v1023 = vmul.f32 %v1017, %v1021
  %v1024 = vmul.f32 %v1023, 0.17677669
  %v1026 = vrot.slane %v1024, 1
  %v1028 = vpack.c.bf16 %v1024, %v1024
  %v1029 = vpack.c.bf16 %v1026, %v1026
  %v1031 = vsel %vm79, %v1028, 0
  %v1034 = vsel %vm79, %v685, 0
  %1036 = vmatpush.bf16.xpose.msra.mxu0 0
  %1037 = vmatpush.bf16.xpose.msra.mxu0 0
  %1038 = vmatpush.bf16.xpose.msra.mxu0 0
  %1039 = vmatpush.bf16.xpose.msra.mxu0 0
  %1040 = vmatpush.bf16.xpose.msra.mxu0 0
  %1041 = vmatpush.bf16.xpose.msra.mxu0 0
  %1042 = vmatpush.bf16.xpose.msra.mxu0 0
  %1043 = vmatpush.bf16.xpose.msra.mxu0 %v1034
  %1044 = vmatmul.bf16.gmra.mxu0 %v1031
  %v1045 = vpop.f32.mrf.mxu0
  %v1046 = vadd.f32 0.0, %v1045
  %v1047 = vpop.f32.mrf.mxu0
  %1048 = vdwg.mxu0
  %v1050 = vsel %vm79, %v1029, 0
  %v1053 = vsel %vm79, %v686, 0
  %1055 = vmatpush.bf16.xpose.msra.mxu0 0
  %1056 = vmatpush.bf16.xpose.msra.mxu0 0
  %1057 = vmatpush.bf16.xpose.msra.mxu0 0
  %1058 = vmatpush.bf16.xpose.msra.mxu0 0
  %1059 = vmatpush.bf16.xpose.msra.mxu0 0
  %1060 = vmatpush.bf16.xpose.msra.mxu0 0
  %1061 = vmatpush.bf16.xpose.msra.mxu0 0
  %1062 = vmatpush.bf16.xpose.msra.mxu0 %v1053
  %1063 = vmatmul.bf16.gmra.mxu0 %v1050
  %v1064 = vpop.f32.mrf.mxu0
  %v1065 = vadd.f32 0.0, %v1064
  %v1066 = vpop.f32.mrf.mxu0
  %1067 = vdwg.mxu0
  %vm1068 = vcmask 57344
  %v1069 = vsel %vm1068, %v1046, -inf
  %1070 = vmax.xlane.f32.xlu0 %v1069
  %v1071 = vpop.xlane.xlu0 %1070
  %v1072 = vsel %vm1068, %v1065, -inf
  %1073 = vmax.xlane.f32.xlu0 %v1072
  %v1074 = vpop.xlane.xlu0 %1073
  %v1075 = vsub.f32 %v1046, %v1071
  %v1076 = vsub.f32 %v1065, %v1074
  %v1077 = vmul.f32 %v1075, 1.442695
  %v1078 = vpow.pop %v1077
  %v1079 = vmul.f32 %v1076, 1.442695
  %v1080 = vpow.pop %v1079
  %v1081 = vsel %vm1068, %v1078, 0.0
  %1082 = vadd.xlane.f32.xlu0 %v1081
  %v1083 = vpop.xlane.xlu0 %1082
  %v1084 = vsel %vm1068, %v1080, 0.0
  %1085 = vadd.xlane.f32.xlu0 %v1084
  %v1086 = vpop.xlane.xlu0 %1085
  %v1087 = vrcp.pop %v1083
  %v1088 = vrcp.pop %v1086
  %v1089 = vmul.f32 %v1078, %v1087
  %v1090 = vmul.f32 %v1080, %v1088
  %v1091 = vpack.c.bf16 %v1089, %v1089
  %v1092 = vpack.c.bf16 %v1090, %v1090
  %vm1093 = vcmask 64512
  %v1095 = vsel %vm1093, %v1091, 0
  %vm1097 = vcmask 1043456
  %v1098 = vsel %vm1097, %v685, 0
  %1100 = vmatpush.bf16.msra.mxu0 0
  %1101 = vmatpush.bf16.msra.mxu0 0
  %1102 = vmatpush.bf16.msra.mxu0 0
  %1103 = vmatpush.bf16.msra.mxu0 0
  %1104 = vmatpush.bf16.msra.mxu0 0
  %1105 = vmatpush.bf16.msra.mxu0 0
  %1106 = vmatpush.bf16.msra.mxu0 0
  %1107 = vmatpush.bf16.msra.mxu0 %v1098
  %1108 = vmatmul.bf16.gmra.mxu0 %v1095
  %v1109 = vpop.f32.mrf.mxu0
  %v1110 = vadd.f32 0.0, %v1109
  %v1111 = vpop.f32.mrf.mxu0
  %1112 = vdwg.mxu0
  %v1114 = vsel %vm1093, %v1092, 0
  %v1116 = vsel %vm1097, %v686, 0
  %1118 = vmatpush.bf16.msra.mxu0 0
  %1119 = vmatpush.bf16.msra.mxu0 0
  %1120 = vmatpush.bf16.msra.mxu0 0
  %1121 = vmatpush.bf16.msra.mxu0 0
  %1122 = vmatpush.bf16.msra.mxu0 0
  %1123 = vmatpush.bf16.msra.mxu0 0
  %1124 = vmatpush.bf16.msra.mxu0 0
  %1125 = vmatpush.bf16.msra.mxu0 %v1116
  %1126 = vmatmul.bf16.gmra.mxu0 %v1114
  %v1127 = vpop.f32.mrf.mxu0
  %v1128 = vadd.f32 0.0, %v1127
  %v1129 = vpop.f32.mrf.mxu0
  %1130 = vdwg.mxu0
  %v1131 = vpack.c.bf16 %v1110, %v1110
  %v1132 = vpack.c.bf16 %v1128, %v1128
  %v1135 = vunpack.c.l.b16 %v1131
  %v1136 = vunpack.c.l.b16 %v1132
  %v1137 = vpack.c.b16 %v1135, %v1135
  %v1138 = vpack.c.b16 %v1136, %v1136
  %v1139 = vunpack.c.l.b16 %v1137
  %v1140 = vunpack.c.l.b16 %v1138
  %v1141 = vrot.slane %v1140, 7
  %v1142 = vsel %vm815, %v1141, %v1139
  %v1143 = vpack.c.b16 %v1142, %v1142
  %1144 = vrot.lane.b32.xlu0 %v1143, 32
  %v1145 = vpop.permute.xlu0 %1144
  %v1147 = vsel %vm79, 0, %v1145
  %v1156 = vunpack.c.l.b16 %v939
  %v1157 = vunpack.c.l.b16 %v940
  %v1158 = vunpack.c.l.b16 %v941
  %v1159 = vunpack.c.l.b16 %v942
  %v1160 = vunpack.c.l.b16 %v943
  %v1161 = vunpack.c.l.b16 %v944
  %v1162 = vunpack.c.l.b16 %v945
  %v1163 = vunpack.c.l.b16 %v946
  %v1164 = vpack.c.b16 %v1157, %v1156
  %v1165 = vpack.c.b16 %v1159, %v1158
  %v1166 = vpack.c.b16 %v1161, %v1160
  %v1167 = vpack.c.b16 %v1163, %v1162
  %v1172 = vsel %vm107, %v1147, 0
  %1174 = vmatpush.bf16.msra.mxu0 0
  %1175 = vmatpush.bf16.msra.mxu0 0
  %1176 = vmatpush.bf16.msra.mxu0 0
  %1177 = vmatpush.bf16.msra.mxu0 0
  %1178 = vmatpush.bf16.msra.mxu0 %v1167
  %1179 = vmatpush.bf16.msra.mxu0 %v1166
  %1180 = vmatpush.bf16.msra.mxu0 %v1165
  %1181 = vmatpush.bf16.msra.mxu0 %v1164
  %1182 = vmatmul.bf16.gmra.mxu0 %v1172
  %v1183 = vpop.f32.mrf.mxu0
  %v1184 = vadd.f32 0.0, %v1183
  %v1185 = vpop.f32.mrf.mxu0
  %1186 = vdwg.mxu0
  %v1187 = vmul.f32 %v1184, 0.17677669
  %v1189 = vrot.slane %v1187, 1
  %v1191 = vpack.c.bf16 %v1187, %v1187
  %v1192 = vpack.c.bf16 %v1189, %v1189
  %1193 = vst [vmem:[#allocation1] ss:$9 sm:$0xff] %v814
  %s1195 = scalar_lea.vmem [#allocation1], 1
  %1196 = vst [vmem:[%s1195] ss:$9 sm:$0xff] %v818
  %s1198 = scalar_lea.vmem [#allocation1], 2
  %1199 = vst [vmem:[%s1198] ss:$9 sm:$0xff] %v822
  %v1200 = vld [vmem:[#allocation1] sm:$0xff]
  %v1202 = vsel %vm79, %v1191, 0
  %v1204 = vsel %vm79, %v1200, 0
  %1206 = vmatpush.bf16.xpose.msra.mxu0 0
  %1207 = vmatpush.bf16.xpose.msra.mxu0 0
  %1208 = vmatpush.bf16.xpose.msra.mxu0 0
  %1209 = vmatpush.bf16.xpose.msra.mxu0 0
  %1210 = vmatpush.bf16.xpose.msra.mxu0 0
  %1211 = vmatpush.bf16.xpose.msra.mxu0 0
  %1212 = vmatpush.bf16.xpose.msra.mxu0 0
  %1213 = vmatpush.bf16.xpose.msra.mxu0 %v1204
  %1214 = vmatmul.bf16.gmra.mxu0 %v1202
  %v1215 = vpop.f32.mrf.mxu0
  %v1216 = vadd.f32 0.0, %v1215
  %v1217 = vpop.f32.mrf.mxu0
  %1218 = vdwg.mxu0
  %1220 = vst [vmem:[#allocation1] ss:$9 sm:$0xff] %v826
  %s1221 = scalar_lea.vmem [#allocation1], 1
  %1222 = vst [vmem:[%s1221] ss:$9 sm:$0xff] %v829
  %s1224 = scalar_lea.vmem [#allocation1], 2
  %1225 = vst [vmem:[%s1224] ss:$9 sm:$0xff] %v832
  %v1226 = vld [vmem:[#allocation1] sm:$0xff]
  %v1228 = vsel %vm79, %v1192, 0
  %v1230 = vsel %vm79, %v1226, 0
  %1232 = vmatpush.bf16.xpose.msra.mxu0 0
  %1233 = vmatpush.bf16.xpose.msra.mxu0 0
  %1234 = vmatpush.bf16.xpose.msra.mxu0 0
  %1235 = vmatpush.bf16.xpose.msra.mxu0 0
  %1236 = vmatpush.bf16.xpose.msra.mxu0 0
  %1237 = vmatpush.bf16.xpose.msra.mxu0 0
  %1238 = vmatpush.bf16.xpose.msra.mxu0 0
  %1239 = vmatpush.bf16.xpose.msra.mxu0 %v1230
  %1240 = vmatmul.bf16.gmra.mxu0 %v1228
  %v1241 = vpop.f32.mrf.mxu0
  %v1242 = vadd.f32 0.0, %v1241
  %v1243 = vpop.f32.mrf.mxu0
  %1244 = vdwg.mxu0
  %vm1245 = vcmask 40960
  %v1246 = vsel %vm1245, %v1216, -inf
  %1247 = vmax.xlane.f32.xlu0 %v1246
  %v1248 = vpop.xlane.xlu0 %1247
  %v1249 = vsel %vm1245, %v1242, -inf
  %1250 = vmax.xlane.f32.xlu0 %v1249
  %v1251 = vpop.xlane.xlu0 %1250
  %v1252 = vsub.f32 %v1216, %v1248
  %v1253 = vsub.f32 %v1242, %v1251
  %v1254 = vmul.f32 %v1252, 1.442695
  %v1255 = vpow.pop %v1254
  %v1256 = vmul.f32 %v1253, 1.442695
  %v1257 = vpow.pop %v1256
  %v1258 = vsel %vm1245, %v1255, 0.0
  %1259 = vadd.xlane.f32.xlu0 %v1258
  %v1260 = vpop.xlane.xlu0 %1259
  %v1261 = vsel %vm1245, %v1257, 0.0
  %1262 = vadd.xlane.f32.xlu0 %v1261
  %v1263 = vpop.xlane.xlu0 %1262
  %v1264 = vrcp.pop %v1260
  %v1265 = vrcp.pop %v1263
  %v1266 = vmul.f32 %v1255, %v1264
  %v1267 = vmul.f32 %v1257, %v1265
  %v1268 = vpack.c.bf16 %v1266, %v1266
  %v1269 = vpack.c.bf16 %v1267, %v1267
  %1270 = vst [vmem:[#allocation1] ss:$9 sm:$0xff] %v814
  %s1271 = scalar_lea.vmem [#allocation1], 1
  %1272 = vst [vmem:[%s1271] ss:$9 sm:$0xff] %v818
  %s1273 = scalar_lea.vmem [#allocation1], 2
  %1274 = vst [vmem:[%s1273] ss:$9 sm:$0xff] %v822
  %v1275 = vld [vmem:[#allocation1] sm:$0xff]
  %vm1276 = vcmask 48128
  %v1278 = vsel %vm1276, %v1268, 0
  %vm1280 = vcmask 1042432
  %v1281 = vsel %vm1280, %v1275, 0
  %1283 = vmatpush.bf16.msra.mxu0 0
  %1284 = vmatpush.bf16.msra.mxu0 0
  %1285 = vmatpush.bf16.msra.mxu0 0
  %1286 = vmatpush.bf16.msra.mxu0 0
  %1287 = vmatpush.bf16.msra.mxu0 0
  %1288 = vmatpush.bf16.msra.mxu0 0
  %1289 = vmatpush.bf16.msra.mxu0 0
  %1290 = vmatpush.bf16.msra.mxu0 %v1281
  %1291 = vmatmul.bf16.gmra.mxu0 %v1278
  %v1292 = vpop.f32.mrf.mxu0
  %v1293 = vadd.f32 0.0, %v1292
  %v1294 = vpop.f32.mrf.mxu0
  %1295 = vdwg.mxu0
  %1296 = vst [vmem:[#allocation1] ss:$9 sm:$0xff] %v826
  %s1297 = scalar_lea.vmem [#allocation1], 1
  %1298 = vst [vmem:[%s1297] ss:$9 sm:$0xff] %v829
  %s1299 = scalar_lea.vmem [#allocation1], 2
  %1300 = vst [vmem:[%s1299] ss:$9 sm:$0xff] %v832
  %v1301 = vld [vmem:[#allocation1] sm:$0xff]
  %v1303 = vsel %vm1276, %v1269, 0
  %v1305 = vsel %vm1280, %v1301, 0
  %1307 = vmatpush.bf16.msra.mxu0 0
  %1308 = vmatpush.bf16.msra.mxu0 0
  %1309 = vmatpush.bf16.msra.mxu0 0
  %1310 = vmatpush.bf16.msra.mxu0 0
  %1311 = vmatpush.bf16.msra.mxu0 0
  %1312 = vmatpush.bf16.msra.mxu0 0
  %1313 = vmatpush.bf16.msra.mxu0 0
  %1314 = vmatpush.bf16.msra.mxu0 %v1305
  %1315 = vmatmul.bf16.gmra.mxu0 %v1303
  %v1316 = vpop.f32.mrf.mxu0
  %v1317 = vadd.f32 0.0, %v1316
  %v1318 = vpop.f32.mrf.mxu0
  %1319 = vdwg.mxu0
  %v1320 = vpack.c.bf16 %v1293, %v1293
  %v1321 = vpack.c.bf16 %v1317, %v1317
  %v1324 = vunpack.c.l.b16 %v1320
  %v1325 = vunpack.c.l.b16 %v1321
  %v1326 = vpack.c.b16 %v1324, %v1324
  %v1327 = vpack.c.b16 %v1325, %v1325
  %v1328 = vunpack.c.l.b16 %v1326
  %v1329 = vunpack.c.l.b16 %v1327
  %v1330 = vrot.slane %v1329, 7
  %v1331 = vsel %vm815, %v1330, %v1328
  %v1332 = vpack.c.b16 %v1331, %v1331
  %v1334 = vsel %vm79, %v1332, 0
  %v1343 = vunpack.c.l.b16 %v947
  %v1344 = vunpack.c.l.b16 %v948
  %v1345 = vunpack.c.l.b16 %v949
  %v1346 = vunpack.c.l.b16 %v950
  %v1347 = vunpack.c.l.b16 %v951
  %v1348 = vunpack.c.l.b16 %v952
  %v1349 = vunpack.c.l.b16 %v953
  %v1350 = vunpack.c.l.b16 %v954
  %v1351 = vpack.c.b16 %v1344, %v1343
  %v1352 = vpack.c.b16 %v1346, %v1345
  %v1353 = vpack.c.b16 %v1348, %v1347
  %v1354 = vpack.c.b16 %v1350, %v1349
  %v1359 = vsel %vm107, %v1334, 0
  %1361 = vmatpush.bf16.msra.mxu0 0
  %1362 = vmatpush.bf16.msra.mxu0 0
  %1363 = vmatpush.bf16.msra.mxu0 0
  %1364 = vmatpush.bf16.msra.mxu0 0
  %1365 = vmatpush.bf16.msra.mxu0 %v1354
  %1366 = vmatpush.bf16.msra.mxu0 %v1353
  %1367 = vmatpush.bf16.msra.mxu0 %v1352
  %1368 = vmatpush.bf16.msra.mxu0 %v1351
  %1369 = vmatmul.bf16.gmra.mxu0 %v1359
  %v1370 = vpop.f32.mrf.mxu0
  %v1371 = vadd.f32 0.0, %v1370
  %v1372 = vpop.f32.mrf.mxu0
  %1373 = vdwg.mxu0
  %v1382 = vunpack.c.l.b16 %v955
  %v1383 = vunpack.c.l.b16 %v956
  %v1384 = vunpack.c.l.b16 %v957
  %v1385 = vunpack.c.l.b16 %v958
  %v1386 = vunpack.c.l.b16 %v959
  %v1387 = vunpack.c.l.b16 %v960
  %v1388 = vunpack.c.l.b16 %v961
  %v1389 = vunpack.c.l.b16 %v962
  %v1390 = vpack.c.b16 %v1383, %v1382
  %v1391 = vpack.c.b16 %v1385, %v1384
  %v1392 = vpack.c.b16 %v1387, %v1386
  %v1393 = vpack.c.b16 %v1389, %v1388
  %1398 = vmatpush.bf16.msra.mxu0 0
  %1399 = vmatpush.bf16.msra.mxu0 0
  %1400 = vmatpush.bf16.msra.mxu0 0
  %1401 = vmatpush.bf16.msra.mxu0 0
  %1402 = vmatpush.bf16.msra.mxu0 %v1393
  %1403 = vmatpush.bf16.msra.mxu0 %v1392
  %1404 = vmatpush.bf16.msra.mxu0 %v1391
  %1405 = vmatpush.bf16.msra.mxu0 %v1390
  %1406 = vmatmul.bf16.gmra.mxu0 %v1172
  %v1407 = vpop.f32.mrf.mxu0
  %v1408 = vadd.f32 0.0, %v1407
  %v1409 = vpop.f32.mrf.mxu0
  %1410 = vdwg.mxu0
  %v1411 = vmul.f32 %v1408, 0.17677669
  %v1413 = vrot.slane %v1411, 1
  %v1415 = vpack.c.bf16 %v1411, %v1411
  %v1416 = vpack.c.bf16 %v1413, %v1413
  %1417 = vst [vmem:[#allocation1] ss:$9 sm:$0xff] %v914
  %s1419 = scalar_lea.vmem [#allocation1], 1
  %1420 = vst [vmem:[%s1419] ss:$9 sm:$0xff] %v917
  %s1422 = scalar_lea.vmem [#allocation1], 2
  %1423 = vst [vmem:[%s1422] ss:$9 sm:$0xff] %v920
  %v1424 = vld [vmem:[#allocation1] sm:$0xff]
  %v1426 = vsel %vm79, %v1415, 0
  %v1428 = vsel %vm79, %v1424, 0
  %1430 = vmatpush.bf16.xpose.msra.mxu0 0
  %1431 = vmatpush.bf16.xpose.msra.mxu0 0
  %1432 = vmatpush.bf16.xpose.msra.mxu0 0
  %1433 = vmatpush.bf16.xpose.msra.mxu0 0
  %1434 = vmatpush.bf16.xpose.msra.mxu0 0
  %1435 = vmatpush.bf16.xpose.msra.mxu0 0
  %1436 = vmatpush.bf16.xpose.msra.mxu0 0
  %1437 = vmatpush.bf16.xpose.msra.mxu0 %v1428
  %1438 = vmatmul.bf16.gmra.mxu0 %v1426
  %v1439 = vpop.f32.mrf.mxu0
  %v1440 = vadd.f32 0.0, %v1439
  %v1441 = vpop.f32.mrf.mxu0
  %1442 = vdwg.mxu0
  %1444 = vst [vmem:[#allocation1] ss:$9 sm:$0xff] %v923
  %s1445 = scalar_lea.vmem [#allocation1], 1
  %1446 = vst [vmem:[%s1445] ss:$9 sm:$0xff] %v926
  %s1448 = scalar_lea.vmem [#allocation1], 2
  %1449 = vst [vmem:[%s1448] ss:$9 sm:$0xff] %v929
  %v1450 = vld [vmem:[#allocation1] sm:$0xff]
  %v1452 = vsel %vm79, %v1416, 0
  %v1454 = vsel %vm79, %v1450, 0
  %1456 = vmatpush.bf16.xpose.msra.mxu0 0
  %1457 = vmatpush.bf16.xpose.msra.mxu0 0
  %1458 = vmatpush.bf16.xpose.msra.mxu0 0
  %1459 = vmatpush.bf16.xpose.msra.mxu0 0
  %1460 = vmatpush.bf16.xpose.msra.mxu0 0
  %1461 = vmatpush.bf16.xpose.msra.mxu0 0
  %1462 = vmatpush.bf16.xpose.msra.mxu0 0
  %1463 = vmatpush.bf16.xpose.msra.mxu0 %v1454
  %1464 = vmatmul.bf16.gmra.mxu0 %v1452
  %v1465 = vpop.f32.mrf.mxu0
  %v1466 = vadd.f32 0.0, %v1465
  %v1467 = vpop.f32.mrf.mxu0
  %1468 = vdwg.mxu0
  %v1469 = vsel %vm1245, %v1440, -inf
  %1470 = vmax.xlane.f32.xlu0 %v1469
  %v1471 = vpop.xlane.xlu0 %1470
  %v1472 = vsel %vm1245, %v1466, -inf
  %1473 = vmax.xlane.f32.xlu0 %v1472
  %v1474 = vpop.xlane.xlu0 %1473
  %v1475 = vsub.f32 %v1440, %v1471
  %v1476 = vsub.f32 %v1466, %v1474
  %v1477 = vmul.f32 %v1475, 1.442695
  %v1478 = vpow.pop %v1477
  %v1479 = vmul.f32 %v1476, 1.442695
  %v1480 = vpow.pop %v1479
  %v1481 = vsel %vm1245, %v1478, 0.0
  %1482 = vadd.xlane.f32.xlu0 %v1481
  %v1483 = vpop.xlane.xlu0 %1482
  %v1484 = vsel %vm1245, %v1480, 0.0
  %1485 = vadd.xlane.f32.xlu0 %v1484
  %v1486 = vpop.xlane.xlu0 %1485
  %v1487 = vrcp.pop %v1483
  %v1488 = vrcp.pop %v1486
  %v1489 = vmul.f32 %v1478, %v1487
  %v1490 = vmul.f32 %v1480, %v1488
  %v1491 = vpack.c.bf16 %v1489, %v1489
  %v1492 = vpack.c.bf16 %v1490, %v1490
  %1493 = vst [vmem:[#allocation1] ss:$9 sm:$0xff] %v914
  %s1494 = scalar_lea.vmem [#allocation1], 1
  %1495 = vst [vmem:[%s1494] ss:$9 sm:$0xff] %v917
  %s1496 = scalar_lea.vmem [#allocation1], 2
  %1497 = vst [vmem:[%s1496] ss:$9 sm:$0xff] %v920
  %v1498 = vld [vmem:[#allocation1] sm:$0xff]
  %v1500 = vsel %vm1276, %v1491, 0
  %v1502 = vsel %vm1280, %v1498, 0
  %1504 = vmatpush.bf16.msra.mxu0 0
  %1505 = vmatpush.bf16.msra.mxu0 0
  %1506 = vmatpush.bf16.msra.mxu0 0
  %1507 = vmatpush.bf16.msra.mxu0 0
  %1508 = vmatpush.bf16.msra.mxu0 0
  %1509 = vmatpush.bf16.msra.mxu0 0
  %1510 = vmatpush.bf16.msra.mxu0 0
  %1511 = vmatpush.bf16.msra.mxu0 %v1502
  %1512 = vmatmul.bf16.gmra.mxu0 %v1500
  %v1513 = vpop.f32.mrf.mxu0
  %v1514 = vadd.f32 0.0, %v1513
  %v1515 = vpop.f32.mrf.mxu0
  %1516 = vdwg.mxu0
  %1517 = vst [vmem:[#allocation1] ss:$9 sm:$0xff] %v923
  %s1518 = scalar_lea.vmem [#allocation1], 1
  %1519 = vst [vmem:[%s1518] ss:$9 sm:$0xff] %v926
  %s1520 = scalar_lea.vmem [#allocation1], 2
  %1521 = vst [vmem:[%s1520] ss:$9 sm:$0xff] %v929
  %v1522 = vld [vmem:[#allocation1] sm:$0xff]
  %v1524 = vsel %vm1276, %v1492, 0
  %v1526 = vsel %vm1280, %v1522, 0
  %1528 = vmatpush.bf16.msra.mxu0 0
  %1529 = vmatpush.bf16.msra.mxu0 0
  %1530 = vmatpush.bf16.msra.mxu0 0
  %1531 = vmatpush.bf16.msra.mxu0 0
  %1532 = vmatpush.bf16.msra.mxu0 0
  %1533 = vmatpush.bf16.msra.mxu0 0
  %1534 = vmatpush.bf16.msra.mxu0 0
  %1535 = vmatpush.bf16.msra.mxu0 %v1526
  %1536 = vmatmul.bf16.gmra.mxu0 %v1524
  %v1537 = vpop.f32.mrf.mxu0
  %v1538 = vadd.f32 0.0, %v1537
  %v1539 = vpop.f32.mrf.mxu0
  %1540 = vdwg.mxu0
  %v1541 = vpack.c.bf16 %v1514, %v1514
  %v1542 = vpack.c.bf16 %v1538, %v1538
  %v1545 = vunpack.c.l.b16 %v1541
  %v1546 = vunpack.c.l.b16 %v1542
  %v1547 = vpack.c.b16 %v1545, %v1545
  %v1548 = vpack.c.b16 %v1546, %v1546
  %v1549 = vunpack.c.l.b16 %v1547
  %v1550 = vunpack.c.l.b16 %v1548
  %v1551 = vrot.slane %v1550, 7
  %v1552 = vsel %vm815, %v1551, %v1549
  %v1553 = vpack.c.b16 %v1552, %v1552
  %v1555 = vsel %vm79, %v1553, 0
  %v1564 = vunpack.c.l.b16 %v963
  %v1565 = vunpack.c.l.b16 %v964
  %v1566 = vunpack.c.l.b16 %v965
  %v1567 = vunpack.c.l.b16 %v966
  %v1568 = vunpack.c.l.b16 %v967
  %v1569 = vunpack.c.l.b16 %v968
  %v1570 = vunpack.c.l.b16 %v969
  %v1571 = vunpack.c.l.b16 %v970
  %v1572 = vpack.c.b16 %v1565, %v1564
  %v1573 = vpack.c.b16 %v1567, %v1566
  %v1574 = vpack.c.b16 %v1569, %v1568
  %v1575 = vpack.c.b16 %v1571, %v1570
  %v1580 = vsel %vm107, %v1555, 0
  %1582 = vmatpush.bf16.msra.mxu0 0
  %1583 = vmatpush.bf16.msra.mxu0 0
  %1584 = vmatpush.bf16.msra.mxu0 0
  %1585 = vmatpush.bf16.msra.mxu0 0
  %1586 = vmatpush.bf16.msra.mxu0 %v1575
  %1587 = vmatpush.bf16.msra.mxu0 %v1574
  %1588 = vmatpush.bf16.msra.mxu0 %v1573
  %1589 = vmatpush.bf16.msra.mxu0 %v1572
  %1590 = vmatmul.bf16.gmra.mxu0 %v1580
  %v1591 = vpop.f32.mrf.mxu0
  %v1592 = vadd.f32 0.0, %v1591
  %v1593 = vpop.f32.mrf.mxu0
  %1594 = vdwg.mxu0
  %v1596 = vsel %vm79, %v1143, %v977
  %v1597 = vsel %vm107, %v1596, 0
  %1599 = vmatpush.bf16.msra.mxu0 0
  %1600 = vmatpush.bf16.msra.mxu0 0
  %1601 = vmatpush.bf16.msra.mxu0 0
  %1602 = vmatpush.bf16.msra.mxu0 0
  %1603 = vmatpush.bf16.msra.mxu0 %v1000
  %1604 = vmatpush.bf16.msra.mxu0 %v999
  %1605 = vmatpush.bf16.msra.mxu0 %v998
  %1606 = vmatpush.bf16.msra.mxu0 %v997
  %1607 = vmatmul.bf16.gmra.mxu0 %v1597
  %v1608 = vpop.f32.mrf.mxu0
  %v1609 = vadd.f32 0.0, %v1608
  %v1610 = vpop.f32.mrf.mxu0
  %1611 = vdwg.mxu0
  %v1612 = vmul.f32 %v1609, %v1021
  %v1613 = vmul.f32 %v1612, 0.17677669
  %v1615 = vrot.slane %v1613, 1
  %v1617 = vpack.c.bf16 %v1613, %v1613
  %v1618 = vpack.c.bf16 %v1615, %v1615
  %v1620 = vsel %vm79, %v1617, 0
  %1622 = vmatpush.bf16.xpose.msra.mxu0 0
  %1623 = vmatpush.bf16.xpose.msra.mxu0 0
  %1624 = vmatpush.bf16.xpose.msra.mxu0 0
  %1625 = vmatpush.bf16.xpose.msra.mxu0 0
  %1626 = vmatpush.bf16.xpose.msra.mxu0 0
  %1627 = vmatpush.bf16.xpose.msra.mxu0 0
  %1628 = vmatpush.bf16.xpose.msra.mxu0 0
  %1629 = vmatpush.bf16.xpose.msra.mxu0 %v1034
  %1630 = vmatmul.bf16.gmra.mxu0 %v1620
  %v1631 = vpop.f32.mrf.mxu0
  %v1632 = vadd.f32 0.0, %v1631
  %v1633 = vpop.f32.mrf.mxu0
  %1634 = vdwg.mxu0
  %v1636 = vsel %vm79, %v1618, 0
  %1638 = vmatpush.bf16.xpose.msra.mxu0 0
  %1639 = vmatpush.bf16.xpose.msra.mxu0 0
  %1640 = vmatpush.bf16.xpose.msra.mxu0 0
  %1641 = vmatpush.bf16.xpose.msra.mxu0 0
  %1642 = vmatpush.bf16.xpose.msra.mxu0 0
  %1643 = vmatpush.bf16.xpose.msra.mxu0 0
  %1644 = vmatpush.bf16.xpose.msra.mxu0 0
  %1645 = vmatpush.bf16.xpose.msra.mxu0 %v1053
  %1646 = vmatmul.bf16.gmra.mxu0 %v1636
  %v1647 = vpop.f32.mrf.mxu0
  %v1648 = vadd.f32 0.0, %v1647
  %v1649 = vpop.f32.mrf.mxu0
  %1650 = vdwg.mxu0
  %v1651 = vsel %vm1068, %v1632, -inf
  %1652 = vmax.xlane.f32.xlu0 %v1651
  %v1653 = vpop.xlane.xlu0 %1652
  %v1654 = vsel %vm1068, %v1648, -inf
  %1655 = vmax.xlane.f32.xlu0 %v1654
  %v1656 = vpop.xlane.xlu0 %1655
  %v1657 = vsub.f32 %v1632, %v1653
  %v1658 = vsub.f32 %v1648, %v1656
  %v1659 = vmul.f32 %v1657, 1.442695
  %v1660 = vpow.pop %v1659
  %v1661 = vmul.f32 %v1658, 1.442695
  %v1662 = vpow.pop %v1661
  %v1663 = vsel %vm1068, %v1660, 0.0
  %1664 = vadd.xlane.f32.xlu0 %v1663
  %v1665 = vpop.xlane.xlu0 %1664
  %v1666 = vsel %vm1068, %v1662, 0.0
  %1667 = vadd.xlane.f32.xlu0 %v1666
  %v1668 = vpop.xlane.xlu0 %1667
  %v1669 = vrcp.pop %v1665
  %v1670 = vrcp.pop %v1668
  %v1671 = vmul.f32 %v1660, %v1669
  %v1672 = vmul.f32 %v1662, %v1670
  %v1673 = vpack.c.bf16 %v1671, %v1671
  %v1674 = vpack.c.bf16 %v1672, %v1672
  %v1676 = vsel %vm1093, %v1673, 0
  %1678 = vmatpush.bf16.msra.mxu0 0
  %1679 = vmatpush.bf16.msra.mxu0 0
  %1680 = vmatpush.bf16.msra.mxu0 0
  %1681 = vmatpush.bf16.msra.mxu0 0
  %1682 = vmatpush.bf16.msra.mxu0 0
  %1683 = vmatpush.bf16.msra.mxu0 0
  %1684 = vmatpush.bf16.msra.mxu0 0
  %1685 = vmatpush.bf16.msra.mxu0 %v1098
  %1686 = vmatmul.bf16.gmra.mxu0 %v1676
  %v1687 = vpop.f32.mrf.mxu0
  %v1688 = vadd.f32 0.0, %v1687
  %v1689 = vpop.f32.mrf.mxu0
  %1690 = vdwg.mxu0
  %v1692 = vsel %vm1093, %v1674, 0
  %1694 = vmatpush.bf16.msra.mxu0 0
  %1695 = vmatpush.bf16.msra.mxu0 0
  %1696 = vmatpush.bf16.msra.mxu0 0
  %1697 = vmatpush.bf16.msra.mxu0 0
  %1698 = vmatpush.bf16.msra.mxu0 0
  %1699 = vmatpush.bf16.msra.mxu0 0
  %1700 = vmatpush.bf16.msra.mxu0 0
  %1701 = vmatpush.bf16.msra.mxu0 %v1116
  %1702 = vmatmul.bf16.gmra.mxu0 %v1692
  %v1703 = vpop.f32.mrf.mxu0
  %v1704 = vadd.f32 0.0, %v1703
  %v1705 = vpop.f32.mrf.mxu0
  %1706 = vdwg.mxu0
  %v1707 = vpack.c.bf16 %v1688, %v1688
  %v1708 = vpack.c.bf16 %v1704, %v1704
  %v1709 = vpack.c.bf16 %v1371, %v1371
  %v1712 = vunpack.c.l.b16 %v1707
  %v1713 = vunpack.c.l.b16 %v1708
  %v1714 = vpack.c.b16 %v1712, %v1712
  %v1715 = vpack.c.b16 %v1713, %v1713
  %v1716 = vunpack.c.l.b16 %v1714
  %v1717 = vunpack.c.l.b16 %v1715
  %v1718 = vrot.slane %v1717, 7
  %v1719 = vsel %vm815, %v1718, %v1716
  %v1720 = vpack.c.b16 %v1719, %v1719
  %1721 = vrot.lane.b32.xlu0 %v1720, 32
  %v1722 = vpop.permute.xlu0 %1721
  %v1725 = vsel %vm79, %v1709, %v1722
  %v1726 = vsel %vm107, %v1725, 0
  %1728 = vmatpush.bf16.msra.mxu0 0
  %1729 = vmatpush.bf16.msra.mxu0 0
  %1730 = vmatpush.bf16.msra.mxu0 0
  %1731 = vmatpush.bf16.msra.mxu0 0
  %1732 = vmatpush.bf16.msra.mxu0 %v1167
  %1733 = vmatpush.bf16.msra.mxu0 %v1166
  %1734 = vmatpush.bf16.msra.mxu0 %v1165
  %1735 = vmatpush.bf16.msra.mxu0 %v1164
  %1736 = vmatmul.bf16.gmra.mxu0 %v1726
  %v1737 = vpop.f32.mrf.mxu0
  %v1738 = vadd.f32 0.0, %v1737
  %v1739 = vpop.f32.mrf.mxu0
  %1740 = vdwg.mxu0
  %v1741 = vmul.f32 %v1738, 0.17677669
  %v1743 = vrot.slane %v1741, 1
  %v1745 = vpack.c.bf16 %v1741, %v1741
  %v1746 = vpack.c.bf16 %v1743, %v1743
  %1747 = vst [vmem:[#allocation1] ss:$9 sm:$0xff] %v814
  %s1748 = scalar_lea.vmem [#allocation1], 1
  %1749 = vst [vmem:[%s1748] ss:$9 sm:$0xff] %v818
  %s1750 = scalar_lea.vmem [#allocation1], 2
  %1751 = vst [vmem:[%s1750] ss:$9 sm:$0xff] %v822
  %v1752 = vld [vmem:[#allocation1] sm:$0xff]
  %v1754 = vsel %vm79, %v1745, 0
  %v1756 = vsel %vm79, %v1752, 0
  %1758 = vmatpush.bf16.xpose.msra.mxu0 0
  %1759 = vmatpush.bf16.xpose.msra.mxu0 0
  %1760 = vmatpush.bf16.xpose.msra.mxu0 0
  %1761 = vmatpush.bf16.xpose.msra.mxu0 0
  %1762 = vmatpush.bf16.xpose.msra.mxu0 0
  %1763 = vmatpush.bf16.xpose.msra.mxu0 0
  %1764 = vmatpush.bf16.xpose.msra.mxu0 0
  %1765 = vmatpush.bf16.xpose.msra.mxu0 %v1756
  %1766 = vmatmul.bf16.gmra.mxu0 %v1754
  %v1767 = vpop.f32.mrf.mxu0
  %v1768 = vadd.f32 0.0, %v1767
  %v1769 = vpop.f32.mrf.mxu0
  %1770 = vdwg.mxu0
  %1771 = vst [vmem:[#allocation1] ss:$9 sm:$0xff] %v826
  %s1772 = scalar_lea.vmem [#allocation1], 1
  %1773 = vst [vmem:[%s1772] ss:$9 sm:$0xff] %v829
  %s1774 = scalar_lea.vmem [#allocation1], 2
  %1775 = vst [vmem:[%s1774] ss:$9 sm:$0xff] %v832
  %v1776 = vld [vmem:[#allocation1] sm:$0xff]
  %v1778 = vsel %vm79, %v1746, 0
  %v1780 = vsel %vm79, %v1776, 0
  %1782 = vmatpush.bf16.xpose.msra.mxu0 0
  %1783 = vmatpush.bf16.xpose.msra.mxu0 0
  %1784 = vmatpush.bf16.xpose.msra.mxu0 0
  %1785 = vmatpush.bf16.xpose.msra.mxu0 0
  %1786 = vmatpush.bf16.xpose.msra.mxu0 0
  %1787 = vmatpush.bf16.xpose.msra.mxu0 0
  %1788 = vmatpush.bf16.xpose.msra.mxu0 0
  %1789 = vmatpush.bf16.xpose.msra.mxu0 %v1780
  %1790 = vmatmul.bf16.gmra.mxu0 %v1778
  %v1791 = vpop.f32.mrf.mxu0
  %v1792 = vadd.f32 0.0, %v1791
  %v1793 = vpop.f32.mrf.mxu0
  %1794 = vdwg.mxu0
  %v1795 = vsel %vm1245, %v1768, -inf
  %1796 = vmax.xlane.f32.xlu0 %v1795
  %v1797 = vpop.xlane.xlu0 %1796
  %v1798 = vsel %vm1245, %v1792, -inf
  %1799 = vmax.xlane.f32.xlu0 %v1798
  %v1800 = vpop.xlane.xlu0 %1799
  %v1801 = vsub.f32 %v1768, %v1797
  %v1802 = vsub.f32 %v1792, %v1800
  %v1803 = vmul.f32 %v1801, 1.442695
  %v1804 = vpow.pop %v1803
  %v1805 = vmul.f32 %v1802, 1.442695
  %v1806 = vpow.pop %v1805
  %v1807 = vsel %vm1245, %v1804, 0.0
  %1808 = vadd.xlane.f32.xlu0 %v1807
  %v1809 = vpop.xlane.xlu0 %1808
  %v1810 = vsel %vm1245, %v1806, 0.0
  %1811 = vadd.xlane.f32.xlu0 %v1810
  %v1812 = vpop.xlane.xlu0 %1811
  %v1813 = vrcp.pop %v1809
  %v1814 = vrcp.pop %v1812
  %v1815 = vmul.f32 %v1804, %v1813
  %v1816 = vmul.f32 %v1806, %v1814
  %v1817 = vpack.c.bf16 %v1815, %v1815
  %v1818 = vpack.c.bf16 %v1816, %v1816
  %1819 = vst [vmem:[#allocation1] ss:$9 sm:$0xff] %v814
  %s1820 = scalar_lea.vmem [#allocation1], 1
  %1821 = vst [vmem:[%s1820] ss:$9 sm:$0xff] %v818
  %s1822 = scalar_lea.vmem [#allocation1], 2
  %1823 = vst [vmem:[%s1822] ss:$9 sm:$0xff] %v822
  %v1824 = vld [vmem:[#allocation1] sm:$0xff]
  %v1826 = vsel %vm1276, %v1817, 0
  %v1828 = vsel %vm1280, %v1824, 0
  %1830 = vmatpush.bf16.msra.mxu0 0
  %1831 = vmatpush.bf16.msra.mxu0 0
  %1832 = vmatpush.bf16.msra.mxu0 0
  %1833 = vmatpush.bf16.msra.mxu0 0
  %1834 = vmatpush.bf16.msra.mxu0 0
  %1835 = vmatpush.bf16.msra.mxu0 0
  %1836 = vmatpush.bf16.msra.mxu0 0
  %1837 = vmatpush.bf16.msra.mxu0 %v1828
  %1838 = vmatmul.bf16.gmra.mxu0 %v1826
  %v1839 = vpop.f32.mrf.mxu0
  %v1840 = vadd.f32 0.0, %v1839
  %v1841 = vpop.f32.mrf.mxu0
  %1842 = vdwg.mxu0
  %1843 = vst [vmem:[#allocation1] ss:$9 sm:$0xff] %v826
  %s1844 = scalar_lea.vmem [#allocation1], 1
  %1845 = vst [vmem:[%s1844] ss:$9 sm:$0xff] %v829
  %s1846 = scalar_lea.vmem [#allocation1], 2
  %1847 = vst [vmem:[%s1846] ss:$9 sm:$0xff] %v832
  %v1848 = vld [vmem:[#allocation1] sm:$0xff]
  %v1850 = vsel %vm1276, %v1818, 0
  %v1852 = vsel %vm1280, %v1848, 0
  %1854 = vmatpush.bf16.msra.mxu0 0
  %1855 = vmatpush.bf16.msra.mxu0 0
  %1856 = vmatpush.bf16.msra.mxu0 0
  %1857 = vmatpush.bf16.msra.mxu0 0
  %1858 = vmatpush.bf16.msra.mxu0 0
  %1859 = vmatpush.bf16.msra.mxu0 0
  %1860 = vmatpush.bf16.msra.mxu0 0
  %1861 = vmatpush.bf16.msra.mxu0 %v1852
  %1862 = vmatmul.bf16.gmra.mxu0 %v1850
  %v1863 = vpop.f32.mrf.mxu0
  %v1864 = vadd.f32 0.0, %v1863
  %v1865 = vpop.f32.mrf.mxu0
  %1866 = vdwg.mxu0
  %v1867 = vpack.c.bf16 %v1840, %v1840
  %v1868 = vpack.c.bf16 %v1864, %v1864
  %v1871 = vunpack.c.l.b16 %v1867
  %v1872 = vunpack.c.l.b16 %v1868
  %v1873 = vpack.c.b16 %v1871, %v1871
  %v1874 = vpack.c.b16 %v1872, %v1872
  %v1875 = vunpack.c.l.b16 %v1873
  %v1876 = vunpack.c.l.b16 %v1874
  %v1877 = vrot.slane %v1876, 7
  %v1878 = vsel %vm815, %v1877, %v1875
  %v1879 = vpack.c.b16 %v1878, %v1878
  %v1881 = vunpack.c.l.b16 %v1709
  %v1882 = vpack.c.b16 %v1881, %v1881
  %1883 = vrot.lane.b32.xlu0 %v1882, 32
  %v1884 = vpop.permute.xlu0 %1883
  %v1887 = vsel %vm79, %v1879, %v1884
  %v1888 = vsel %vm107, %v1887, 0
  %1890 = vmatpush.bf16.msra.mxu0 0
  %1891 = vmatpush.bf16.msra.mxu0 0
  %1892 = vmatpush.bf16.msra.mxu0 0
  %1893 = vmatpush.bf16.msra.mxu0 0
  %1894 = vmatpush.bf16.msra.mxu0 %v1354
  %1895 = vmatpush.bf16.msra.mxu0 %v1353
  %1896 = vmatpush.bf16.msra.mxu0 %v1352
  %1897 = vmatpush.bf16.msra.mxu0 %v1351
  %1898 = vmatmul.bf16.gmra.mxu0 %v1888
  %v1899 = vpop.f32.mrf.mxu0
  %v1900 = vadd.f32 0.0, %v1899
  %v1901 = vpop.f32.mrf.mxu0
  %1902 = vdwg.mxu0
  %v1903 = vpack.c.bf16 %v1592, %v1592
  %v1905 = vsel %vm79, %v1903, %v1722
  %v1906 = vsel %vm107, %v1905, 0
  %1908 = vmatpush.bf16.msra.mxu0 0
  %1909 = vmatpush.bf16.msra.mxu0 0
  %1910 = vmatpush.bf16.msra.mxu0 0
  %1911 = vmatpush.bf16.msra.mxu0 0
  %1912 = vmatpush.bf16.msra.mxu0 %v1393
  %1913 = vmatpush.bf16.msra.mxu0 %v1392
  %1914 = vmatpush.bf16.msra.mxu0 %v1391
  %1915 = vmatpush.bf16.msra.mxu0 %v1390
  %1916 = vmatmul.bf16.gmra.mxu0 %v1906
  %v1917 = vpop.f32.mrf.mxu0
  %v1918 = vadd.f32 0.0, %v1917
  %v1919 = vpop.f32.mrf.mxu0
  %1920 = vdwg.mxu0
  %v1921 = vmul.f32 %v1918, 0.17677669
  %v1923 = vrot.slane %v1921, 1
  %v1925 = vpack.c.bf16 %v1921, %v1921
  %v1926 = vpack.c.bf16 %v1923, %v1923
  %1927 = vst [vmem:[#allocation1] ss:$9 sm:$0xff] %v914
  %s1928 = scalar_lea.vmem [#allocation1], 1
  %1929 = vst [vmem:[%s1928] ss:$9 sm:$0xff] %v917
  %s1930 = scalar_lea.vmem [#allocation1], 2
  %1931 = vst [vmem:[%s1930] ss:$9 sm:$0xff] %v920
  %v1932 = vld [vmem:[#allocation1] sm:$0xff]
  %v1934 = vsel %vm79, %v1925, 0
  %v1936 = vsel %vm79, %v1932, 0
  %1938 = vmatpush.bf16.xpose.msra.mxu0 0
  %1939 = vmatpush.bf16.xpose.msra.mxu0 0
  %1940 = vmatpush.bf16.xpose.msra.mxu0 0
  %1941 = vmatpush.bf16.xpose.msra.mxu0 0
  %1942 = vmatpush.bf16.xpose.msra.mxu0 0
  %1943 = vmatpush.bf16.xpose.msra.mxu0 0
  %1944 = vmatpush.bf16.xpose.msra.mxu0 0
  %1945 = vmatpush.bf16.xpose.msra.mxu0 %v1936
  %1946 = vmatmul.bf16.gmra.mxu0 %v1934
  %v1947 = vpop.f32.mrf.mxu0
  %v1948 = vadd.f32 0.0, %v1947
  %v1949 = vpop.f32.mrf.mxu0
  %1950 = vdwg.mxu0
  %1951 = vst [vmem:[#allocation1] ss:$9 sm:$0xff] %v923
  %s1952 = scalar_lea.vmem [#allocation1], 1
  %1953 = vst [vmem:[%s1952] ss:$9 sm:$0xff] %v926
  %s1954 = scalar_lea.vmem [#allocation1], 2
  %1955 = vst [vmem:[%s1954] ss:$9 sm:$0xff] %v929
  %v1956 = vld [vmem:[#allocation1] sm:$0xff]
  %v1958 = vsel %vm79, %v1926, 0
  %v1960 = vsel %vm79, %v1956, 0
  %1962 = vmatpush.bf16.xpose.msra.mxu0 0
  %1963 = vmatpush.bf16.xpose.msra.mxu0 0
  %1964 = vmatpush.bf16.xpose.msra.mxu0 0
  %1965 = vmatpush.bf16.xpose.msra.mxu0 0
  %1966 = vmatpush.bf16.xpose.msra.mxu0 0
  %1967 = vmatpush.bf16.xpose.msra.mxu0 0
  %1968 = vmatpush.bf16.xpose.msra.mxu0 0
  %1969 = vmatpush.bf16.xpose.msra.mxu0 %v1960
  %1970 = vmatmul.bf16.gmra.mxu0 %v1958
  %v1971 = vpop.f32.mrf.mxu0
  %v1972 = vadd.f32 0.0, %v1971
  %v1973 = vpop.f32.mrf.mxu0
  %1974 = vdwg.mxu0
  %v1975 = vsel %vm1245, %v1948, -inf
  %1976 = vmax.xlane.f32.xlu0 %v1975
  %v1977 = vpop.xlane.xlu0 %1976
  %v1978 = vsel %vm1245, %v1972, -inf
  %1979 = vmax.xlane.f32.xlu0 %v1978
  %v1980 = vpop.xlane.xlu0 %1979
  %v1981 = vsub.f32 %v1948, %v1977
  %v1982 = vsub.f32 %v1972, %v1980
  %v1983 = vmul.f32 %v1981, 1.442695
  %v1984 = vpow.pop %v1983
  %v1985 = vmul.f32 %v1982, 1.442695
  %v1986 = vpow.pop %v1985
  %v1987 = vsel %vm1245, %v1984, 0.0
  %1988 = vadd.xlane.f32.xlu0 %v1987
  %v1989 = vpop.xlane.xlu0 %1988
  %v1990 = vsel %vm1245, %v1986, 0.0
  %1991 = vadd.xlane.f32.xlu0 %v1990
  %v1992 = vpop.xlane.xlu0 %1991
  %v1993 = vrcp.pop %v1989
  %v1994 = vrcp.pop %v1992
  %v1995 = vmul.f32 %v1984, %v1993
  %v1996 = vmul.f32 %v1986, %v1994
  %v1997 = vpack.c.bf16 %v1995, %v1995
  %v1998 = vpack.c.bf16 %v1996, %v1996
  %1999 = vst [vmem:[#allocation1] ss:$9 sm:$0xff] %v914
  %s2000 = scalar_lea.vmem [#allocation1], 1
  %2001 = vst [vmem:[%s2000] ss:$9 sm:$0xff] %v917
  %s2002 = scalar_lea.vmem [#allocation1], 2
  %2003 = vst [vmem:[%s2002] ss:$9 sm:$0xff] %v920
  %v2004 = vld [vmem:[#allocation1] sm:$0xff]
  %v2006 = vsel %vm1276, %v1997, 0
  %v2008 = vsel %vm1280, %v2004, 0
  %2010 = vmatpush.bf16.msra.mxu0 0
  %2011 = vmatpush.bf16.msra.mxu0 0
  %2012 = vmatpush.bf16.msra.mxu0 0
  %2013 = vmatpush.bf16.msra.mxu0 0
  %2014 = vmatpush.bf16.msra.mxu0 0
  %2015 = vmatpush.bf16.msra.mxu0 0
  %2016 = vmatpush.bf16.msra.mxu0 0
  %2017 = vmatpush.bf16.msra.mxu0 %v2008
  %2018 = vmatmul.bf16.gmra.mxu0 %v2006
  %v2019 = vpop.f32.mrf.mxu0
  %v2020 = vadd.f32 0.0, %v2019
  %v2021 = vpop.f32.mrf.mxu0
  %2022 = vdwg.mxu0
  %2023 = vst [vmem:[#allocation1] ss:$9 sm:$0xff] %v923
  %s2024 = scalar_lea.vmem [#allocation1], 1
  %2025 = vst [vmem:[%s2024] ss:$9 sm:$0xff] %v926
  %s2026 = scalar_lea.vmem [#allocation1], 2
  %2027 = vst [vmem:[%s2026] ss:$9 sm:$0xff] %v929
  %v2028 = vld [vmem:[#allocation1] sm:$0xff]
  %v2030 = vsel %vm1276, %v1998, 0
  %v2032 = vsel %vm1280, %v2028, 0
  %2034 = vmatpush.bf16.msra.mxu0 0
  %2035 = vmatpush.bf16.msra.mxu0 0
  %2036 = vmatpush.bf16.msra.mxu0 0
  %2037 = vmatpush.bf16.msra.mxu0 0
  %2038 = vmatpush.bf16.msra.mxu0 0
  %2039 = vmatpush.bf16.msra.mxu0 0
  %2040 = vmatpush.bf16.msra.mxu0 0
  %2041 = vmatpush.bf16.msra.mxu0 %v2032
  %2042 = vmatmul.bf16.gmra.mxu0 %v2030
  %v2043 = vpop.f32.mrf.mxu0
  %v2044 = vadd.f32 0.0, %v2043
  %v2045 = vpop.f32.mrf.mxu0
  %2046 = vdwg.mxu0
  %v2047 = vpack.c.bf16 %v2020, %v2020
  %v2048 = vpack.c.bf16 %v2044, %v2044
  %v2051 = vunpack.c.l.b16 %v2047
  %v2052 = vunpack.c.l.b16 %v2048
  %v2053 = vpack.c.b16 %v2051, %v2051
  %v2054 = vpack.c.b16 %v2052, %v2052
  %v2055 = vunpack.c.l.b16 %v2053
  %v2056 = vunpack.c.l.b16 %v2054
  %v2057 = vrot.slane %v2056, 7
  %v2058 = vsel %vm815, %v2057, %v2055
  %v2059 = vpack.c.b16 %v2058, %v2058
  %v2061 = vunpack.c.l.b16 %v1903
  %v2062 = vpack.c.b16 %v2061, %v2061
  %2063 = vrot.lane.b32.xlu0 %v2062, 32
  %v2064 = vpop.permute.xlu0 %2063
  %v2067 = vsel %vm79, %v2059, %v2064
  %v2068 = vsel %vm107, %v2067, 0
  %2070 = vmatpush.bf16.msra.mxu0 0
  %2071 = vmatpush.bf16.msra.mxu0 0
  %2072 = vmatpush.bf16.msra.mxu0 0
  %2073 = vmatpush.bf16.msra.mxu0 0
  %2074 = vmatpush.bf16.msra.mxu0 %v1575
  %2075 = vmatpush.bf16.msra.mxu0 %v1574
  %2076 = vmatpush.bf16.msra.mxu0 %v1573
  %2077 = vmatpush.bf16.msra.mxu0 %v1572
  %2078 = vmatmul.bf16.gmra.mxu0 %v2068
  %v2079 = vpop.f32.mrf.mxu0
  %v2080 = vadd.f32 0.0, %v2079
  %v2081 = vpop.f32.mrf.mxu0
  %2082 = vdwg.mxu0
  %v2084 = vsel %vm79, %v1720, %v977
  %v2085 = vsel %vm107, %v2084, 0
  %2087 = vmatpush.bf16.msra.mxu0 0
  %2088 = vmatpush.bf16.msra.mxu0 0
  %2089 = vmatpush.bf16.msra.mxu0 0
  %2090 = vmatpush.bf16.msra.mxu0 0
  %2091 = vmatpush.bf16.msra.mxu0 %v1000
  %2092 = vmatpush.bf16.msra.mxu0 %v999
  %2093 = vmatpush.bf16.msra.mxu0 %v998
  %2094 = vmatpush.bf16.msra.mxu0 %v997
  %2095 = vmatmul.bf16.gmra.mxu0 %v2085
  %v2096 = vpop.f32.mrf.mxu0
  %v2097 = vadd.f32 0.0, %v2096
  %v2098 = vpop.f32.mrf.mxu0
  %2099 = vdwg.mxu0
  %v2100 = vmul.f32 %v2097, %v1021
  %v2101 = vmul.f32 %v2100, 0.17677669
  %v2103 = vrot.slane %v2101, 1
  %v2105 = vpack.c.bf16 %v2101, %v2101
  %v2106 = vpack.c.bf16 %v2103, %v2103
  %v2108 = vsel %vm79, %v2105, 0
  %2110 = vmatpush.bf16.xpose.msra.mxu0 0
  %2111 = vmatpush.bf16.xpose.msra.mxu0 0
  %2112 = vmatpush.bf16.xpose.msra.mxu0 0
  %2113 = vmatpush.bf16.xpose.msra.mxu0 0
  %2114 = vmatpush.bf16.xpose.msra.mxu0 0
  %2115 = vmatpush.bf16.xpose.msra.mxu0 0
  %2116 = vmatpush.bf16.xpose.msra.mxu0 0
  %2117 = vmatpush.bf16.xpose.msra.mxu0 %v1034
  %2118 = vmatmul.bf16.gmra.mxu0 %v2108
  %v2119 = vpop.f32.mrf.mxu0
  %v2120 = vadd.f32 0.0, %v2119
  %v2121 = vpop.f32.mrf.mxu0
  %2122 = vdwg.mxu0
  %v2124 = vsel %vm79, %v2106, 0
  %2126 = vmatpush.bf16.xpose.msra.mxu0 0
  %2127 = vmatpush.bf16.xpose.msra.mxu0 0
  %2128 = vmatpush.bf16.xpose.msra.mxu0 0
  %2129 = vmatpush.bf16.xpose.msra.mxu0 0
  %2130 = vmatpush.bf16.xpose.msra.mxu0 0
  %2131 = vmatpush.bf16.xpose.msra.mxu0 0
  %2132 = vmatpush.bf16.xpose.msra.mxu0 0
  %2133 = vmatpush.bf16.xpose.msra.mxu0 %v1053
  %2134 = vmatmul.bf16.gmra.mxu0 %v2124
  %v2135 = vpop.f32.mrf.mxu0
  %v2136 = vadd.f32 0.0, %v2135
  %v2137 = vpop.f32.mrf.mxu0
  %2138 = vdwg.mxu0
  %v2139 = vsel %vm1068, %v2120, -inf
  %2140 = vmax.xlane.f32.xlu0 %v2139
  %v2141 = vpop.xlane.xlu0 %2140
  %v2142 = vsel %vm1068, %v2136, -inf
  %2143 = vmax.xlane.f32.xlu0 %v2142
  %v2144 = vpop.xlane.xlu0 %2143
  %v2145 = vsub.f32 %v2120, %v2141
  %v2146 = vsub.f32 %v2136, %v2144
  %v2147 = vmul.f32 %v2145, 1.442695
  %v2148 = vpow.pop %v2147
  %v2149 = vmul.f32 %v2146, 1.442695
  %v2150 = vpow.pop %v2149
  %v2151 = vsel %vm1068, %v2148, 0.0
  %2152 = vadd.xlane.f32.xlu0 %v2151
  %v2153 = vpop.xlane.xlu0 %2152
  %v2154 = vsel %vm1068, %v2150, 0.0
  %2155 = vadd.xlane.f32.xlu0 %v2154
  %v2156 = vpop.xlane.xlu0 %2155
  %v2157 = vrcp.pop %v2153
  %v2158 = vrcp.pop %v2156
  %v2159 = vmul.f32 %v2148, %v2157
  %v2160 = vmul.f32 %v2150, %v2158
  %v2161 = vpack.c.bf16 %v2159, %v2159
  %v2162 = vpack.c.bf16 %v2160, %v2160
  %v2164 = vsel %vm1093, %v2161, 0
  %2166 = vmatpush.bf16.msra.mxu0 0
  %2167 = vmatpush.bf16.msra.mxu0 0
  %2168 = vmatpush.bf16.msra.mxu0 0
  %2169 = vmatpush.bf16.msra.mxu0 0
  %2170 = vmatpush.bf16.msra.mxu0 0
  %2171 = vmatpush.bf16.msra.mxu0 0
  %2172 = vmatpush.bf16.msra.mxu0 0
  %2173 = vmatpush.bf16.msra.mxu0 %v1098
  %2174 = vmatmul.bf16.gmra.mxu0 %v2164
  %v2175 = vpop.f32.mrf.mxu0
  %v2176 = vadd.f32 0.0, %v2175
  %v2177 = vpop.f32.mrf.mxu0
  %2178 = vdwg.mxu0
  %v2180 = vsel %vm1093, %v2162, 0
  %2182 = vmatpush.bf16.msra.mxu0 0
  %2183 = vmatpush.bf16.msra.mxu0 0
  %2184 = vmatpush.bf16.msra.mxu0 0
  %2185 = vmatpush.bf16.msra.mxu0 0
  %2186 = vmatpush.bf16.msra.mxu0 0
  %2187 = vmatpush.bf16.msra.mxu0 0
  %2188 = vmatpush.bf16.msra.mxu0 0
  %2189 = vmatpush.bf16.msra.mxu0 %v1116
  %2190 = vmatmul.bf16.gmra.mxu0 %v2180
  %v2191 = vpop.f32.mrf.mxu0
  %v2192 = vadd.f32 0.0, %v2191
  %v2193 = vpop.f32.mrf.mxu0
  %2194 = vdwg.mxu0
  %v2195 = vpack.c.bf16 %v2176, %v2176
  %v2196 = vpack.c.bf16 %v2192, %v2192
  %v2197 = vpack.c.bf16 %v1900, %v1900
  %v2200 = vunpack.c.l.b16 %v2195
  %v2201 = vunpack.c.l.b16 %v2196
  %v2202 = vpack.c.b16 %v2200, %v2200
  %v2203 = vpack.c.b16 %v2201, %v2201
  %v2204 = vunpack.c.l.b16 %v2202
  %v2205 = vunpack.c.l.b16 %v2203
  %v2206 = vrot.slane %v2205, 7
  %v2207 = vsel %vm815, %v2206, %v2204
  %v2208 = vpack.c.b16 %v2207, %v2207
  %2209 = vrot.lane.b32.xlu0 %v2208, 32
  %v2210 = vpop.permute.xlu0 %2209
  %v2213 = vsel %vm79, %v2197, %v2210
  %v2214 = vsel %vm107, %v2213, 0
  %2216 = vmatpush.bf16.msra.mxu0 0
  %2217 = vmatpush.bf16.msra.mxu0 0
  %2218 = vmatpush.bf16.msra.mxu0 0
  %2219 = vmatpush.bf16.msra.mxu0 0
  %2220 = vmatpush.bf16.msra.mxu0 %v1167
  %2221 = vmatpush.bf16.msra.mxu0 %v1166
  %2222 = vmatpush.bf16.msra.mxu0 %v1165
  %2223 = vmatpush.bf16.msra.mxu0 %v1164
  %2224 = vmatmul.bf16.gmra.mxu0 %v2214
  %v2225 = vpop.f32.mrf.mxu0
  %v2226 = vadd.f32 0.0, %v2225
  %v2227 = vpop.f32.mrf.mxu0
  %2228 = vdwg.mxu0
  %v2229 = vmul.f32 %v2226, 0.17677669
  %v2231 = vrot.slane %v2229, 1
  %v2233 = vpack.c.bf16 %v2229, %v2229
  %v2234 = vpack.c.bf16 %v2231, %v2231
  %2235 = vst [vmem:[#allocation1] ss:$9 sm:$0xff] %v814
  %s2236 = scalar_lea.vmem [#allocation1], 1
  %2237 = vst [vmem:[%s2236] ss:$9 sm:$0xff] %v818
  %s2238 = scalar_lea.vmem [#allocation1], 2
  %2239 = vst [vmem:[%s2238] ss:$9 sm:$0xff] %v822
  %v2240 = vld [vmem:[#allocation1] sm:$0xff]
  %v2242 = vsel %vm79, %v2233, 0
  %v2244 = vsel %vm79, %v2240, 0
  %2246 = vmatpush.bf16.xpose.msra.mxu0 0
  %2247 = vmatpush.bf16.xpose.msra.mxu0 0
  %2248 = vmatpush.bf16.xpose.msra.mxu0 0
  %2249 = vmatpush.bf16.xpose.msra.mxu0 0
  %2250 = vmatpush.bf16.xpose.msra.mxu0 0
  %2251 = vmatpush.bf16.xpose.msra.mxu0 0
  %2252 = vmatpush.bf16.xpose.msra.mxu0 0
  %2253 = vmatpush.bf16.xpose.msra.mxu0 %v2244
  %2254 = vmatmul.bf16.gmra.mxu0 %v2242
  %v2255 = vpop.f32.mrf.mxu0
  %v2256 = vadd.f32 0.0, %v2255
  %v2257 = vpop.f32.mrf.mxu0
  %2258 = vdwg.mxu0
  %2259 = vst [vmem:[#allocation1] ss:$9 sm:$0xff] %v826
  %s2260 = scalar_lea.vmem [#allocation1], 1
  %2261 = vst [vmem:[%s2260] ss:$9 sm:$0xff] %v829
  %s2262 = scalar_lea.vmem [#allocation1], 2
  %2263 = vst [vmem:[%s2262] ss:$9 sm:$0xff] %v832
  %v2264 = vld [vmem:[#allocation1] sm:$0xff]
  %v2266 = vsel %vm79, %v2234, 0
  %v2268 = vsel %vm79, %v2264, 0
  %2270 = vmatpush.bf16.xpose.msra.mxu0 0
  %2271 = vmatpush.bf16.xpose.msra.mxu0 0
  %2272 = vmatpush.bf16.xpose.msra.mxu0 0
  %2273 = vmatpush.bf16.xpose.msra.mxu0 0
  %2274 = vmatpush.bf16.xpose.msra.mxu0 0
  %2275 = vmatpush.bf16.xpose.msra.mxu0 0
  %2276 = vmatpush.bf16.xpose.msra.mxu0 0
  %2277 = vmatpush.bf16.xpose.msra.mxu0 %v2268
  %2278 = vmatmul.bf16.gmra.mxu0 %v2266
  %v2279 = vpop.f32.mrf.mxu0
  %v2280 = vadd.f32 0.0, %v2279
  %v2281 = vpop.f32.mrf.mxu0
  %2282 = vdwg.mxu0
  %v2283 = vsel %vm1245, %v2256, -inf
  %2284 = vmax.xlane.f32.xlu0 %v2283
  %v2285 = vpop.xlane.xlu0 %2284
  %v2286 = vsel %vm1245, %v2280, -inf
  %2287 = vmax.xlane.f32.xlu0 %v2286
  %v2288 = vpop.xlane.xlu0 %2287
  %v2289 = vsub.f32 %v2256, %v2285
  %v2290 = vsub.f32 %v2280, %v2288
  %v2291 = vmul.f32 %v2289, 1.442695
  %v2292 = vpow.pop %v2291
  %v2293 = vmul.f32 %v2290, 1.442695
  %v2294 = vpow.pop %v2293
  %v2295 = vsel %vm1245, %v2292, 0.0
  %2296 = vadd.xlane.f32.xlu0 %v2295
  %v2297 = vpop.xlane.xlu0 %2296
  %v2298 = vsel %vm1245, %v2294, 0.0
  %2299 = vadd.xlane.f32.xlu0 %v2298
  %v2300 = vpop.xlane.xlu0 %2299
  %v2301 = vrcp.pop %v2297
  %v2302 = vrcp.pop %v2300
  %v2303 = vmul.f32 %v2292, %v2301
  %v2304 = vmul.f32 %v2294, %v2302
  %v2305 = vpack.c.bf16 %v2303, %v2303
  %v2306 = vpack.c.bf16 %v2304, %v2304
  %2307 = vst [vmem:[#allocation1] ss:$9 sm:$0xff] %v814
  %s2308 = scalar_lea.vmem [#allocation1], 1
  %2309 = vst [vmem:[%s2308] ss:$9 sm:$0xff] %v818
  %s2310 = scalar_lea.vmem [#allocation1], 2
  %2311 = vst [vmem:[%s2310] ss:$9 sm:$0xff] %v822
  %v2312 = vld [vmem:[#allocation1] sm:$0xff]
  %v2314 = vsel %vm1276, %v2305, 0
  %v2316 = vsel %vm1280, %v2312, 0
  %2318 = vmatpush.bf16.msra.mxu0 0
  %2319 = vmatpush.bf16.msra.mxu0 0
  %2320 = vmatpush.bf16.msra.mxu0 0
  %2321 = vmatpush.bf16.msra.mxu0 0
  %2322 = vmatpush.bf16.msra.mxu0 0
  %2323 = vmatpush.bf16.msra.mxu0 0
  %2324 = vmatpush.bf16.msra.mxu0 0
  %2325 = vmatpush.bf16.msra.mxu0 %v2316
  %2326 = vmatmul.bf16.gmra.mxu0 %v2314
  %v2327 = vpop.f32.mrf.mxu0
  %v2328 = vadd.f32 0.0, %v2327
  %v2329 = vpop.f32.mrf.mxu0
  %2330 = vdwg.mxu0
  %2331 = vst [vmem:[#allocation1] ss:$9 sm:$0xff] %v826
  %s2332 = scalar_lea.vmem [#allocation1], 1
  %2333 = vst [vmem:[%s2332] ss:$9 sm:$0xff] %v829
  %s2334 = scalar_lea.vmem [#allocation1], 2
  %2335 = vst [vmem:[%s2334] ss:$9 sm:$0xff] %v832
  %v2336 = vld [vmem:[#allocation1] sm:$0xff]
  %v2338 = vsel %vm1276, %v2306, 0
  %v2340 = vsel %vm1280, %v2336, 0
  %2342 = vmatpush.bf16.msra.mxu0 0
  %2343 = vmatpush.bf16.msra.mxu0 0
  %2344 = vmatpush.bf16.msra.mxu0 0
  %2345 = vmatpush.bf16.msra.mxu0 0
  %2346 = vmatpush.bf16.msra.mxu0 0
  %2347 = vmatpush.bf16.msra.mxu0 0
  %2348 = vmatpush.bf16.msra.mxu0 0
  %2349 = vmatpush.bf16.msra.mxu0 %v2340
  %2350 = vmatmul.bf16.gmra.mxu0 %v2338
  %v2351 = vpop.f32.mrf.mxu0
  %v2352 = vadd.f32 0.0, %v2351
  %v2353 = vpop.f32.mrf.mxu0
  %2354 = vdwg.mxu0
  %v2355 = vpack.c.bf16 %v2328, %v2328
  %v2356 = vpack.c.bf16 %v2352, %v2352
  %v2359 = vunpack.c.l.b16 %v2355
  %v2360 = vunpack.c.l.b16 %v2356
  %v2361 = vpack.c.b16 %v2359, %v2359
  %v2362 = vpack.c.b16 %v2360, %v2360
  %v2363 = vunpack.c.l.b16 %v2361
  %v2364 = vunpack.c.l.b16 %v2362
  %v2365 = vrot.slane %v2364, 7
  %v2366 = vsel %vm815, %v2365, %v2363
  %v2367 = vpack.c.b16 %v2366, %v2366
  %v2369 = vunpack.c.l.b16 %v2197
  %v2370 = vpack.c.b16 %v2369, %v2369
  %2371 = vrot.lane.b32.xlu0 %v2370, 32
  %v2372 = vpop.permute.xlu0 %2371
  %v2375 = vsel %vm79, %v2367, %v2372
  %v2376 = vsel %vm107, %v2375, 0
  %2378 = vmatpush.bf16.msra.mxu0 0
  %2379 = vmatpush.bf16.msra.mxu0 0
  %2380 = vmatpush.bf16.msra.mxu0 0
  %2381 = vmatpush.bf16.msra.mxu0 0
  %2382 = vmatpush.bf16.msra.mxu0 %v1354
  %2383 = vmatpush.bf16.msra.mxu0 %v1353
  %2384 = vmatpush.bf16.msra.mxu0 %v1352
  %2385 = vmatpush.bf16.msra.mxu0 %v1351
  %2386 = vmatmul.bf16.gmra.mxu0 %v2376
  %v2387 = vpop.f32.mrf.mxu0
  %v2388 = vadd.f32 0.0, %v2387
  %v2389 = vpop.f32.mrf.mxu0
  %2390 = vdwg.mxu0
  %v2391 = vpack.c.bf16 %v2080, %v2080
  %v2393 = vsel %vm79, %v2391, %v2210
  %v2394 = vsel %vm107, %v2393, 0
  %2396 = vmatpush.bf16.msra.mxu0 0
  %2397 = vmatpush.bf16.msra.mxu0 0
  %2398 = vmatpush.bf16.msra.mxu0 0
  %2399 = vmatpush.bf16.msra.mxu0 0
  %2400 = vmatpush.bf16.msra.mxu0 %v1393
  %2401 = vmatpush.bf16.msra.mxu0 %v1392
  %2402 = vmatpush.bf16.msra.mxu0 %v1391
  %2403 = vmatpush.bf16.msra.mxu0 %v1390
  %2404 = vmatmul.bf16.gmra.mxu0 %v2394
  %v2405 = vpop.f32.mrf.mxu0
  %v2406 = vadd.f32 0.0, %v2405
  %v2407 = vpop.f32.mrf.mxu0
  %2408 = vdwg.mxu0
  %v2409 = vmul.f32 %v2406, 0.17677669
  %v2411 = vrot.slane %v2409, 1
  %v2413 = vpack.c.bf16 %v2409, %v2409
  %v2414 = vpack.c.bf16 %v2411, %v2411
  %2415 = vst [vmem:[#allocation1] ss:$9 sm:$0xff] %v914
  %s2416 = scalar_lea.vmem [#allocation1], 1
  %2417 = vst [vmem:[%s2416] ss:$9 sm:$0xff] %v917
  %s2418 = scalar_lea.vmem [#allocation1], 2
  %2419 = vst [vmem:[%s2418] ss:$9 sm:$0xff] %v920
  %v2420 = vld [vmem:[#allocation1] sm:$0xff]
  %v2422 = vsel %vm79, %v2413, 0
  %v2424 = vsel %vm79, %v2420, 0
  %2426 = vmatpush.bf16.xpose.msra.mxu0 0
  %2427 = vmatpush.bf16.xpose.msra.mxu0 0
  %2428 = vmatpush.bf16.xpose.msra.mxu0 0
  %2429 = vmatpush.bf16.xpose.msra.mxu0 0
  %2430 = vmatpush.bf16.xpose.msra.mxu0 0
  %2431 = vmatpush.bf16.xpose.msra.mxu0 0
  %2432 = vmatpush.bf16.xpose.msra.mxu0 0
  %2433 = vmatpush.bf16.xpose.msra.mxu0 %v2424
  %2434 = vmatmul.bf16.gmra.mxu0 %v2422
  %v2435 = vpop.f32.mrf.mxu0
  %v2436 = vadd.f32 0.0, %v2435
  %v2437 = vpop.f32.mrf.mxu0
  %2438 = vdwg.mxu0
  %2439 = vst [vmem:[#allocation1] ss:$9 sm:$0xff] %v923
  %s2440 = scalar_lea.vmem [#allocation1], 1
  %2441 = vst [vmem:[%s2440] ss:$9 sm:$0xff] %v926
  %s2442 = scalar_lea.vmem [#allocation1], 2
  %2443 = vst [vmem:[%s2442] ss:$9 sm:$0xff] %v929
  %v2444 = vld [vmem:[#allocation1] sm:$0xff]
  %v2446 = vsel %vm79, %v2414, 0
  %v2448 = vsel %vm79, %v2444, 0
  %2450 = vmatpush.bf16.xpose.msra.mxu0 0
  %2451 = vmatpush.bf16.xpose.msra.mxu0 0
  %2452 = vmatpush.bf16.xpose.msra.mxu0 0
  %2453 = vmatpush.bf16.xpose.msra.mxu0 0
  %2454 = vmatpush.bf16.xpose.msra.mxu0 0
  %2455 = vmatpush.bf16.xpose.msra.mxu0 0
  %2456 = vmatpush.bf16.xpose.msra.mxu0 0
  %2457 = vmatpush.bf16.xpose.msra.mxu0 %v2448
  %2458 = vmatmul.bf16.gmra.mxu0 %v2446
  %v2459 = vpop.f32.mrf.mxu0
  %v2460 = vadd.f32 0.0, %v2459
  %v2461 = vpop.f32.mrf.mxu0
  %2462 = vdwg.mxu0
  %v2463 = vsel %vm1245, %v2436, -inf
  %2464 = vmax.xlane.f32.xlu0 %v2463
  %v2465 = vpop.xlane.xlu0 %2464
  %v2466 = vsel %vm1245, %v2460, -inf
  %2467 = vmax.xlane.f32.xlu0 %v2466
  %v2468 = vpop.xlane.xlu0 %2467
  %v2469 = vsub.f32 %v2436, %v2465
  %v2470 = vsub.f32 %v2460, %v2468
  %v2471 = vmul.f32 %v2469, 1.442695
  %v2472 = vpow.pop %v2471
  %v2473 = vmul.f32 %v2470, 1.442695
  %v2474 = vpow.pop %v2473
  %v2475 = vsel %vm1245, %v2472, 0.0
  %2476 = vadd.xlane.f32.xlu0 %v2475
  %v2477 = vpop.xlane.xlu0 %2476
  %v2478 = vsel %vm1245, %v2474, 0.0
  %2479 = vadd.xlane.f32.xlu0 %v2478
  %v2480 = vpop.xlane.xlu0 %2479
  %v2481 = vrcp.pop %v2477
  %v2482 = vrcp.pop %v2480
  %v2483 = vmul.f32 %v2472, %v2481
  %v2484 = vmul.f32 %v2474, %v2482
  %v2485 = vpack.c.bf16 %v2483, %v2483
  %v2486 = vpack.c.bf16 %v2484, %v2484
  %2487 = vst [vmem:[#allocation1] ss:$9 sm:$0xff] %v914
  %s2488 = scalar_lea.vmem [#allocation1], 1
  %2489 = vst [vmem:[%s2488] ss:$9 sm:$0xff] %v917
  %s2490 = scalar_lea.vmem [#allocation1], 2
  %2491 = vst [vmem:[%s2490] ss:$9 sm:$0xff] %v920
  %v2492 = vld [vmem:[#allocation1] sm:$0xff]
  %v2494 = vsel %vm1276, %v2485, 0
  %v2496 = vsel %vm1280, %v2492, 0
  %2498 = vmatpush.bf16.msra.mxu0 0
  %2499 = vmatpush.bf16.msra.mxu0 0
  %2500 = vmatpush.bf16.msra.mxu0 0
  %2501 = vmatpush.bf16.msra.mxu0 0
  %2502 = vmatpush.bf16.msra.mxu0 0
  %2503 = vmatpush.bf16.msra.mxu0 0
  %2504 = vmatpush.bf16.msra.mxu0 0
  %2505 = vmatpush.bf16.msra.mxu0 %v2496
  %2506 = vmatmul.bf16.gmra.mxu0 %v2494
  %v2507 = vpop.f32.mrf.mxu0
  %v2508 = vadd.f32 0.0, %v2507
  %v2509 = vpop.f32.mrf.mxu0
  %2510 = vdwg.mxu0
  %2511 = vst [vmem:[#allocation1] ss:$9 sm:$0xff] %v923
  %s2512 = scalar_lea.vmem [#allocation1], 1
  %2513 = vst [vmem:[%s2512] ss:$9 sm:$0xff] %v926
  %s2514 = scalar_lea.vmem [#allocation1], 2
  %2515 = vst [vmem:[%s2514] ss:$9 sm:$0xff] %v929
  %v2516 = vld [vmem:[#allocation1] sm:$0xff]
  %v2518 = vsel %vm1276, %v2486, 0
  %v2520 = vsel %vm1280, %v2516, 0
  %2522 = vmatpush.bf16.msra.mxu0 0
  %2523 = vmatpush.bf16.msra.mxu0 0
  %2524 = vmatpush.bf16.msra.mxu0 0
  %2525 = vmatpush.bf16.msra.mxu0 0
  %2526 = vmatpush.bf16.msra.mxu0 0
  %2527 = vmatpush.bf16.msra.mxu0 0
  %2528 = vmatpush.bf16.msra.mxu0 0
  %2529 = vmatpush.bf16.msra.mxu0 %v2520
  %2530 = vmatmul.bf16.gmra.mxu0 %v2518
  %v2531 = vpop.f32.mrf.mxu0
  %v2532 = vadd.f32 0.0, %v2531
  %v2533 = vpop.f32.mrf.mxu0
  %2534 = vdwg.mxu0
  %v2535 = vpack.c.bf16 %v2508, %v2508
  %v2536 = vpack.c.bf16 %v2532, %v2532
  %v2539 = vunpack.c.l.b16 %v2535
  %v2540 = vunpack.c.l.b16 %v2536
  %v2541 = vpack.c.b16 %v2539, %v2539
  %v2542 = vpack.c.b16 %v2540, %v2540
  %v2543 = vunpack.c.l.b16 %v2541
  %v2544 = vunpack.c.l.b16 %v2542
  %v2545 = vrot.slane %v2544, 7
  %v2546 = vsel %vm815, %v2545, %v2543
  %v2547 = vpack.c.b16 %v2546, %v2546
  %v2549 = vunpack.c.l.b16 %v2391
  %v2550 = vpack.c.b16 %v2549, %v2549
  %2551 = vrot.lane.b32.xlu0 %v2550, 32
  %v2552 = vpop.permute.xlu0 %2551
  %v2555 = vsel %vm79, %v2547, %v2552
  %v2556 = vsel %vm107, %v2555, 0
  %2558 = vmatpush.bf16.msra.mxu0 0
  %2559 = vmatpush.bf16.msra.mxu0 0
  %2560 = vmatpush.bf16.msra.mxu0 0
  %2561 = vmatpush.bf16.msra.mxu0 0
  %2562 = vmatpush.bf16.msra.mxu0 %v1575
  %2563 = vmatpush.bf16.msra.mxu0 %v1574
  %2564 = vmatpush.bf16.msra.mxu0 %v1573
  %2565 = vmatpush.bf16.msra.mxu0 %v1572
  %2566 = vmatmul.bf16.gmra.mxu0 %v2556
  %v2567 = vpop.f32.mrf.mxu0
  %v2568 = vadd.f32 0.0, %v2567
  %v2569 = vpop.f32.mrf.mxu0
  %2570 = vdwg.mxu0
  %v2571 = vrot.slane %v657, 4
  %v2573 = vmul.f32 %v657, %v2571
  %2575 = vrot.lane.b32.xlu0 %v2568, 32
  %v2576 = vpop.permute.xlu0 %2575
  %2579 = vrot.lane.b32.xlu0 %v2573, 96
  %v2580 = vpop.permute.xlu0 %2579
  %v2582 = vrot.slane %v657, 2
  %v2584 = vsel %vm79, %v2388, %v2576
  %v2585 = vsel %vm107, %v2584, %v2580
  %vm2586 = vcmask 785408
  %v2587 = vsel %vm2586, %v2585, %v2582
  %v2588 = vrot.slane %v657, 6
  %v2590 = vmul.f32 %v657, %v2588
  %2592 = vrot.lane.b32.xlu0 %v2590, 96
  %v2593 = vpop.permute.xlu0 %2592
  %v2595 = vsel %vm107, %v2584, %v2593
  %v2596 = vsel %vm2586, %v2595, %v2582
  %v2598 = vrot.slane %v2596, 6
  %vm2600 = vcmask 1041408
  %v2601 = vsel %vm2600, %v2587, %v2598
  %v2602 = vpack.c.bf16 %v2601, %v2601
  %v2603 = vld [vmem:[%s15] sm:$0xf]
  %v2604 = vld [vmem:[%s15 + $0x4] sm:$0xf]
  %v2605 = vld [vmem:[%s15 + $0x8] sm:$0xf]
  %v2606 = vld [vmem:[%s15 + $0xc] sm:$0xf]
  %v2607 = vld [vmem:[%s15 + $0x10] sm:$0xf]
  %v2608 = vld [vmem:[%s15 + $0x14] sm:$0xf]
  %v2609 = vld [vmem:[%s15 + $0x18] sm:$0xf]
  %v2610 = vld [vmem:[%s15 + $0x1c] sm:$0xf]
  %v2611 = vld [vmem:[%s15 + $0x20] sm:$0xf]
  %v2612 = vld [vmem:[%s15 + $0x24] sm:$0xf]
  %v2613 = vld [vmem:[%s15 + $0x28] sm:$0xf]
  %v2614 = vld [vmem:[%s15 + $0x2c] sm:$0xf]
  %v2615 = vld [vmem:[%s15 + $0x30] sm:$0xf]
  %v2616 = vld [vmem:[%s15 + $0x34] sm:$0xf]
  %v2617 = vld [vmem:[%s15 + $0x38] sm:$0xf]
  %v2618 = vld [vmem:[%s15 + $0x3c] sm:$0xf]
  %v2619 = vld [vmem:[%s16] sm:$0x1]
  %v2621 = vperm.slane %v2619, 0
  %v2639 = vunpack.c.l.b16 %v2603
  %v2640 = vunpack.c.l.b16 %v2604
  %v2641 = vunpack.c.l.b16 %v2605
  %v2642 = vunpack.c.l.b16 %v2606
  %v2643 = vunpack.c.l.b16 %v2607
  %v2644 = vunpack.c.l.b16 %v2608
  %v2645 = vunpack.c.l.b16 %v2609
  %v2646 = vunpack.c.l.b16 %v2610
  %v2647 = vunpack.c.l.b16 %v2611
  %v2648 = vunpack.c.l.b16 %v2612
  %v2649 = vunpack.c.l.b16 %v2613
  %v2650 = vunpack.c.l.b16 %v2614
  %v2651 = vunpack.c.l.b16 %v2615
  %v2652 = vunpack.c.l.b16 %v2616
  %v2653 = vunpack.c.l.b16 %v2617
  %v2654 = vunpack.c.l.b16 %v2618
  %v2655 = vpack.c.b16 %v2640, %v2639
  %v2656 = vpack.c.b16 %v2642, %v2641
  %v2657 = vpack.c.b16 %v2644, %v2643
  %v2658 = vpack.c.b16 %v2646, %v2645
  %v2659 = vpack.c.b16 %v2648, %v2647
  %v2660 = vpack.c.b16 %v2650, %v2649
  %v2661 = vpack.c.b16 %v2652, %v2651
  %v2662 = vpack.c.b16 %v2654, %v2653
  %2671 = vmatpush.bf16.msra.mxu0 %v2662
  %2672 = vmatpush.bf16.msra.mxu0 %v2661
  %2673 = vmatpush.bf16.msra.mxu0 %v2660
  %2674 = vmatpush.bf16.msra.mxu0 %v2659
  %2675 = vmatpush.bf16.msra.mxu0 %v2658
  %2676 = vmatpush.bf16.msra.mxu0 %v2657
  %2677 = vmatpush.bf16.msra.mxu0 %v2656
  %2678 = vmatpush.bf16.msra.mxu0 %v2655
  %2679 = vmatmul.bf16.gmra.mxu0 %v2602
  %v2680 = vpop.f32.mrf.mxu0
  %v2681 = vadd.f32 %v2621, %v2680
  %v2682 = vpop.f32.mrf.mxu0
  %2683 = vdwg.mxu0
  %vm2684 = vcmp.gt.f32.partialorder %v2681, 0.0
  %v2685 = vmin.f32 %v2681, 0.0
  %v2686 = vmul.f32 %v2685, 1.442695
  %v2687 = vpow.pop %v2686
  %v2688 = vsub.f32 %v2687, 1.0
  %v2689 = vsel %vm2684, %v2681, %v2688
  %v2690 = vpack.c.bf16 %v2689, %v2689
  %v2691 = vld [vmem:[%s17] sm:$0xf]
  %v2692 = vld [vmem:[%s17 + $0x4] sm:$0xf]
  %v2693 = vld [vmem:[%s17 + $0x8] sm:$0xf]
  %v2694 = vld [vmem:[%s17 + $0xc] sm:$0xf]
  %v2695 = vld [vmem:[#allocation3] sm:$0x1]
  %v2697 = vperm.slane %v2695, 0
  %v2703 = vunpack.c.l.b16 %v2691
  %v2704 = vunpack.c.l.b16 %v2692
  %v2705 = vunpack.c.l.b16 %v2693
  %v2706 = vunpack.c.l.b16 %v2694
  %v2707 = vpack.c.b16 %v2704, %v2703
  %v2708 = vpack.c.b16 %v2706, %v2705
  %v2712 = vsel %vm79, %v2690, 0
  %2714 = vmatpush.bf16.msra.mxu0 0
  %2715 = vmatpush.bf16.msra.mxu0 0
  %2716 = vmatpush.bf16.msra.mxu0 0
  %2717 = vmatpush.bf16.msra.mxu0 0
  %2718 = vmatpush.bf16.msra.mxu0 0
  %2719 = vmatpush.bf16.msra.mxu0 0
  %2720 = vmatpush.bf16.msra.mxu0 %v2708
  %2721 = vmatpush.bf16.msra.mxu0 %v2707
  %2722 = vmatmul.bf16.gmra.mxu0 %v2712
  %v2723 = vpop.f32.mrf.mxu0
  %v2724 = vadd.f32 %v2697, %v2723
  %v2725 = vpop.f32.mrf.mxu0
  %2726 = vdwg.mxu0
  %v2728 = vrot.slane %v2724, 2
  %2729 = vrot.lane.b32.xlu0 %v2728, 1
  %v2730 = vpop.permute.xlu0 %2729
  %vm2732 = vcmask 7168
  %v2733 = vsel %vm2732, %v2724, %v2730
  %vm2734 = vcmask 9216
  %2735 = vst.msk [vmem:[%s19] sm:$0x3] %vm2734, %v2733
  // Predicated region
  $region78: #{lstm_qavtac_mac_late_forward.1} parent=0 // pred_check
    _
  $region79: #{lstm_qavtac_mac_late_forward.1} parent=0 // pred_check_branch
    %2737 = sbr.rel (0) target = $region81
  $region80: #{lstm_qavtac_mac_late_forward.1} parent=0 // pred_region
    _
  $region81: #{lstm_qavtac_mac_late_forward.1} parent=0 // pred_fallthru
    _
  // Predicated region
  $region82: #{lstm_qavtac_mac_late_forward.1} parent=0 // pred_check
    _
  $region83: #{lstm_qavtac_mac_late_forward.1} parent=0 // pred_check_branch
    %2739 = sbr.rel (0) target = $region85
  $region84: #{lstm_qavtac_mac_late_forward.1} parent=0 // pred_region
    _
  $region85: #{lstm_qavtac_mac_late_forward.1} parent=0 // pred_fallthru
    _

</llo_original>
